<compile_context>
chip_gen: v7x
topology: tpu7x:2x2x1
jax: 0.10.0
libtpu: 0.0.40
codegen_flags: <defaults>
</compile_context>

<pallas_src>
import jax
import jax.numpy as jnp
from jax import lax
from jax.experimental import pallas as pl
from jax.experimental.pallas import tpu as pltpu


MXU_DTYPE = jnp.bfloat16   # matmul operand dtype; accumulation stays float32


# ----------------------------------------------------------------------------
# Fused kernel body: one (batch_block, layer) grid cell = one full layer
# recurrence over the whole sequence; FC head fused on the last layer.
# ----------------------------------------------------------------------------
def _make_fused_gru_kernel(*, seq_len, batch_blk, hidden):
    T, Bb, H = seq_len, batch_blk, hidden

    def kernel(x_ref,      # (T*Bb, F)     bf16   time-major input, this batch block
               wih0_ref,   # (F, 3H)       bf16   layer-0 input weights (gate-fused)
               bgi0_ref,   # (1, 3H)       f32    layer-0 b_ih + [b_hh_r, b_hh_z, 0]
               wihr_ref,   # (H, 3H)       bf16   current layer's input weights (l>=1)
               bgir_ref,   # (1, 3H)       f32    current layer's folded input bias
               whh_ref,    # (H, 3H)       bf16   current layer's hidden weights
               bhn_ref,    # (1, H)        f32    current layer's n-gate hidden bias
               wfc_ref,    # (H, n_steps)  bf16
               bfc_ref,    # (1, n_steps)  f32
               out_ref,    # (Bb, n_steps) f32
               gi,         # (T*Bb, 3H)    f32 scratch: hoisted gate projections
               hseq):      # (T*Bb, H)     f32 scratch: inter-layer hidden sequence
        layer = pl.program_id(1)
        n_layers = pl.num_programs(1)

        # ---- hoisted input projection: ONE fused matmul per layer ----------
        @pl.when(layer == 0)
        def _():
            gi[...] = jnp.dot(x_ref[...], wih0_ref[...],
                              preferred_element_type=jnp.float32) + bgi0_ref[...]

        @pl.when(layer > 0)
        def _():
            gi[...] = jnp.dot(hseq[...].astype(MXU_DTYPE), wihr_ref[...],
                              preferred_element_type=jnp.float32) + bgir_ref[...]

        # n-gate hidden bias: broadcast ONCE per layer (not per time step).
        bhn_b = jnp.broadcast_to(bhn_ref[...], (Bb, H))

        # ---- sequential recurrence: one (Bb,H)@(H,3H) matmul per step -------
        def step(t, h):
            rows = pl.ds(pl.multiple_of(t * Bb, Bb), Bb)
            gh = jnp.dot(h.astype(MXU_DTYPE), whh_ref[...],
                         preferred_element_type=jnp.float32)        # (Bb, 3H)
            gi_t = gi[rows, :]
            # PyTorch GRU gate math (gate order r, z, n), all f32; biases
            # already folded into gi except the n-gate hidden bias.
            r = jax.nn.sigmoid(gi_t[:, 0:H] + gh[:, 0:H])
            z = jax.nn.sigmoid(gi_t[:, H:2 * H] + gh[:, H:2 * H])
            n = jnp.tanh(gi_t[:, 2 * H:3 * H] + r * (gh[:, 2 * H:3 * H] + bhn_b))
            h_new = n + z * (h - n)
            hseq[rows, :] = h_new          # f32: no bf16 rounding across layers
            return h_new

        h_last = lax.fori_loop(0, T, step, jnp.zeros((Bb, H), jnp.float32),
                               unroll=True)

        # ---- fused FC head on the top layer's final hidden state ------------
        @pl.when(layer == n_layers - 1)
        def _():
            out_ref[...] = (
                jnp.dot(h_last.astype(MXU_DTYPE), wfc_ref[...],
                        preferred_element_type=jnp.float32) + bfc_ref[...]
            ).astype(out_ref.dtype)

    return kernel


# ----------------------------------------------------------------------------
# Wrapper: layout plumbing (gate fusion, bias folding, time-major slab) + call
# ----------------------------------------------------------------------------
def _gate_cat(w):
    """(..., 3, X, H) per-gate stack -> (..., X, 3H) gate-fused along lanes."""
    return jnp.concatenate([w[..., 0, :, :], w[..., 1, :, :], w[..., 2, :, :]],
                           axis=-1)


def _num_batch_blocks(b_pad):
    """Split the padded batch only on 2-TensorCore chips (v7x)."""
    try:
        kind = jax.devices()[0].device_kind.lower()
    except Exception:
        kind = ""
    two_tc = ("v7" in kind) or ("7x" in kind)
    if two_tc and b_pad >= 16 and b_pad % 16 == 0:
        return 2
    return 1


@jax.jit
def debug_lstm_forward(params, x_btf, target):
    """DebugLSTM forward: GRU stack + Linear head. `target` is unused."""
    del target  # matches the PyTorch module (target only printed there)
    B, T, F = x_btf.shape
    L = params["whh"].shape[0]
    H = params["whh"].shape[2]
    n_steps = params["w_fc"].shape[-1]
    H3 = 3 * H

    # Pad batch to a multiple of 8 (f32 sublanes / MXU rows).
    B_pad = -(-B // 8) * 8
    nb = _num_batch_blocks(B_pad)
    Bb = B_pad // nb

    x = x_btf.astype(MXU_DTYPE)
    if B_pad != B:
        x = jnp.pad(x, ((0, B_pad - B), (0, 0), (0, 0)))
    # One tiny rearrangement to a time-major 2-D slab per batch block so every
    # in-kernel access is a contiguous, lane-aligned (Bb, ...) tile.
    x = x.reshape(nb, Bb, T, F).transpose(0, 2, 1, 3).reshape(nb, T * Bb, F)

    # ---- gate fusion + bias folding (once, wrapper-side) --------------------
    wih0_cat = _gate_cat(params["wih0"]).astype(MXU_DTYPE)          # (F, 3H)
    whh_cat = _gate_cat(params["whh"]).astype(MXU_DTYPE)            # (L, H, 3H)
    bih0_cat = _gate_cat(params["bih0"])                            # (1, 3H)
    bhh = params["bhh"]                                             # (L, 3, 1, H)
    bhn = bhh[:, 2]                                                 # (L, 1, H)
    bhh_rz = jnp.concatenate([bhh[:, 0], bhh[:, 1],
                              jnp.zeros_like(bhh[:, 2])], axis=-1)  # (L, 1, 3H)
    bgi0 = bih0_cat + bhh_rz[0]                                     # (1, 3H)

    if L > 1:
        wihr_cat = _gate_cat(params["wih_rest"]).astype(MXU_DTYPE)  # (L-1, H, 3H)
        bihr_cat = _gate_cat(params["bih_rest"])                    # (L-1, 1, 3H)
        # Prepend a dummy layer-0 entry so the layer grid index maps directly.
        wihr_full = jnp.concatenate(
            [jnp.zeros((1, H, H3), MXU_DTYPE), wihr_cat], axis=0)   # (L, H, 3H)
        bgir_full = jnp.concatenate(
            [jnp.zeros((1, 1, H3), jnp.float32), bihr_cat + bhh_rz[1:]], axis=0)
    else:
        wihr_full = jnp.zeros((1, H, H3), MXU_DTYPE)
        bgir_full = jnp.zeros((1, 1, H3), jnp.float32)

    wfc = params["w_fc"].astype(MXU_DTYPE)
    bfc = params["b_fc"].astype(jnp.float32)

    kernel = _make_fused_gru_kernel(seq_len=T, batch_blk=Bb, hidden=H)

    grid_spec = pltpu.PrefetchScalarGridSpec(
        num_scalar_prefetch=0,
        grid=(nb, L),     # batch blocks parallel; layers sequential (streamed)
        in_specs=[
            pl.BlockSpec((None, T * Bb, F), lambda i, l: (i, 0, 0)),   # x
            pl.BlockSpec((F, H3), lambda i, l: (0, 0)),                # wih0
            pl.BlockSpec((1, H3), lambda i, l: (0, 0)),                # bgi0
            pl.BlockSpec((None, H, H3), lambda i, l: (l, 0, 0)),       # wihr (layer l)
            pl.BlockSpec((None, 1, H3), lambda i, l: (l, 0, 0)),       # bgir (layer l)
            pl.BlockSpec((None, H, H3), lambda i, l: (l, 0, 0)),       # whh  (layer l)
            pl.BlockSpec((None, 1, H), lambda i, l: (l, 0, 0)),        # bhn  (layer l)
            pl.BlockSpec((H, n_steps), lambda i, l: (0, 0)),           # wfc
            pl.BlockSpec((1, n_steps), lambda i, l: (0, 0)),           # bfc
        ],
        out_specs=pl.BlockSpec((Bb, n_steps), lambda i, l: (i, 0)),
        scratch_shapes=[
            pltpu.VMEM((T * Bb, H3), jnp.float32),   # gi (fused gate projections)
            pltpu.VMEM((T * Bb, H), jnp.float32),    # hseq (inter-layer, f32)
        ],
    )

    out = pl.pallas_call(
        kernel,
        out_shape=jax.ShapeDtypeStruct((B_pad, n_steps), jnp.float32),
        grid_spec=grid_spec,
        compiler_params=pltpu.CompilerParams(
            dimension_semantics=("parallel", "arbitrary")),
    )(x, wih0_cat, bgi0, wihr_full, bgir_full, whh_cat, bhn, wfc, bfc)

    return out[:B]


# ----------------------------------------------------------------------------
# Parameter init (PyTorch-style U(-1/sqrt(H), 1/sqrt(H)), per-gate layout)
# ----------------------------------------------------------------------------
def init_params(key, input_size, hidden_size, num_layers, n_steps,
                dtype=jnp.float32):
    H = hidden_size
    k = (1.0 / H) ** 0.5

    def unif(key, shape):
        return jax.random.uniform(key, shape, dtype, -k, k)

    keys = iter(jax.random.split(key, 4 * num_layers + 2))
    wih, bih, whh, bhh = [], [], [], []
    for layer in range(num_layers):
        fin = input_size if layer == 0 else H
        wih.append(unif(next(keys), (3, fin, H)))
        whh.append(unif(next(keys), (3, H, H)))
        bih.append(unif(next(keys), (3, 1, H)))
        bhh.append(unif(next(keys), (3, 1, H)))

    params = {
        "wih0": wih[0],
        "bih0": bih[0],
        "whh": jnp.stack(whh),
        "bhh": jnp.stack(bhh),
        "w_fc": unif(next(keys), (H, n_steps)),
        "b_fc": unif(next(keys), (1, n_steps)),
    }
    if num_layers > 1:
        params["wih_rest"] = jnp.stack(wih[1:])
        params["bih_rest"] = jnp.stack(bih[1:])
    else:  # dummies so the wrapper path is uniform; never read.
        params["wih_rest"] = jnp.zeros((1, 3, H, H), dtype)
        params["bih_rest"] = jnp.zeros((1, 3, 1, H), dtype)
    return params


# ----------------------------------------------------------------------------
# Pure-JAX f32 reference (torch.nn.GRU(batch_first=True) + Linear semantics)
# ----------------------------------------------------------------------------
def gru_reference(params, x_btf):
    B, T, _ = x_btf.shape
    L = params["whh"].shape[0]
    H = params["whh"].shape[2]
    seq = x_btf.astype(jnp.float32)
    h = None
    for layer in range(L):
        if layer == 0:
            wih, bih = params["wih0"], params["bih0"]
        else:
            wih, bih = params["wih_rest"][layer - 1], params["bih_rest"][layer - 1]
        whh, bhh = params["whh"][layer], params["bhh"][layer]
        h = jnp.zeros((B, H), jnp.float32)
        hs = []
        for t in range(T):
            xt = seq[:, t, :]
            r = jax.nn.sigmoid(xt @ wih[0] + bih[0] + h @ whh[0] + bhh[0])
            z = jax.nn.sigmoid(xt @ wih[1] + bih[1] + h @ whh[1] + bhh[1])
            n = jnp.tanh(xt @ wih[2] + bih[2] + r * (h @ whh[2] + bhh[2]))
            h = (1.0 - z) * n + z * h
            hs.append(h)
        seq = jnp.stack(hs, axis=1)
    return h @ params["w_fc"] + params["b_fc"]


if __name__ == "__main__":
    # Small shapes consistent with the module's forward contract.
    batch_size = 4       # matches the module's example
    time_steps = 8       # small stand-in for 30
    features = 58        # input_size (matches the module)
    hidden_size = 128    # lane-aligned hidden (small stand-in for 1024)
    num_layers = 2       # small stand-in for 12
    n_steps = 1

    key = jax.random.PRNGKey(0)
    key, kx, kt, kp = jax.random.split(key, 4)

    x = jax.random.normal(kx, (batch_size, time_steps, features), jnp.float32)
    target = jax.random.randint(kt, (batch_size, n_steps), 100000, 40000000)
    params = init_params(kp, features, hidden_size, num_layers, n_steps)

    out = debug_lstm_forward(params, x, target)
    jax.block_until_ready(out)

    assert out.shape == (batch_size, n_steps), out.shape
    assert out.dtype == jnp.float32, out.dtype

    ref = gru_reference(params, x)
    err = jnp.max(jnp.abs(out - ref))
    assert jnp.allclose(out, ref, atol=5e-2, rtol=5e-2), f"max abs err {err}"

    print("KERNEL_OK")
</pallas_src>

<mosaic_0001>
module attributes {stable_mosaic.version = 11 : i64} {
  func.func @kernel(%arg0: i32, %arg1: i32, %arg2: memref<1x64x58xbf16, #tpu.memory_space<vmem>>, %arg3: memref<58x384xbf16, #tpu.memory_space<vmem>>, %arg4: memref<1x384xf32, #tpu.memory_space<vmem>>, %arg5: memref<1x128x384xbf16, #tpu.memory_space<vmem>>, %arg6: memref<1x1x384xf32, #tpu.memory_space<vmem>>, %arg7: memref<1x128x384xbf16, #tpu.memory_space<vmem>>, %arg8: memref<1x1x128xf32, #tpu.memory_space<vmem>>, %arg9: memref<128x1xbf16, #tpu.memory_space<vmem>>, %arg10: memref<1x1xf32, #tpu.memory_space<vmem>>, %arg11: memref<8x1xf32, #tpu.memory_space<vmem>>, %arg12: memref<64x384xf32, #tpu.memory_space<vmem>>, %arg13: memref<64x128xf32, #tpu.memory_space<vmem>>) attributes {dimension_semantics = [#tpu.dimension_semantics<parallel>, #tpu.dimension_semantics<arbitrary>], iteration_bounds = array<i64: 1, 2>, scalar_prefetch = 0 : i64, scratch_operands = 2 : i64, tpu.core_type = #tpu.core_type<tc>, window_params = [{transform_indices = @transform_0, window_bounds = array<i64: 1, 64, 58>}, {pipeline_mode = #tpu.pipeline_mode<synchronous>, transform_indices = @transform_1, window_bounds = array<i64: 58, 384>}, {pipeline_mode = #tpu.pipeline_mode<synchronous>, transform_indices = @transform_2, window_bounds = array<i64: 1, 384>}, {transform_indices = @transform_3, window_bounds = array<i64: 1, 128, 384>}, {transform_indices = @transform_4, window_bounds = array<i64: 1, 1, 384>}, {transform_indices = @transform_5, window_bounds = array<i64: 1, 128, 384>}, {transform_indices = @transform_6, window_bounds = array<i64: 1, 1, 128>}, {pipeline_mode = #tpu.pipeline_mode<synchronous>, transform_indices = @transform_7, window_bounds = array<i64: 128, 1>}, {pipeline_mode = #tpu.pipeline_mode<synchronous>, transform_indices = @transform_8, window_bounds = array<i64: 1, 1>}, {transform_indices = @transform_9, window_bounds = array<i64: 8, 1>}]} {
    %c0_i32 = arith.constant 0 : i32
    %0 = arith.cmpi eq, %arg1, %c0_i32 : i32
    %1 = arith.extui %0 : i1 to i32
    %c0_i32_0 = arith.constant 0 : i32
    %2 = arith.cmpi ne, %1, %c0_i32_0 : i32
    scf.if %2 {
      %c0_80 = arith.constant 0 : index
      %c0_81 = arith.constant 0 : index
      %c0_82 = arith.constant 0 : index
      %294 = vector.load %arg2[%c0_80, %c0_81, %c0_82] : memref<1x64x58xbf16, #tpu.memory_space<vmem>>, vector<1x64x58xbf16>
      %295 = vector.shape_cast %294 : vector<1x64x58xbf16> to vector<64x58xbf16>
      %c0_83 = arith.constant 0 : index
      %c0_84 = arith.constant 0 : index
      %296 = vector.load %arg3[%c0_83, %c0_84] : memref<58x384xbf16, #tpu.memory_space<vmem>>, vector<58x384xbf16>
      %cst_85 = arith.constant dense<0.000000e+00> : vector<64x384xf32>
      %297 = tpu.matmul %295, %296, %cst_85 {dimension_numbers = #tpu.dot_dimension_numbers<[1], [0], [0], [1], [0, 0, 1, 1], [], []>} : vector<64x58xbf16>, vector<58x384xbf16>, vector<64x384xf32> -> vector<64x384xf32>
      %c0_86 = arith.constant 0 : index
      %c0_87 = arith.constant 0 : index
      %298 = vector.load %arg4[%c0_86, %c0_87] : memref<1x384xf32, #tpu.memory_space<vmem>>, vector<1x384xf32>
      %299 = vector.broadcast %298 : vector<1x384xf32> to vector<64x384xf32>
      %300 = arith.addf %297, %299 : vector<64x384xf32>
      %c0_88 = arith.constant 0 : index
      %c0_89 = arith.constant 0 : index
      %301 = vector.load %arg12[%c0_88, %c0_89] : memref<64x384xf32, #tpu.memory_space<vmem>>, vector<64x384xf32>
      tpu.vector_store %arg12[%c0_88, %c0_89], %300 {strides = array<i32>} : memref<64x384xf32, #tpu.memory_space<vmem>>, vector<64x384xf32>,
    } else {
    }
    %c0_i32_1 = arith.constant 0 : i32
    %3 = arith.cmpi sgt, %arg1, %c0_i32_1 : i32
    %4 = arith.extui %3 : i1 to i32
    %c0_i32_2 = arith.constant 0 : i32
    %5 = arith.cmpi ne, %4, %c0_i32_2 : i32
    scf.if %5 {
      %c0_80 = arith.constant 0 : index
      %c0_81 = arith.constant 0 : index
      %294 = vector.load %arg13[%c0_80, %c0_81] : memref<64x128xf32, #tpu.memory_space<vmem>>, vector<64x128xf32>
      %295 = arith.truncf %294 : vector<64x128xf32> to vector<64x128xbf16>
      %c0_82 = arith.constant 0 : index
      %c0_83 = arith.constant 0 : index
      %c0_84 = arith.constant 0 : index
      %296 = vector.load %arg5[%c0_82, %c0_83, %c0_84] : memref<1x128x384xbf16, #tpu.memory_space<vmem>>, vector<1x128x384xbf16>
      %297 = vector.shape_cast %296 : vector<1x128x384xbf16> to vector<128x384xbf16>
      %cst_85 = arith.constant dense<0.000000e+00> : vector<64x384xf32>
      %298 = tpu.matmul %295, %297, %cst_85 {dimension_numbers = #tpu.dot_dimension_numbers<[1], [0], [0], [1], [0, 0, 1, 1], [], []>} : vector<64x128xbf16>, vector<128x384xbf16>, vector<64x384xf32> -> vector<64x384xf32>
      %c0_86 = arith.constant 0 : index
      %c0_87 = arith.constant 0 : index
      %c0_88 = arith.constant 0 : index
      %299 = vector.load %arg6[%c0_86, %c0_87, %c0_88] : memref<1x1x384xf32, #tpu.memory_space<vmem>>, vector<1x1x384xf32>
      %300 = vector.shape_cast %299 : vector<1x1x384xf32> to vector<1x384xf32>
      %301 = vector.broadcast %300 : vector<1x384xf32> to vector<64x384xf32>
      %302 = arith.addf %298, %301 : vector<64x384xf32>
      %c0_89 = arith.constant 0 : index
      %c0_90 = arith.constant 0 : index
      %303 = vector.load %arg12[%c0_89, %c0_90] : memref<64x384xf32, #tpu.memory_space<vmem>>, vector<64x384xf32>
      tpu.vector_store %arg12[%c0_89, %c0_90], %302 {strides = array<i32>} : memref<64x384xf32, #tpu.memory_space<vmem>>, vector<64x384xf32>,
    } else {
    }
    %c0 = arith.constant 0 : index
    %c0_3 = arith.constant 0 : index
    %c0_4 = arith.constant 0 : index
    %6 = vector.load %arg8[%c0, %c0_3, %c0_4] : memref<1x1x128xf32, #tpu.memory_space<vmem>>, vector<1x1x128xf32>
    %7 = vector.shape_cast %6 : vector<1x1x128xf32> to vector<1x128xf32>
    %8 = vector.shape_cast %7 : vector<1x128xf32> to vector<1x128xf32>
    %9 = vector.broadcast %8 : vector<1x128xf32> to vector<8x128xf32>
    %cst = arith.constant 0.000000e+00 : f32
    %10 = vector.broadcast %cst : f32 to vector<8x128xf32>
    %c0_i32_5 = arith.constant 0 : i32
    %c8_i32 = arith.constant 8 : i32
    %11 = arith.muli %c0_i32_5, %c8_i32 : i32
    %12 = tpu.assume_multiple %11, 8 : i32
    %13 = arith.truncf %10 : vector<8x128xf32> to vector<8x128xbf16>
    %c0_6 = arith.constant 0 : index
    %c0_7 = arith.constant 0 : index
    %c0_8 = arith.constant 0 : index
    %14 = vector.load %arg7[%c0_6, %c0_7, %c0_8] : memref<1x128x384xbf16, #tpu.memory_space<vmem>>, vector<1x128x384xbf16>
    %15 = vector.shape_cast %14 : vector<1x128x384xbf16> to vector<128x384xbf16>
    %cst_9 = arith.constant dense<0.000000e+00> : vector<8x384xf32>
    %16 = tpu.matmul %13, %15, %cst_9 {dimension_numbers = #tpu.dot_dimension_numbers<[1], [0], [0], [1], [0, 0, 1, 1], [], []>} : vector<8x128xbf16>, vector<128x384xbf16>, vector<8x384xf32> -> vector<8x384xf32>
    %17 = arith.index_cast %12 : i32 to index
    %c0_10 = arith.constant 0 : index
    %18 = vector.load %arg12[%17, %c0_10] : memref<64x384xf32, #tpu.memory_space<vmem>>, vector<8x384xf32>
    %19 = vector.extract_strided_slice %18 {offsets = [0, 0], sizes = [8, 128], strides = [1, 1]} : vector<8x384xf32> to vector<8x128xf32>
    %20 = vector.extract_strided_slice %16 {offsets = [0, 0], sizes = [8, 128], strides = [1, 1]} : vector<8x384xf32> to vector<8x128xf32>
    %21 = arith.addf %19, %20 : vector<8x128xf32>
    %22 = arith.negf %21 : vector<8x128xf32>
    %23 = math.exp %22 : vector<8x128xf32>
    %cst_11 = arith.constant 1.000000e+00 : f32
    %24 = vector.broadcast %cst_11 : f32 to vector<8x128xf32>
    %25 = arith.addf %24, %23 : vector<8x128xf32>
    %26 = arith.divf %24, %25 : vector<8x128xf32>
    %27 = vector.extract_strided_slice %18 {offsets = [0, 128], sizes = [8, 128], strides = [1, 1]} : vector<8x384xf32> to vector<8x128xf32>
    %28 = vector.extract_strided_slice %16 {offsets = [0, 128], sizes = [8, 128], strides = [1, 1]} : vector<8x384xf32> to vector<8x128xf32>
    %29 = arith.addf %27, %28 : vector<8x128xf32>
    %30 = arith.negf %29 : vector<8x128xf32>
    %31 = math.exp %30 : vector<8x128xf32>
    %cst_12 = arith.constant 1.000000e+00 : f32
    %32 = vector.broadcast %cst_12 : f32 to vector<8x128xf32>
    %33 = arith.addf %32, %31 : vector<8x128xf32>
    %34 = arith.divf %32, %33 : vector<8x128xf32>
    %35 = vector.extract_strided_slice %18 {offsets = [0, 256], sizes = [8, 128], strides = [1, 1]} : vector<8x384xf32> to vector<8x128xf32>
    %36 = vector.extract_strided_slice %16 {offsets = [0, 256], sizes = [8, 128], strides = [1, 1]} : vector<8x384xf32> to vector<8x128xf32>
    %37 = arith.addf %36, %9 : vector<8x128xf32>
    %38 = arith.mulf %26, %37 : vector<8x128xf32>
    %39 = arith.addf %35, %38 : vector<8x128xf32>
    %40 = math.tanh %39 : vector<8x128xf32>
    %41 = arith.subf %10, %40 : vector<8x128xf32>
    %42 = arith.mulf %34, %41 : vector<8x128xf32>
    %43 = arith.addf %40, %42 : vector<8x128xf32>
    %44 = arith.index_cast %12 : i32 to index
    %c0_13 = arith.constant 0 : index
    %45 = vector.load %arg13[%44, %c0_13] : memref<64x128xf32, #tpu.memory_space<vmem>>, vector<8x128xf32>
    tpu.vector_store %arg13[%44, %c0_13], %43 {strides = array<i32>} : memref<64x128xf32, #tpu.memory_space<vmem>>, vector<8x128xf32>,
    %c1_i32 = arith.constant 1 : i32
    %c8_i32_14 = arith.constant 8 : i32
    %46 = arith.muli %c1_i32, %c8_i32_14 : i32
    %47 = tpu.assume_multiple %46, 8 : i32
    %48 = arith.truncf %43 : vector<8x128xf32> to vector<8x128xbf16>
    %c0_15 = arith.constant 0 : index
    %c0_16 = arith.constant 0 : index
    %c0_17 = arith.constant 0 : index
    %49 = vector.load %arg7[%c0_15, %c0_16, %c0_17] : memref<1x128x384xbf16, #tpu.memory_space<vmem>>, vector<1x128x384xbf16>
    %50 = vector.shape_cast %49 : vector<1x128x384xbf16> to vector<128x384xbf16>
    %cst_18 = arith.constant dense<0.000000e+00> : vector<8x384xf32>
    %51 = tpu.matmul %48, %50, %cst_18 {dimension_numbers = #tpu.dot_dimension_numbers<[1], [0], [0], [1], [0, 0, 1, 1], [], []>} : vector<8x128xbf16>, vector<128x384xbf16>, vector<8x384xf32> -> vector<8x384xf32>
    %52 = arith.index_cast %47 : i32 to index
    %c0_19 = arith.constant 0 : index
    %53 = vector.load %arg12[%52, %c0_19] : memref<64x384xf32, #tpu.memory_space<vmem>>, vector<8x384xf32>
    %54 = vector.extract_strided_slice %53 {offsets = [0, 0], sizes = [8, 128], strides = [1, 1]} : vector<8x384xf32> to vector<8x128xf32>
    %55 = vector.extract_strided_slice %51 {offsets = [0, 0], sizes = [8, 128], strides = [1, 1]} : vector<8x384xf32> to vector<8x128xf32>
    %56 = arith.addf %54, %55 : vector<8x128xf32>
    %57 = arith.negf %56 : vector<8x128xf32>
    %58 = math.exp %57 : vector<8x128xf32>
    %cst_20 = arith.constant 1.000000e+00 : f32
    %59 = vector.broadcast %cst_20 : f32 to vector<8x128xf32>
    %60 = arith.addf %59, %58 : vector<8x128xf32>
    %61 = arith.divf %59, %60 : vector<8x128xf32>
    %62 = vector.extract_strided_slice %53 {offsets = [0, 128], sizes = [8, 128], strides = [1, 1]} : vector<8x384xf32> to vector<8x128xf32>
    %63 = vector.extract_strided_slice %51 {offsets = [0, 128], sizes = [8, 128], strides = [1, 1]} : vector<8x384xf32> to vector<8x128xf32>
    %64 = arith.addf %62, %63 : vector<8x128xf32>
    %65 = arith.negf %64 : vector<8x128xf32>
    %66 = math.exp %65 : vector<8x128xf32>
    %cst_21 = arith.constant 1.000000e+00 : f32
    %67 = vector.broadcast %cst_21 : f32 to vector<8x128xf32>
    %68 = arith.addf %67, %66 : vector<8x128xf32>
    %69 = arith.divf %67, %68 : vector<8x128xf32>
    %70 = vector.extract_strided_slice %53 {offsets = [0, 256], sizes = [8, 128], strides = [1, 1]} : vector<8x384xf32> to vector<8x128xf32>
    %71 = vector.extract_strided_slice %51 {offsets = [0, 256], sizes = [8, 128], strides = [1, 1]} : vector<8x384xf32> to vector<8x128xf32>
    %72 = arith.addf %71, %9 : vector<8x128xf32>
    %73 = arith.mulf %61, %72 : vector<8x128xf32>
    %74 = arith.addf %70, %73 : vector<8x128xf32>
    %75 = math.tanh %74 : vector<8x128xf32>
    %76 = arith.subf %43, %75 : vector<8x128xf32>
    %77 = arith.mulf %69, %76 : vector<8x128xf32>
    %78 = arith.addf %75, %77 : vector<8x128xf32>
    %79 = arith.index_cast %47 : i32 to index
    %c0_22 = arith.constant 0 : index
    %80 = vector.load %arg13[%79, %c0_22] : memref<64x128xf32, #tpu.memory_space<vmem>>, vector<8x128xf32>
    tpu.vector_store %arg13[%79, %c0_22], %78 {strides = array<i32>} : memref<64x128xf32, #tpu.memory_space<vmem>>, vector<8x128xf32>,
    %c2_i32 = arith.constant 2 : i32
    %c8_i32_23 = arith.constant 8 : i32
    %81 = arith.muli %c2_i32, %c8_i32_23 : i32
    %82 = tpu.assume_multiple %81, 8 : i32
    %83 = arith.truncf %78 : vector<8x128xf32> to vector<8x128xbf16>
    %c0_24 = arith.constant 0 : index
    %c0_25 = arith.constant 0 : index
    %c0_26 = arith.constant 0 : index
    %84 = vector.load %arg7[%c0_24, %c0_25, %c0_26] : memref<1x128x384xbf16, #tpu.memory_space<vmem>>, vector<1x128x384xbf16>
    %85 = vector.shape_cast %84 : vector<1x128x384xbf16> to vector<128x384xbf16>
    %cst_27 = arith.constant dense<0.000000e+00> : vector<8x384xf32>
    %86 = tpu.matmul %83, %85, %cst_27 {dimension_numbers = #tpu.dot_dimension_numbers<[1], [0], [0], [1], [0, 0, 1, 1], [], []>} : vector<8x128xbf16>, vector<128x384xbf16>, vector<8x384xf32> -> vector<8x384xf32>
    %87 = arith.index_cast %82 : i32 to index
    %c0_28 = arith.constant 0 : index
    %88 = vector.load %arg12[%87, %c0_28] : memref<64x384xf32, #tpu.memory_space<vmem>>, vector<8x384xf32>
    %89 = vector.extract_strided_slice %88 {offsets = [0, 0], sizes = [8, 128], strides = [1, 1]} : vector<8x384xf32> to vector<8x128xf32>
    %90 = vector.extract_strided_slice %86 {offsets = [0, 0], sizes = [8, 128], strides = [1, 1]} : vector<8x384xf32> to vector<8x128xf32>
    %91 = arith.addf %89, %90 : vector<8x128xf32>
    %92 = arith.negf %91 : vector<8x128xf32>
    %93 = math.exp %92 : vector<8x128xf32>
    %cst_29 = arith.constant 1.000000e+00 : f32
    %94 = vector.broadcast %cst_29 : f32 to vector<8x128xf32>
    %95 = arith.addf %94, %93 : vector<8x128xf32>
    %96 = arith.divf %94, %95 : vector<8x128xf32>
    %97 = vector.extract_strided_slice %88 {offsets = [0, 128], sizes = [8, 128], strides = [1, 1]} : vector<8x384xf32> to vector<8x128xf32>
    %98 = vector.extract_strided_slice %86 {offsets = [0, 128], sizes = [8, 128], strides = [1, 1]} : vector<8x384xf32> to vector<8x128xf32>
    %99 = arith.addf %97, %98 : vector<8x128xf32>
    %100 = arith.negf %99 : vector<8x128xf32>
    %101 = math.exp %100 : vector<8x128xf32>
    %cst_30 = arith.constant 1.000000e+00 : f32
    %102 = vector.broadcast %cst_30 : f32 to vector<8x128xf32>
    %103 = arith.addf %102, %101 : vector<8x128xf32>
    %104 = arith.divf %102, %103 : vector<8x128xf32>
    %105 = vector.extract_strided_slice %88 {offsets = [0, 256], sizes = [8, 128], strides = [1, 1]} : vector<8x384xf32> to vector<8x128xf32>
    %106 = vector.extract_strided_slice %86 {offsets = [0, 256], sizes = [8, 128], strides = [1, 1]} : vector<8x384xf32> to vector<8x128xf32>
    %107 = arith.addf %106, %9 : vector<8x128xf32>
    %108 = arith.mulf %96, %107 : vector<8x128xf32>
    %109 = arith.addf %105, %108 : vector<8x128xf32>
    %110 = math.tanh %109 : vector<8x128xf32>
    %111 = arith.subf %78, %110 : vector<8x128xf32>
    %112 = arith.mulf %104, %111 : vector<8x128xf32>
    %113 = arith.addf %110, %112 : vector<8x128xf32>
    %114 = arith.index_cast %82 : i32 to index
    %c0_31 = arith.constant 0 : index
    %115 = vector.load %arg13[%114, %c0_31] : memref<64x128xf32, #tpu.memory_space<vmem>>, vector<8x128xf32>
    tpu.vector_store %arg13[%114, %c0_31], %113 {strides = array<i32>} : memref<64x128xf32, #tpu.memory_space<vmem>>, vector<8x128xf32>,
    %c3_i32 = arith.constant 3 : i32
    %c8_i32_32 = arith.constant 8 : i32
    %116 = arith.muli %c3_i32, %c8_i32_32 : i32
    %117 = tpu.assume_multiple %116, 8 : i32
    %118 = arith.truncf %113 : vector<8x128xf32> to vector<8x128xbf16>
    %c0_33 = arith.constant 0 : index
    %c0_34 = arith.constant 0 : index
    %c0_35 = arith.constant 0 : index
    %119 = vector.load %arg7[%c0_33, %c0_34, %c0_35] : memref<1x128x384xbf16, #tpu.memory_space<vmem>>, vector<1x128x384xbf16>
    %120 = vector.shape_cast %119 : vector<1x128x384xbf16> to vector<128x384xbf16>
    %cst_36 = arith.constant dense<0.000000e+00> : vector<8x384xf32>
    %121 = tpu.matmul %118, %120, %cst_36 {dimension_numbers = #tpu.dot_dimension_numbers<[1], [0], [0], [1], [0, 0, 1, 1], [], []>} : vector<8x128xbf16>, vector<128x384xbf16>, vector<8x384xf32> -> vector<8x384xf32>
    %122 = arith.index_cast %117 : i32 to index
    %c0_37 = arith.constant 0 : index
    %123 = vector.load %arg12[%122, %c0_37] : memref<64x384xf32, #tpu.memory_space<vmem>>, vector<8x384xf32>
    %124 = vector.extract_strided_slice %123 {offsets = [0, 0], sizes = [8, 128], strides = [1, 1]} : vector<8x384xf32> to vector<8x128xf32>
    %125 = vector.extract_strided_slice %121 {offsets = [0, 0], sizes = [8, 128], strides = [1, 1]} : vector<8x384xf32> to vector<8x128xf32>
    %126 = arith.addf %124, %125 : vector<8x128xf32>
    %127 = arith.negf %126 : vector<8x128xf32>
    %128 = math.exp %127 : vector<8x128xf32>
    %cst_38 = arith.constant 1.000000e+00 : f32
    %129 = vector.broadcast %cst_38 : f32 to vector<8x128xf32>
    %130 = arith.addf %129, %128 : vector<8x128xf32>
    %131 = arith.divf %129, %130 : vector<8x128xf32>
    %132 = vector.extract_strided_slice %123 {offsets = [0, 128], sizes = [8, 128], strides = [1, 1]} : vector<8x384xf32> to vector<8x128xf32>
    %133 = vector.extract_strided_slice %121 {offsets = [0, 128], sizes = [8, 128], strides = [1, 1]} : vector<8x384xf32> to vector<8x128xf32>
    %134 = arith.addf %132, %133 : vector<8x128xf32>
    %135 = arith.negf %134 : vector<8x128xf32>
    %136 = math.exp %135 : vector<8x128xf32>
    %cst_39 = arith.constant 1.000000e+00 : f32
    %137 = vector.broadcast %cst_39 : f32 to vector<8x128xf32>
    %138 = arith.addf %137, %136 : vector<8x128xf32>
    %139 = arith.divf %137, %138 : vector<8x128xf32>
    %140 = vector.extract_strided_slice %123 {offsets = [0, 256], sizes = [8, 128], strides = [1, 1]} : vector<8x384xf32> to vector<8x128xf32>
    %141 = vector.extract_strided_slice %121 {offsets = [0, 256], sizes = [8, 128], strides = [1, 1]} : vector<8x384xf32> to vector<8x128xf32>
    %142 = arith.addf %141, %9 : vector<8x128xf32>
    %143 = arith.mulf %131, %142 : vector<8x128xf32>
    %144 = arith.addf %140, %143 : vector<8x128xf32>
    %145 = math.tanh %144 : vector<8x128xf32>
    %146 = arith.subf %113, %145 : vector<8x128xf32>
    %147 = arith.mulf %139, %146 : vector<8x128xf32>
    %148 = arith.addf %145, %147 : vector<8x128xf32>
    %149 = arith.index_cast %117 : i32 to index
    %c0_40 = arith.constant 0 : index
    %150 = vector.load %arg13[%149, %c0_40] : memref<64x128xf32, #tpu.memory_space<vmem>>, vector<8x128xf32>
    tpu.vector_store %arg13[%149, %c0_40], %148 {strides = array<i32>} : memref<64x128xf32, #tpu.memory_space<vmem>>, vector<8x128xf32>,
    %c4_i32 = arith.constant 4 : i32
    %c8_i32_41 = arith.constant 8 : i32
    %151 = arith.muli %c4_i32, %c8_i32_41 : i32
    %152 = tpu.assume_multiple %151, 8 : i32
    %153 = arith.truncf %148 : vector<8x128xf32> to vector<8x128xbf16>
    %c0_42 = arith.constant 0 : index
    %c0_43 = arith.constant 0 : index
    %c0_44 = arith.constant 0 : index
    %154 = vector.load %arg7[%c0_42, %c0_43, %c0_44] : memref<1x128x384xbf16, #tpu.memory_space<vmem>>, vector<1x128x384xbf16>
    %155 = vector.shape_cast %154 : vector<1x128x384xbf16> to vector<128x384xbf16>
    %cst_45 = arith.constant dense<0.000000e+00> : vector<8x384xf32>
    %156 = tpu.matmul %153, %155, %cst_45 {dimension_numbers = #tpu.dot_dimension_numbers<[1], [0], [0], [1], [0, 0, 1, 1], [], []>} : vector<8x128xbf16>, vector<128x384xbf16>, vector<8x384xf32> -> vector<8x384xf32>
    %157 = arith.index_cast %152 : i32 to index
    %c0_46 = arith.constant 0 : index
    %158 = vector.load %arg12[%157, %c0_46] : memref<64x384xf32, #tpu.memory_space<vmem>>, vector<8x384xf32>
    %159 = vector.extract_strided_slice %158 {offsets = [0, 0], sizes = [8, 128], strides = [1, 1]} : vector<8x384xf32> to vector<8x128xf32>
    %160 = vector.extract_strided_slice %156 {offsets = [0, 0], sizes = [8, 128], strides = [1, 1]} : vector<8x384xf32> to vector<8x128xf32>
    %161 = arith.addf %159, %160 : vector<8x128xf32>
    %162 = arith.negf %161 : vector<8x128xf32>
    %163 = math.exp %162 : vector<8x128xf32>
    %cst_47 = arith.constant 1.000000e+00 : f32
    %164 = vector.broadcast %cst_47 : f32 to vector<8x128xf32>
    %165 = arith.addf %164, %163 : vector<8x128xf32>
    %166 = arith.divf %164, %165 : vector<8x128xf32>
    %167 = vector.extract_strided_slice %158 {offsets = [0, 128], sizes = [8, 128], strides = [1, 1]} : vector<8x384xf32> to vector<8x128xf32>
    %168 = vector.extract_strided_slice %156 {offsets = [0, 128], sizes = [8, 128], strides = [1, 1]} : vector<8x384xf32> to vector<8x128xf32>
    %169 = arith.addf %167, %168 : vector<8x128xf32>
    %170 = arith.negf %169 : vector<8x128xf32>
    %171 = math.exp %170 : vector<8x128xf32>
    %cst_48 = arith.constant 1.000000e+00 : f32
    %172 = vector.broadcast %cst_48 : f32 to vector<8x128xf32>
    %173 = arith.addf %172, %171 : vector<8x128xf32>
    %174 = arith.divf %172, %173 : vector<8x128xf32>
    %175 = vector.extract_strided_slice %158 {offsets = [0, 256], sizes = [8, 128], strides = [1, 1]} : vector<8x384xf32> to vector<8x128xf32>
    %176 = vector.extract_strided_slice %156 {offsets = [0, 256], sizes = [8, 128], strides = [1, 1]} : vector<8x384xf32> to vector<8x128xf32>
    %177 = arith.addf %176, %9 : vector<8x128xf32>
    %178 = arith.mulf %166, %177 : vector<8x128xf32>
    %179 = arith.addf %175, %178 : vector<8x128xf32>
    %180 = math.tanh %179 : vector<8x128xf32>
    %181 = arith.subf %148, %180 : vector<8x128xf32>
    %182 = arith.mulf %174, %181 : vector<8x128xf32>
    %183 = arith.addf %180, %182 : vector<8x128xf32>
    %184 = arith.index_cast %152 : i32 to index
    %c0_49 = arith.constant 0 : index
    %185 = vector.load %arg13[%184, %c0_49] : memref<64x128xf32, #tpu.memory_space<vmem>>, vector<8x128xf32>
    tpu.vector_store %arg13[%184, %c0_49], %183 {strides = array<i32>} : memref<64x128xf32, #tpu.memory_space<vmem>>, vector<8x128xf32>,
    %c5_i32 = arith.constant 5 : i32
    %c8_i32_50 = arith.constant 8 : i32
    %186 = arith.muli %c5_i32, %c8_i32_50 : i32
    %187 = tpu.assume_multiple %186, 8 : i32
    %188 = arith.truncf %183 : vector<8x128xf32> to vector<8x128xbf16>
    %c0_51 = arith.constant 0 : index
    %c0_52 = arith.constant 0 : index
    %c0_53 = arith.constant 0 : index
    %189 = vector.load %arg7[%c0_51, %c0_52, %c0_53] : memref<1x128x384xbf16, #tpu.memory_space<vmem>>, vector<1x128x384xbf16>
    %190 = vector.shape_cast %189 : vector<1x128x384xbf16> to vector<128x384xbf16>
    %cst_54 = arith.constant dense<0.000000e+00> : vector<8x384xf32>
    %191 = tpu.matmul %188, %190, %cst_54 {dimension_numbers = #tpu.dot_dimension_numbers<[1], [0], [0], [1], [0, 0, 1, 1], [], []>} : vector<8x128xbf16>, vector<128x384xbf16>, vector<8x384xf32> -> vector<8x384xf32>
    %192 = arith.index_cast %187 : i32 to index
    %c0_55 = arith.constant 0 : index
    %193 = vector.load %arg12[%192, %c0_55] : memref<64x384xf32, #tpu.memory_space<vmem>>, vector<8x384xf32>
    %194 = vector.extract_strided_slice %193 {offsets = [0, 0], sizes = [8, 128], strides = [1, 1]} : vector<8x384xf32> to vector<8x128xf32>
    %195 = vector.extract_strided_slice %191 {offsets = [0, 0], sizes = [8, 128], strides = [1, 1]} : vector<8x384xf32> to vector<8x128xf32>
    %196 = arith.addf %194, %195 : vector<8x128xf32>
    %197 = arith.negf %196 : vector<8x128xf32>
    %198 = math.exp %197 : vector<8x128xf32>
    %cst_56 = arith.constant 1.000000e+00 : f32
    %199 = vector.broadcast %cst_56 : f32 to vector<8x128xf32>
    %200 = arith.addf %199, %198 : vector<8x128xf32>
    %201 = arith.divf %199, %200 : vector<8x128xf32>
    %202 = vector.extract_strided_slice %193 {offsets = [0, 128], sizes = [8, 128], strides = [1, 1]} : vector<8x384xf32> to vector<8x128xf32>
    %203 = vector.extract_strided_slice %191 {offsets = [0, 128], sizes = [8, 128], strides = [1, 1]} : vector<8x384xf32> to vector<8x128xf32>
    %204 = arith.addf %202, %203 : vector<8x128xf32>
    %205 = arith.negf %204 : vector<8x128xf32>
    %206 = math.exp %205 : vector<8x128xf32>
    %cst_57 = arith.constant 1.000000e+00 : f32
    %207 = vector.broadcast %cst_57 : f32 to vector<8x128xf32>
    %208 = arith.addf %207, %206 : vector<8x128xf32>
    %209 = arith.divf %207, %208 : vector<8x128xf32>
    %210 = vector.extract_strided_slice %193 {offsets = [0, 256], sizes = [8, 128], strides = [1, 1]} : vector<8x384xf32> to vector<8x128xf32>
    %211 = vector.extract_strided_slice %191 {offsets = [0, 256], sizes = [8, 128], strides = [1, 1]} : vector<8x384xf32> to vector<8x128xf32>
    %212 = arith.addf %211, %9 : vector<8x128xf32>
    %213 = arith.mulf %201, %212 : vector<8x128xf32>
    %214 = arith.addf %210, %213 : vector<8x128xf32>
    %215 = math.tanh %214 : vector<8x128xf32>
    %216 = arith.subf %183, %215 : vector<8x128xf32>
    %217 = arith.mulf %209, %216 : vector<8x128xf32>
    %218 = arith.addf %215, %217 : vector<8x128xf32>
    %219 = arith.index_cast %187 : i32 to index
    %c0_58 = arith.constant 0 : index
    %220 = vector.load %arg13[%219, %c0_58] : memref<64x128xf32, #tpu.memory_space<vmem>>, vector<8x128xf32>
    tpu.vector_store %arg13[%219, %c0_58], %218 {strides = array<i32>} : memref<64x128xf32, #tpu.memory_space<vmem>>, vector<8x128xf32>,
    %c6_i32 = arith.constant 6 : i32
    %c8_i32_59 = arith.constant 8 : i32
    %221 = arith.muli %c6_i32, %c8_i32_59 : i32
    %222 = tpu.assume_multiple %221, 8 : i32
    %223 = arith.truncf %218 : vector<8x128xf32> to vector<8x128xbf16>
    %c0_60 = arith.constant 0 : index
    %c0_61 = arith.constant 0 : index
    %c0_62 = arith.constant 0 : index
    %224 = vector.load %arg7[%c0_60, %c0_61, %c0_62] : memref<1x128x384xbf16, #tpu.memory_space<vmem>>, vector<1x128x384xbf16>
    %225 = vector.shape_cast %224 : vector<1x128x384xbf16> to vector<128x384xbf16>
    %cst_63 = arith.constant dense<0.000000e+00> : vector<8x384xf32>
    %226 = tpu.matmul %223, %225, %cst_63 {dimension_numbers = #tpu.dot_dimension_numbers<[1], [0], [0], [1], [0, 0, 1, 1], [], []>} : vector<8x128xbf16>, vector<128x384xbf16>, vector<8x384xf32> -> vector<8x384xf32>
    %227 = arith.index_cast %222 : i32 to index
    %c0_64 = arith.constant 0 : index
    %228 = vector.load %arg12[%227, %c0_64] : memref<64x384xf32, #tpu.memory_space<vmem>>, vector<8x384xf32>
    %229 = vector.extract_strided_slice %228 {offsets = [0, 0], sizes = [8, 128], strides = [1, 1]} : vector<8x384xf32> to vector<8x128xf32>
    %230 = vector.extract_strided_slice %226 {offsets = [0, 0], sizes = [8, 128], strides = [1, 1]} : vector<8x384xf32> to vector<8x128xf32>
    %231 = arith.addf %229, %230 : vector<8x128xf32>
    %232 = arith.negf %231 : vector<8x128xf32>
    %233 = math.exp %232 : vector<8x128xf32>
    %cst_65 = arith.constant 1.000000e+00 : f32
    %234 = vector.broadcast %cst_65 : f32 to vector<8x128xf32>
    %235 = arith.addf %234, %233 : vector<8x128xf32>
    %236 = arith.divf %234, %235 : vector<8x128xf32>
    %237 = vector.extract_strided_slice %228 {offsets = [0, 128], sizes = [8, 128], strides = [1, 1]} : vector<8x384xf32> to vector<8x128xf32>
    %238 = vector.extract_strided_slice %226 {offsets = [0, 128], sizes = [8, 128], strides = [1, 1]} : vector<8x384xf32> to vector<8x128xf32>
    %239 = arith.addf %237, %238 : vector<8x128xf32>
    %240 = arith.negf %239 : vector<8x128xf32>
    %241 = math.exp %240 : vector<8x128xf32>
    %cst_66 = arith.constant 1.000000e+00 : f32
    %242 = vector.broadcast %cst_66 : f32 to vector<8x128xf32>
    %243 = arith.addf %242, %241 : vector<8x128xf32>
    %244 = arith.divf %242, %243 : vector<8x128xf32>
    %245 = vector.extract_strided_slice %228 {offsets = [0, 256], sizes = [8, 128], strides = [1, 1]} : vector<8x384xf32> to vector<8x128xf32>
    %246 = vector.extract_strided_slice %226 {offsets = [0, 256], sizes = [8, 128], strides = [1, 1]} : vector<8x384xf32> to vector<8x128xf32>
    %247 = arith.addf %246, %9 : vector<8x128xf32>
    %248 = arith.mulf %236, %247 : vector<8x128xf32>
    %249 = arith.addf %245, %248 : vector<8x128xf32>
    %250 = math.tanh %249 : vector<8x128xf32>
    %251 = arith.subf %218, %250 : vector<8x128xf32>
    %252 = arith.mulf %244, %251 : vector<8x128xf32>
    %253 = arith.addf %250, %252 : vector<8x128xf32>
    %254 = arith.index_cast %222 : i32 to index
    %c0_67 = arith.constant 0 : index
    %255 = vector.load %arg13[%254, %c0_67] : memref<64x128xf32, #tpu.memory_space<vmem>>, vector<8x128xf32>
    tpu.vector_store %arg13[%254, %c0_67], %253 {strides = array<i32>} : memref<64x128xf32, #tpu.memory_space<vmem>>, vector<8x128xf32>,
    %c7_i32 = arith.constant 7 : i32
    %c8_i32_68 = arith.constant 8 : i32
    %256 = arith.muli %c7_i32, %c8_i32_68 : i32
    %257 = tpu.assume_multiple %256, 8 : i32
    %258 = arith.truncf %253 : vector<8x128xf32> to vector<8x128xbf16>
    %c0_69 = arith.constant 0 : index
    %c0_70 = arith.constant 0 : index
    %c0_71 = arith.constant 0 : index
    %259 = vector.load %arg7[%c0_69, %c0_70, %c0_71] : memref<1x128x384xbf16, #tpu.memory_space<vmem>>, vector<1x128x384xbf16>
    %260 = vector.shape_cast %259 : vector<1x128x384xbf16> to vector<128x384xbf16>
    %cst_72 = arith.constant dense<0.000000e+00> : vector<8x384xf32>
    %261 = tpu.matmul %258, %260, %cst_72 {dimension_numbers = #tpu.dot_dimension_numbers<[1], [0], [0], [1], [0, 0, 1, 1], [], []>} : vector<8x128xbf16>, vector<128x384xbf16>, vector<8x384xf32> -> vector<8x384xf32>
    %262 = arith.index_cast %257 : i32 to index
    %c0_73 = arith.constant 0 : index
    %263 = vector.load %arg12[%262, %c0_73] : memref<64x384xf32, #tpu.memory_space<vmem>>, vector<8x384xf32>
    %264 = vector.extract_strided_slice %263 {offsets = [0, 0], sizes = [8, 128], strides = [1, 1]} : vector<8x384xf32> to vector<8x128xf32>
    %265 = vector.extract_strided_slice %261 {offsets = [0, 0], sizes = [8, 128], strides = [1, 1]} : vector<8x384xf32> to vector<8x128xf32>
    %266 = arith.addf %264, %265 : vector<8x128xf32>
    %267 = arith.negf %266 : vector<8x128xf32>
    %268 = math.exp %267 : vector<8x128xf32>
    %cst_74 = arith.constant 1.000000e+00 : f32
    %269 = vector.broadcast %cst_74 : f32 to vector<8x128xf32>
    %270 = arith.addf %269, %268 : vector<8x128xf32>
    %271 = arith.divf %269, %270 : vector<8x128xf32>
    %272 = vector.extract_strided_slice %263 {offsets = [0, 128], sizes = [8, 128], strides = [1, 1]} : vector<8x384xf32> to vector<8x128xf32>
    %273 = vector.extract_strided_slice %261 {offsets = [0, 128], sizes = [8, 128], strides = [1, 1]} : vector<8x384xf32> to vector<8x128xf32>
    %274 = arith.addf %272, %273 : vector<8x128xf32>
    %275 = arith.negf %274 : vector<8x128xf32>
    %276 = math.exp %275 : vector<8x128xf32>
    %cst_75 = arith.constant 1.000000e+00 : f32
    %277 = vector.broadcast %cst_75 : f32 to vector<8x128xf32>
    %278 = arith.addf %277, %276 : vector<8x128xf32>
    %279 = arith.divf %277, %278 : vector<8x128xf32>
    %280 = vector.extract_strided_slice %263 {offsets = [0, 256], sizes = [8, 128], strides = [1, 1]} : vector<8x384xf32> to vector<8x128xf32>
    %281 = vector.extract_strided_slice %261 {offsets = [0, 256], sizes = [8, 128], strides = [1, 1]} : vector<8x384xf32> to vector<8x128xf32>
    %282 = arith.addf %281, %9 : vector<8x128xf32>
    %283 = arith.mulf %271, %282 : vector<8x128xf32>
    %284 = arith.addf %280, %283 : vector<8x128xf32>
    %285 = math.tanh %284 : vector<8x128xf32>
    %286 = arith.subf %253, %285 : vector<8x128xf32>
    %287 = arith.mulf %279, %286 : vector<8x128xf32>
    %288 = arith.addf %285, %287 : vector<8x128xf32>
    %289 = arith.index_cast %257 : i32 to index
    %c0_76 = arith.constant 0 : index
    %290 = vector.load %arg13[%289, %c0_76] : memref<64x128xf32, #tpu.memory_space<vmem>>, vector<8x128xf32>
    tpu.vector_store %arg13[%289, %c0_76], %288 {strides = array<i32>} : memref<64x128xf32, #tpu.memory_space<vmem>>, vector<8x128xf32>,
    %c8_i32_77 = arith.constant 8 : i32
    %c1_i32_78 = arith.constant 1 : i32
    %291 = arith.cmpi eq, %arg1, %c1_i32_78 : i32
    %292 = arith.extui %291 : i1 to i32
    %c0_i32_79 = arith.constant 0 : i32
    %293 = arith.cmpi ne, %292, %c0_i32_79 : i32
    scf.if %293 {
      %294 = arith.truncf %288 : vector<8x128xf32> to vector<8x128xbf16>
      %c0_80 = arith.constant 0 : index
      %c0_81 = arith.constant 0 : index
      %295 = vector.load %arg9[%c0_80, %c0_81] : memref<128x1xbf16, #tpu.memory_space<vmem>>, vector<128x1xbf16>
      %cst_82 = arith.constant dense<0.000000e+00> : vector<8x1xf32>
      %296 = tpu.matmul %294, %295, %cst_82 {dimension_numbers = #tpu.dot_dimension_numbers<[1], [0], [0], [1], [0, 0, 1, 1], [], []>} : vector<8x128xbf16>, vector<128x1xbf16>, vector<8x1xf32> -> vector<8x1xf32>
      %c0_83 = arith.constant 0 : index
      %c0_84 = arith.constant 0 : index
      %297 = vector.load %arg10[%c0_83, %c0_84] : memref<1x1xf32, #tpu.memory_space<vmem>>, vector<1x1xf32>
      %298 = vector.broadcast %297 : vector<1x1xf32> to vector<8x1xf32>
      %299 = arith.addf %296, %298 : vector<8x1xf32>
      %c0_85 = arith.constant 0 : index
      %c0_86 = arith.constant 0 : index
      %300 = vector.load %arg11[%c0_85, %c0_86] : memref<8x1xf32, #tpu.memory_space<vmem>>, vector<8x1xf32>
      tpu.vector_store %arg11[%c0_85, %c0_86], %299 {strides = array<i32>} : memref<8x1xf32, #tpu.memory_space<vmem>>, vector<8x1xf32>,
    } else {
    }
    return
  }
  func.func @transform_0(%arg0: i32, %arg1: i32) -> (i32, i32, i32) {
    %c0_i32 = arith.constant 0 : i32
    %c0_i32_0 = arith.constant 0 : i32
    %c0_i32_1 = arith.constant 0 : i32
    return %arg0, %c0_i32, %c0_i32_0 : i32, i32, i32
  }
  func.func @transform_1(%arg0: i32, %arg1: i32) -> (i32, i32) {
    %c0_i32 = arith.constant 0 : i32
    %c0_i32_0 = arith.constant 0 : i32
    %c0_i32_1 = arith.constant 0 : i32
    return %c0_i32, %c0_i32_0 : i32, i32
  }
  func.func @transform_2(%arg0: i32, %arg1: i32) -> (i32, i32) {
    %c0_i32 = arith.constant 0 : i32
    %c0_i32_0 = arith.constant 0 : i32
    %c0_i32_1 = arith.constant 0 : i32
    return %c0_i32, %c0_i32_0 : i32, i32
  }
  func.func @transform_3(%arg0: i32, %arg1: i32) -> (i32, i32, i32) {
    %c0_i32 = arith.constant 0 : i32
    %c0_i32_0 = arith.constant 0 : i32
    %c0_i32_1 = arith.constant 0 : i32
    return %arg1, %c0_i32, %c0_i32_0 : i32, i32, i32
  }
  func.func @transform_4(%arg0: i32, %arg1: i32) -> (i32, i32, i32) {
    %c0_i32 = arith.constant 0 : i32
    %c0_i32_0 = arith.constant 0 : i32
    %c0_i32_1 = arith.constant 0 : i32
    return %arg1, %c0_i32, %c0_i32_0 : i32, i32, i32
  }
  func.func @transform_5(%arg0: i32, %arg1: i32) -> (i32, i32, i32) {
    %c0_i32 = arith.constant 0 : i32
    %c0_i32_0 = arith.constant 0 : i32
    %c0_i32_1 = arith.constant 0 : i32
    return %arg1, %c0_i32, %c0_i32_0 : i32, i32, i32
  }
  func.func @transform_6(%arg0: i32, %arg1: i32) -> (i32, i32, i32) {
    %c0_i32 = arith.constant 0 : i32
    %c0_i32_0 = arith.constant 0 : i32
    %c0_i32_1 = arith.constant 0 : i32
    return %arg1, %c0_i32, %c0_i32_0 : i32, i32, i32
  }
  func.func @transform_7(%arg0: i32, %arg1: i32) -> (i32, i32) {
    %c0_i32 = arith.constant 0 : i32
    %c0_i32_0 = arith.constant 0 : i32
    %c0_i32_1 = arith.constant 0 : i32
    return %c0_i32, %c0_i32_0 : i32, i32
  }
  func.func @transform_8(%arg0: i32, %arg1: i32) -> (i32, i32) {
    %c0_i32 = arith.constant 0 : i32
    %c0_i32_0 = arith.constant 0 : i32
    %c0_i32_1 = arith.constant 0 : i32
    return %c0_i32, %c0_i32_0 : i32, i32
  }
  func.func @transform_9(%arg0: i32, %arg1: i32) -> (i32, i32) {
    %c0_i32 = arith.constant 0 : i32
    %c0_i32_0 = arith.constant 0 : i32
    return %arg0, %c0_i32 : i32, i32
  }
}

</mosaic_0001>

<llo_original>
// kernel: debug_lstm_forward.1
$region0: #{debug_lstm_forward.1}
  #allocation0 [shape = 'u32[]', space=smem, size = 0x4, offset = 0x4, fixed_abs, tag = 'smem constant byte address 0x4 - core index']
  #allocation1 [shape = 'u32[144,128]{1,0:T(1,128)}', space=vmem, size = 0x12000, scoped, tag = 'internal scratch']
  #allocation2 [shape = 'f32[64,384]{1,0:T(8,128)}', space=vmem, size = 0x18000, scoped, tag = 'scratch operand']
  #allocation3 [shape = 'f32[64,128]{1,0:T(8,128)}', space=vmem, size = 0x8000, scoped, tag = 'scratch operand']
  #allocation4 [shape = 'f32[1,1]{1,0:T(1,128)S(1)}', space=vmem, size = 0x200, scoped, tag = 'scoped memory for debug_lstm_forward.1']
  %s0 = inlined_call_operand.vmem [shape: bf16[1,64,58], index: 0, kind: input, shape index: {}]
  %s1 = inlined_call_operand.vmem [shape: bf16[58,384], index: 1, kind: input, shape index: {}]
  %s2 = inlined_call_operand.vmem [shape: f32[1,384], index: 2, kind: input, shape index: {}]
  %s3 = inlined_call_operand.vmem [shape: bf16[2,128,384], index: 3, kind: input, shape index: {}]
  %s4 = inlined_call_operand.vmem [shape: f32[2,1,384], index: 4, kind: input, shape index: {}]
  %s5 = inlined_call_operand.vmem [shape: bf16[2,128,384], index: 5, kind: input, shape index: {}]
  %s6 = inlined_call_operand.vmem [shape: f32[2,1,128], index: 6, kind: input, shape index: {}]
  %s7 = inlined_call_operand.vmem [shape: bf16[128,1], index: 7, kind: input, shape index: {}]
  %s8 = inlined_call_operand.<no memory space> [shape: f32[1,1], index: 8, kind: input, shape index: {}]
  %s9 = inlined_call_operand.vmem [shape: f32[8,1], index: 9, kind: output, shape index: {}]
  %s10 = sld [smem:[#allocation0]]
  $region81: #{debug_lstm_forward.1} parent=0
    _
  %s12 = ssub.s32 1, %s10
  %s13 = scalar_select 0, %s12, %s10
  %v14 = vstv %s8
  %15 = vst [vmem:[#allocation4] sm:$0x1] %v14
  loop: start=0, step=1, limit=4
  $region2: #{debug_lstm_forward.1} parent=0 // loop_pre_header
    _
  $region3: #{debug_lstm_forward.1} parent=0 // loop_header
    %s17 = sphi 0, %s21
    %p18 = scmp.ge.s32.totalorder %s17, 4
    %s24 = sphi 0, %s36
    %s25 = sphi 0, %s32
    %s26 = sphi 0, %s24
    %s27 = sphi 0, %s25
    %s28 = sphi 0, %s26
    %s29 = sphi 0, %s27
    %s39 = sphi 0, %s41
    %s42 = sphi 0, %s39
    %s43 = sphi 0, %s42
    %s59 = sphi 0, %s43
    %s63 = sphi 0, %s63
    %s65 = sphi 0, %s63
    %s66 = sphi 0, %s65
    %s80 = sphi 0, %s66
    %s84 = sphi 0, %s84
    %s86 = sphi 0, %s84
    %s87 = sphi 0, %s86
    %s101 = sphi 0, %s87
    %s107 = sphi 0, %s109
    %s110 = sphi 0, %s107
    %s111 = sphi 0, %s110
    %s127 = sphi 0, %s111
    %s133 = sphi 0, %s135
    %s136 = sphi 0, %s133
    %s137 = sphi 0, %s136
    %s153 = sphi 0, %s137
    %s159 = sphi 0, %s161
    %s162 = sphi 0, %s159
    %s163 = sphi 0, %s162
    %s179 = sphi 0, %s163
    %s185 = sphi 0, %s187
    %s188 = sphi 0, %s185
    %s189 = sphi 0, %s188
    %s205 = sphi 0, %s189
    %s209 = sphi 0, %s209
    %s211 = sphi 0, %s209
    %s212 = sphi 0, %s211
    %s226 = sphi 0, %s212
    %s230 = sphi 0, %s230
    %s232 = sphi 0, %s230
    %s233 = sphi 0, %s232
    %s247 = sphi 0, %s233
    %s253 = sphi 0, %s255
    %s256 = sphi 0, %s253
    %s257 = sphi 0, %s256
    %s273 = sphi 0, %s257
  $region4: #{debug_lstm_forward.1} parent=0 // loop_header_branch
    %20 = sbr.rel (%p18) target = $region8
  $region5: #{debug_lstm_forward.1} parent=0 // loop_body
    %s22 = ssub.s32 %s17, 1
    %s23 = ssub.s32 %s17, 2
    %s30 = sadd.s32 1, %s25
    %p31 = scmp.ge.s32.totalorder %s30, 2
    %s32 = scalar_select %p31, 0, %s30
    %s33 = sadd.s32 1, %s24
    %s34 = scalar_select %p31, %s33, %s24
    %p35 = scmp.ge.s32.totalorder %s34, 1
    %s36 = scalar_select %p35, 0, %s34
    %s37 = ssub.s32 %s24, %s36
    %p38 = scmp.eq.s32.totalorder %s37, 0
    %s40 = sadd.s32 %s39, 1
    %s41 = scalar_select %p38, %s39, %s40
    %p44 = pneg %p38
    %p45 = scmp.eq.s32.totalorder %s17, 1
    %p46 = por %p44, %p45
    %p47 = scmp.ne.s32.totalorder %s39, %s42
    %p48 = scmp.eq.s32.totalorder %s17, 0
    %p49 = por %p47, %p48
    %p50 = scmp.ne.s32.totalorder %s39, %s42
    %p51 = scmp.eq.s32.totalorder %s22, 1
    %p52 = por %p50, %p51
    %p53 = scmp.ne.s32.totalorder %s42, %s43
    %p54 = scmp.eq.s32.totalorder %s22, 0
    %p55 = por %p53, %p54
    %p56 = scmp.ne.s32.totalorder %s42, %s43
    %p57 = scmp.eq.s32.totalorder %s23, 1
    %p58 = por %p56, %p57
    %p60 = scmp.ne.s32.totalorder %s43, %s59
    %p61 = scmp.eq.s32.totalorder %s23, 0
    %p62 = por %p60, %p61
    %s64 = sadd.s32 %s63, 1
    %p67 = scmp.eq.s32.totalorder %s17, 1
    %p68 = scmp.ne.s32.totalorder %s63, %s65
    %p69 = scmp.eq.s32.totalorder %s17, 0
    %p70 = por %p68, %p69
    %p71 = scmp.ne.s32.totalorder %s63, %s65
    %p72 = scmp.eq.s32.totalorder %s22, 1
    %p73 = por %p71, %p72
    %p74 = scmp.ne.s32.totalorder %s65, %s66
    %p75 = scmp.eq.s32.totalorder %s22, 0
    %p76 = por %p74, %p75
    %p77 = scmp.ne.s32.totalorder %s65, %s66
    %p78 = scmp.eq.s32.totalorder %s23, 1
    %p79 = por %p77, %p78
    %p81 = scmp.ne.s32.totalorder %s66, %s80
    %p82 = scmp.eq.s32.totalorder %s23, 0
    %p83 = por %p81, %p82
    %s85 = sadd.s32 %s84, 1
    %p88 = scmp.eq.s32.totalorder %s17, 1
    %p89 = scmp.ne.s32.totalorder %s84, %s86
    %p90 = scmp.eq.s32.totalorder %s17, 0
    %p91 = por %p89, %p90
    %p92 = scmp.ne.s32.totalorder %s84, %s86
    %p93 = scmp.eq.s32.totalorder %s22, 1
    %p94 = por %p92, %p93
    %p95 = scmp.ne.s32.totalorder %s86, %s87
    %p96 = scmp.eq.s32.totalorder %s22, 0
    %p97 = por %p95, %p96
    %p98 = scmp.ne.s32.totalorder %s86, %s87
    %p99 = scmp.eq.s32.totalorder %s23, 1
    %p100 = por %p98, %p99
    %p102 = scmp.ne.s32.totalorder %s87, %s101
    %p103 = scmp.eq.s32.totalorder %s23, 0
    %p104 = por %p102, %p103
    %s105 = ssub.s32 %s25, %s32
    %p106 = scmp.eq.s32.totalorder %s105, 0
    %s108 = sadd.s32 %s107, 1
    %s109 = scalar_select %p106, %s107, %s108
    %p112 = pneg %p106
    %p113 = scmp.eq.s32.totalorder %s17, 1
    %p114 = por %p112, %p113
    %p115 = scmp.ne.s32.totalorder %s107, %s110
    %p116 = scmp.eq.s32.totalorder %s17, 0
    %p117 = por %p115, %p116
    %p118 = scmp.ne.s32.totalorder %s107, %s110
    %p119 = scmp.eq.s32.totalorder %s22, 1
    %p120 = por %p118, %p119
    %p121 = scmp.ne.s32.totalorder %s110, %s111
    %p122 = scmp.eq.s32.totalorder %s22, 0
    %p123 = por %p121, %p122
    %p124 = scmp.ne.s32.totalorder %s110, %s111
    %p125 = scmp.eq.s32.totalorder %s23, 1
    %p126 = por %p124, %p125
    %p128 = scmp.ne.s32.totalorder %s111, %s127
    %p129 = scmp.eq.s32.totalorder %s23, 0
    %p130 = por %p128, %p129
    %s131 = ssub.s32 %s25, %s32
    %p132 = scmp.eq.s32.totalorder %s131, 0
    %s134 = sadd.s32 %s133, 1
    %s135 = scalar_select %p132, %s133, %s134
    %p138 = pneg %p132
    %p139 = scmp.eq.s32.totalorder %s17, 1
    %p140 = por %p138, %p139
    %p141 = scmp.ne.s32.totalorder %s133, %s136
    %p142 = scmp.eq.s32.totalorder %s17, 0
    %p143 = por %p141, %p142
    %p144 = scmp.ne.s32.totalorder %s133, %s136
    %p145 = scmp.eq.s32.totalorder %s22, 1
    %p146 = por %p144, %p145
    %p147 = scmp.ne.s32.totalorder %s136, %s137
    %p148 = scmp.eq.s32.totalorder %s22, 0
    %p149 = por %p147, %p148
    %p150 = scmp.ne.s32.totalorder %s136, %s137
    %p151 = scmp.eq.s32.totalorder %s23, 1
    %p152 = por %p150, %p151
    %p154 = scmp.ne.s32.totalorder %s137, %s153
    %p155 = scmp.eq.s32.totalorder %s23, 0
    %p156 = por %p154, %p155
    %s157 = ssub.s32 %s25, %s32
    %p158 = scmp.eq.s32.totalorder %s157, 0
    %s160 = sadd.s32 %s159, 1
    %s161 = scalar_select %p158, %s159, %s160
    %p164 = pneg %p158
    %p165 = scmp.eq.s32.totalorder %s17, 1
    %p166 = por %p164, %p165
    %p167 = scmp.ne.s32.totalorder %s159, %s162
    %p168 = scmp.eq.s32.totalorder %s17, 0
    %p169 = por %p167, %p168
    %p170 = scmp.ne.s32.totalorder %s159, %s162
    %p171 = scmp.eq.s32.totalorder %s22, 1
    %p172 = por %p170, %p171
    %p173 = scmp.ne.s32.totalorder %s162, %s163
    %p174 = scmp.eq.s32.totalorder %s22, 0
    %p175 = por %p173, %p174
    %p176 = scmp.ne.s32.totalorder %s162, %s163
    %p177 = scmp.eq.s32.totalorder %s23, 1
    %p178 = por %p176, %p177
    %p180 = scmp.ne.s32.totalorder %s163, %s179
    %p181 = scmp.eq.s32.totalorder %s23, 0
    %p182 = por %p180, %p181
    %s183 = ssub.s32 %s25, %s32
    %p184 = scmp.eq.s32.totalorder %s183, 0
    %s186 = sadd.s32 %s185, 1
    %s187 = scalar_select %p184, %s185, %s186
    %p190 = pneg %p184
    %p191 = scmp.eq.s32.totalorder %s17, 1
    %p192 = por %p190, %p191
    %p193 = scmp.ne.s32.totalorder %s185, %s188
    %p194 = scmp.eq.s32.totalorder %s17, 0
    %p195 = por %p193, %p194
    %p196 = scmp.ne.s32.totalorder %s185, %s188
    %p197 = scmp.eq.s32.totalorder %s22, 1
    %p198 = por %p196, %p197
    %p199 = scmp.ne.s32.totalorder %s188, %s189
    %p200 = scmp.eq.s32.totalorder %s22, 0
    %p201 = por %p199, %p200
    %p202 = scmp.ne.s32.totalorder %s188, %s189
    %p203 = scmp.eq.s32.totalorder %s23, 1
    %p204 = por %p202, %p203
    %p206 = scmp.ne.s32.totalorder %s189, %s205
    %p207 = scmp.eq.s32.totalorder %s23, 0
    %p208 = por %p206, %p207
    %s210 = sadd.s32 %s209, 1
    %p213 = scmp.eq.s32.totalorder %s17, 1
    %p214 = scmp.ne.s32.totalorder %s209, %s211
    %p215 = scmp.eq.s32.totalorder %s17, 0
    %p216 = por %p214, %p215
    %p217 = scmp.ne.s32.totalorder %s209, %s211
    %p218 = scmp.eq.s32.totalorder %s22, 1
    %p219 = por %p217, %p218
    %p220 = scmp.ne.s32.totalorder %s211, %s212
    %p221 = scmp.eq.s32.totalorder %s22, 0
    %p222 = por %p220, %p221
    %p223 = scmp.ne.s32.totalorder %s211, %s212
    %p224 = scmp.eq.s32.totalorder %s23, 1
    %p225 = por %p223, %p224
    %p227 = scmp.ne.s32.totalorder %s212, %s226
    %p228 = scmp.eq.s32.totalorder %s23, 0
    %p229 = por %p227, %p228
    %s231 = sadd.s32 %s230, 1
    %p234 = scmp.eq.s32.totalorder %s17, 1
    %p235 = scmp.ne.s32.totalorder %s230, %s232
    %p236 = scmp.eq.s32.totalorder %s17, 0
    %p237 = por %p235, %p236
    %p238 = scmp.ne.s32.totalorder %s230, %s232
    %p239 = scmp.eq.s32.totalorder %s22, 1
    %p240 = por %p238, %p239
    %p241 = scmp.ne.s32.totalorder %s232, %s233
    %p242 = scmp.eq.s32.totalorder %s22, 0
    %p243 = por %p241, %p242
    %p244 = scmp.ne.s32.totalorder %s232, %s233
    %p245 = scmp.eq.s32.totalorder %s23, 1
    %p246 = por %p244, %p245
    %p248 = scmp.ne.s32.totalorder %s233, %s247
    %p249 = scmp.eq.s32.totalorder %s23, 0
    %p250 = por %p248, %p249
    %s251 = ssub.s32 %s24, %s36
    %p252 = scmp.eq.s32.totalorder %s251, 0
    %s254 = sadd.s32 %s253, 1
    %s255 = scalar_select %p252, %s253, %s254
    %p258 = pneg %p252
    %p259 = scmp.eq.s32.totalorder %s17, 1
    %p260 = por %p258, %p259
    %p261 = scmp.ne.s32.totalorder %s253, %s256
    %p262 = scmp.eq.s32.totalorder %s17, 0
    %p263 = por %p261, %p262
    %p264 = scmp.ne.s32.totalorder %s253, %s256
    %p265 = scmp.eq.s32.totalorder %s22, 1
    %p266 = por %p264, %p265
    %p267 = scmp.ne.s32.totalorder %s256, %s257
    %p268 = scmp.eq.s32.totalorder %s22, 0
    %p269 = por %p267, %p268
    %p270 = scmp.ne.s32.totalorder %s256, %s257
    %p271 = scmp.eq.s32.totalorder %s23, 1
    %p272 = por %p270, %p271
    %p274 = scmp.ne.s32.totalorder %s257, %s273
    %p275 = scmp.eq.s32.totalorder %s23, 0
    %p276 = por %p274, %p275
    %p277 = scmp.le.s32.totalorder 1, %s17
    %p278 = scmp.lt.s32.totalorder %s17, 3
    %p279 = pnand %p277, %p278
    %p280 = pneg %p279
    // Predicated region
    $region9: #{debug_lstm_forward.1} parent=5 // pred_check
      _
    $region10: #{debug_lstm_forward.1} parent=5 // pred_check_branch
      %282 = sbr.rel (%p279) target = $region12
    $region11: #{debug_lstm_forward.1} parent=5 // pred_region
      %s283 = ssub.s32 %s17, 1
      // Predicated region
      $region13: #{debug_lstm_forward.1} parent=11 // pred_check
        %p284 = pneg %p55
      $region14: #{debug_lstm_forward.1} parent=11 // pred_check_branch
        %286 = sbr.rel (%p284) target = $region16
      $region15: #{debug_lstm_forward.1} parent=11 // pred_region
        %p287 = scmp.lt.s32.totalorder %s26, 0
        %s288 = scalar_select %p287, %s26, 0
        %s289 = smul.addr %s288, 8
        %s290 = smul.addr %s289, 4
        %s291 = scalar_lea.vmem %s0, %s290
      $region16: #{debug_lstm_forward.1} parent=11 // pred_fallthru
        _
      // Predicated region
      $region17: #{debug_lstm_forward.1} parent=11 // pred_check
        %p292 = pneg %p76
      $region18: #{debug_lstm_forward.1} parent=11 // pred_check_branch
        %294 = sbr.rel (%p292) target = $region20
      $region19: #{debug_lstm_forward.1} parent=11 // pred_region
        _
      $region20: #{debug_lstm_forward.1} parent=11 // pred_fallthru
        _
      // Predicated region
      $region21: #{debug_lstm_forward.1} parent=11 // pred_check
        %p295 = pneg %p97
      $region22: #{debug_lstm_forward.1} parent=11 // pred_check_branch
        %297 = sbr.rel (%p295) target = $region24
      $region23: #{debug_lstm_forward.1} parent=11 // pred_region
        _
      $region24: #{debug_lstm_forward.1} parent=11 // pred_fallthru
        _
      // Predicated region
      $region25: #{debug_lstm_forward.1} parent=11 // pred_check
        %p298 = pneg %p222
      $region26: #{debug_lstm_forward.1} parent=11 // pred_check_branch
        %300 = sbr.rel (%p298) target = $region28
      $region27: #{debug_lstm_forward.1} parent=11 // pred_region
        _
      $region28: #{debug_lstm_forward.1} parent=11 // pred_fallthru
        _
      // Predicated region
      $region29: #{debug_lstm_forward.1} parent=11 // pred_check
        %p301 = pneg %p243
      $region30: #{debug_lstm_forward.1} parent=11 // pred_check_branch
        %303 = sbr.rel (%p301) target = $region32
      $region31: #{debug_lstm_forward.1} parent=11 // pred_region
        _
      $region32: #{debug_lstm_forward.1} parent=11 // pred_fallthru
        _
    $region12: #{debug_lstm_forward.1} parent=5 // pred_fallthru
      _
    %p304 = scmp.lt.s32.totalorder %s17, 2
    // Predicated region
    $region33: #{debug_lstm_forward.1} parent=5 // pred_check
      %p305 = pneg %p304
    $region34: #{debug_lstm_forward.1} parent=5 // pred_check_branch
      %307 = sbr.rel (%p305) target = $region36
    $region35: #{debug_lstm_forward.1} parent=5 // pred_region
      // Predicated region
      $region37: #{debug_lstm_forward.1} parent=35 // pred_check
        %p308 = pneg %p117
      $region38: #{debug_lstm_forward.1} parent=35 // pred_check_branch
        %310 = sbr.rel (%p308) target = $region40
      $region39: #{debug_lstm_forward.1} parent=35 // pred_region
        %p311 = scmp.lt.s32.totalorder %s25, 1
        %s312 = scalar_select %p311, %s25, 1
        %s313 = smul.addr %s312, 48
        %s314 = smul.addr %s313, 4
        %s315 = scalar_lea.vmem %s3, %s314
      $region40: #{debug_lstm_forward.1} parent=35 // pred_fallthru
        _
      // Predicated region
      $region41: #{debug_lstm_forward.1} parent=35 // pred_check
        %p316 = pneg %p143
      $region42: #{debug_lstm_forward.1} parent=35 // pred_check_branch
        %318 = sbr.rel (%p316) target = $region44
      $region43: #{debug_lstm_forward.1} parent=35 // pred_region
        %p319 = scmp.lt.s32.totalorder %s25, 1
        %s320 = scalar_select %p319, %s25, 1
        %s321 = smul.addr %s320, 3
        %s322 = scalar_lea.vmem %s4, %s321
      $region44: #{debug_lstm_forward.1} parent=35 // pred_fallthru
        _
      // Predicated region
      $region45: #{debug_lstm_forward.1} parent=35 // pred_check
        %p323 = pneg %p169
      $region46: #{debug_lstm_forward.1} parent=35 // pred_check_branch
        %325 = sbr.rel (%p323) target = $region48
      $region47: #{debug_lstm_forward.1} parent=35 // pred_region
        %p326 = scmp.lt.s32.totalorder %s25, 1
        %s327 = scalar_select %p326, %s25, 1
        %s328 = smul.addr %s327, 48
        %s329 = smul.addr %s328, 4
        %s330 = scalar_lea.vmem %s5, %s329
      $region48: #{debug_lstm_forward.1} parent=35 // pred_fallthru
        _
      // Predicated region
      $region49: #{debug_lstm_forward.1} parent=35 // pred_check
        %p331 = pneg %p195
      $region50: #{debug_lstm_forward.1} parent=35 // pred_check_branch
        %333 = sbr.rel (%p331) target = $region52
      $region51: #{debug_lstm_forward.1} parent=35 // pred_region
        %p334 = scmp.lt.s32.totalorder %s25, 1
        %s335 = scalar_select %p334, %s25, 1
        %s336 = scalar_lea.vmem %s6, %s335
      $region52: #{debug_lstm_forward.1} parent=35 // pred_fallthru
        _
    $region36: #{debug_lstm_forward.1} parent=5 // pred_fallthru
      _
    %p337 = scmp.le.s32.totalorder 1, %s17
    %p338 = scmp.lt.s32.totalorder %s17, 3
    %p339 = pnand %p337, %p338
    %p340 = pneg %p339
    // Predicated region
    $region53: #{debug_lstm_forward.1} parent=5 // pred_check
      _
    $region54: #{debug_lstm_forward.1} parent=5 // pred_check_branch
      %342 = sbr.rel (%p339) target = $region56
    $region55: #{debug_lstm_forward.1} parent=5 // pred_region
      %s343 = ssub.s32 %s17, 1
      %p344 = scmp.lt.s32.totalorder %s26, 0
      %s345 = scalar_select %p344, %s26, 0
      %s346 = smul.addr %s345, 8
      %s347 = smul.addr %s346, 4
      %s348 = scalar_lea.vmem %s0, %s347
      %p349 = pneg %p55
      %p350 = pneg %p52
      %p351 = pneg %p76
      %p352 = pneg %p73
      %p353 = pneg %p97
      %p354 = pneg %p94
      %p355 = scmp.lt.s32.totalorder %s27, 1
      %s356 = scalar_select %p355, %s27, 1
      %s357 = smul.addr %s356, 48
      %s358 = smul.addr %s357, 4
      %s359 = scalar_lea.vmem %s3, %s358
      %p360 = pneg %p123
      %p361 = pneg %p120
      %p362 = scmp.lt.s32.totalorder %s27, 1
      %s363 = scalar_select %p362, %s27, 1
      %s364 = smul.addr %s363, 3
      %s365 = scalar_lea.vmem %s4, %s364
      %p366 = pneg %p149
      %p367 = pneg %p146
      %p368 = scmp.lt.s32.totalorder %s27, 1
      %s369 = scalar_select %p368, %s27, 1
      %s370 = smul.addr %s369, 48
      %s371 = smul.addr %s370, 4
      %s372 = scalar_lea.vmem %s5, %s371
      %p373 = pneg %p175
      %p374 = pneg %p172
      %p375 = scmp.lt.s32.totalorder %s27, 1
      %s376 = scalar_select %p375, %s27, 1
      %s377 = scalar_lea.vmem %s6, %s376
      %p378 = pneg %p201
      %p379 = pneg %p198
      %p380 = pneg %p222
      %p381 = pneg %p219
      %p382 = pneg %p243
      %p383 = pneg %p240
      %p384 = pneg %p269
      %p385 = pneg %p266
      %p386 = scmp.lt.s32.totalorder %s26, 0
      %s387 = scalar_select %p386, %s26, 0
      %s388 = smul.addr %s387, 8
      %s389 = scalar_lea.vmem %s9, %s388
      %p390 = scmp.lt.s32.totalorder %s26, 0
      %s391 = scalar_select %p390, %s26, 0
      %s392 = smul.addr %s391, 8
      %s393 = smul.addr %s392, 4
      %s394 = scalar_lea.vmem %s0, %s393
      %p395 = scmp.lt.s32.totalorder %s27, 1
      %s396 = scalar_select %p395, %s27, 1
      %s397 = smul.addr %s396, 48
      %s398 = smul.addr %s397, 4
      %s399 = scalar_lea.vmem %s3, %s398
      %p400 = scmp.lt.s32.totalorder %s27, 1
      %s401 = scalar_select %p400, %s27, 1
      %s402 = smul.addr %s401, 3
      %s403 = scalar_lea.vmem %s4, %s402
      %p404 = scmp.lt.s32.totalorder %s27, 1
      %s405 = scalar_select %p404, %s27, 1
      %s406 = smul.addr %s405, 48
      %s407 = smul.addr %s406, 4
      %s408 = scalar_lea.vmem %s5, %s407
      %p409 = scmp.lt.s32.totalorder %s27, 1
      %s410 = scalar_select %p409, %s27, 1
      %s411 = scalar_lea.vmem %s6, %s410
      %p412 = scmp.lt.s32.totalorder %s26, 0
      %s413 = scalar_select %p412, %s26, 0
      %s414 = smul.addr %s413, 8
      %s415 = scalar_lea.vmem %s9, %s414
      %p417 = scmp.eq.s32.totalorder %s27, 0
      // Predicated region
      $region57: #{debug_lstm_forward.1} parent=55 // pred_check
        %p418 = pneg %p417
      $region58: #{debug_lstm_forward.1} parent=55 // pred_check_branch
        %420 = sbr.rel (%p418) target = $region60
      $region59: #{debug_lstm_forward.1} parent=55 // pred_region
        %v421 = vld [vmem:[%s394] sm:$0xf]
        %v422 = vld [vmem:[%s394 + $0x4] sm:$0xf]
        %v423 = vld [vmem:[%s394 + $0x8] sm:$0xf]
        %v424 = vld [vmem:[%s394 + $0xc] sm:$0xf]
        %v425 = vld [vmem:[%s394 + $0x10] sm:$0xf]
        %v426 = vld [vmem:[%s394 + $0x14] sm:$0xf]
        %v427 = vld [vmem:[%s394 + $0x18] sm:$0xf]
        %v428 = vld [vmem:[%s394 + $0x1c] sm:$0xf]
        %v429 = vld [vmem:[%s1] sm:$0xff]
        %v430 = vld [vmem:[%s1 + $0x8] sm:$0xf]
        %v431 = vld [vmem:[%s1 + $0xc] sm:$0xff]
        %v432 = vld [vmem:[%s1 + $0x14] sm:$0xf]
        %v433 = vld [vmem:[%s1 + $0x18] sm:$0xff]
        %v434 = vld [vmem:[%s1 + $0x20] sm:$0xf]
        %v435 = vld [vmem:[%s1 + $0x24] sm:$0xff]
        %v436 = vld [vmem:[%s1 + $0x2c] sm:$0xf]
        %v437 = vld [vmem:[%s1 + $0x30] sm:$0xff]
        %v438 = vld [vmem:[%s1 + $0x38] sm:$0xf]
        %v439 = vld [vmem:[%s1 + $0x3c] sm:$0xff]
        %v440 = vld [vmem:[%s1 + $0x44] sm:$0xf]
        %v441 = vld [vmem:[%s1 + $0x48] sm:$0xff]
        %v442 = vld [vmem:[%s1 + $0x50] sm:$0xf]
        %v443 = vld [vmem:[%s1 + $0x54] sm:$0x11]
        %v444 = vld [vmem:[%s1 + $0x5c] sm:$0x1]
        %v445 = vld [vmem:[%s2] sm:$0x7]
        %v447 = vlaneseq
        %v448 = vshrl.u32 %v447, 7
        %v449 = vsub.s32 0, %v448
        %v450 = vrot.slane %v445, %v449
        %v451 = vlaneseq
        %v452 = vshrl.u32 %v451, 7
        %v453 = vsub.s32 1, %v452
        %v454 = vrot.slane %v445, %v453
        %v455 = vlaneseq
        %v456 = vshrl.u32 %v455, 7
        %v457 = vsub.s32 2, %v456
        %v458 = vrot.slane %v445, %v457
        %v470 = vunpack.c.l.b16 %v421
        %v471 = vunpack.c.l.b16 %v422
        %v472 = vunpack.c.l.b16 %v423
        %v473 = vunpack.c.l.b16 %v424
        %v474 = vunpack.c.l.b16 %v425
        %v475 = vunpack.c.l.b16 %v426
        %v476 = vunpack.c.l.b16 %v427
        %v477 = vunpack.c.l.b16 %v428
        %v478 = vpack.c.b16 %v471, %v470
        %v479 = vpack.c.b16 %v473, %v472
        %v480 = vpack.c.b16 %v475, %v474
        %v481 = vpack.c.b16 %v477, %v476
        %v498 = vunpack.c.l.b16 %v429
        %v499 = vunpack.c.h.b16 %v429
        %v500 = vunpack.c.l.b16 %v430
        %v501 = vunpack.c.l.b16 %v431
        %v502 = vunpack.c.h.b16 %v431
        %v503 = vunpack.c.l.b16 %v432
        %v504 = vunpack.c.l.b16 %v433
        %v505 = vunpack.c.h.b16 %v433
        %v506 = vunpack.c.l.b16 %v434
        %v507 = vunpack.c.l.b16 %v435
        %v508 = vunpack.c.h.b16 %v435
        %v509 = vunpack.c.l.b16 %v436
        %v510 = vunpack.c.l.b16 %v437
        %v511 = vunpack.c.h.b16 %v437
        %v512 = vunpack.c.l.b16 %v438
        %v513 = vunpack.c.l.b16 %v439
        %v514 = vunpack.c.h.b16 %v439
        %v515 = vunpack.c.l.b16 %v440
        %v516 = vunpack.c.l.b16 %v441
        %v517 = vunpack.c.h.b16 %v441
        %v518 = vunpack.c.l.b16 %v442
        %v519 = vunpack.c.l.b16 %v443
        %v520 = vunpack.c.h.b16 %v443
        %v521 = vunpack.c.l.b16 %v444
        %v522 = vpack.c.b16 %v501, %v498
        %v523 = vpack.c.b16 %v502, %v499
        %v524 = vpack.c.b16 %v503, %v500
        %v525 = vpack.c.b16 %v507, %v504
        %v526 = vpack.c.b16 %v508, %v505
        %v527 = vpack.c.b16 %v509, %v506
        %v528 = vpack.c.b16 %v513, %v510
        %v529 = vpack.c.b16 %v514, %v511
        %v530 = vpack.c.b16 %v515, %v512
        %v531 = vpack.c.b16 %v519, %v516
        %v532 = vpack.c.b16 %v520, %v517
        %v533 = vpack.c.b16 %v521, %v518
        %vm543 = vcmask 474112
        %v545 = vsel %vm543, %v478, 0
        %v548 = vsel %vm543, %v479, 0
        %v551 = vsel %vm543, %v480, 0
        %v554 = vsel %vm543, %v481, 0
        %vm556 = vcmask 1044480
        %v558 = vsel %vm556, %v531, 0
        %v561 = vsel %vm556, %v532, 0
        %v564 = vsel %vm556, %v533, 0
        %566 = vmatprep.subr.bf16.mxu0 %v523
        %567 = vmatpush1.bf16.msra.mxu0 %v522
        %568 = vmatprep.subr.bf16.mxu0 %v526
        %569 = vmatpush1.bf16.msra.mxu0 %v525
        %570 = vmatprep.subr.bf16.mxu0 %v529
        %571 = vmatpush1.bf16.msra.mxu0 %v528
        %572 = vmatprep.subr.bf16.mxu0 %v561
        %573 = vmatpush1.bf16.msra.mxu0 %v558
        %574 = vmatprep.subr.bf16.mxu0 0
        %575 = vmatpush1.bf16.msra.mxu0 0
        %576 = vmatprep.subr.bf16.mxu0 0
        %577 = vmatpush1.bf16.msra.mxu0 0
        %578 = vmatprep.subr.bf16.mxu0 0
        %579 = vmatpush1.bf16.msra.mxu0 0
        %580 = vmatprep.subr.bf16.mxu0 0
        %581 = vmatpush1.bf16.msra.mxu0 0
        %582 = vmatprep.subr.bf16.mxu0 0
        %583 = vmatpush1.bf16.msra.mxu0 0
        %584 = vmatprep.subr.bf16.mxu0 0
        %585 = vmatpush1.bf16.msra.mxu0 0
        %586 = vmatprep.subr.bf16.mxu0 0
        %587 = vmatpush1.bf16.msra.mxu0 0
        %588 = vmatprep.subr.bf16.mxu0 0
        %589 = vmatpush1.bf16.msra.mxu0 0
        %590 = vmatprep.subr.bf16.mxu0 0
        %591 = vmatpush1.bf16.msra.mxu0 0
        %592 = vmatprep.subr.bf16.mxu0 0
        %593 = vmatpush1.bf16.msra.mxu0 0
        %594 = vmatprep.subr.bf16.mxu0 0
        %595 = vmatpush1.bf16.msra.mxu0 0
        %596 = vmatprep.subr.bf16.mxu0 0
        %597 = vmatpush1.bf16.msra.mxu0 0
        %598 = vmatprep.mubr.bf16.mxu0 0
        %599 = vmatmul.mubr.bf16.gmra.mrb[0].mxu0 %v545
        %v600 = vpop.f32.mrb[0].mxu0
        %v601 = vadd.f32 %v450, %v600
        %v602 = vpop.f32.mrb[0].mxu0
        %v603 = vadd.f32 %v454, %v602
        %v604 = vpop.f32.mrb[0].mxu0
        %v605 = vadd.f32 %v450, %v604
        %v606 = vpop.f32.mrb[0].mxu0
        %v607 = vadd.f32 %v454, %v606
        %608 = vmatprep.mubr.bf16.mxu0 0
        %609 = vmatmul.mubr.bf16.gmra.mrb[0].mxu0 %v548
        %v610 = vpop.f32.mrb[0].mxu0
        %v611 = vadd.f32 %v450, %v610
        %v612 = vpop.f32.mrb[0].mxu0
        %v613 = vadd.f32 %v454, %v612
        %v614 = vpop.f32.mrb[0].mxu0
        %v615 = vadd.f32 %v450, %v614
        %v616 = vpop.f32.mrb[0].mxu0
        %v617 = vadd.f32 %v454, %v616
        %618 = vmatprep.mubr.bf16.mxu0 0
        %619 = vmatmul.mubr.bf16.gmra.mrb[0].mxu0 %v551
        %v620 = vpop.f32.mrb[0].mxu0
        %v621 = vadd.f32 %v450, %v620
        %v622 = vpop.f32.mrb[0].mxu0
        %v623 = vadd.f32 %v454, %v622
        %v624 = vpop.f32.mrb[0].mxu0
        %v625 = vadd.f32 %v450, %v624
        %v626 = vpop.f32.mrb[0].mxu0
        %v627 = vadd.f32 %v454, %v626
        %628 = vmatprep.mubr.bf16.mxu0 0
        %629 = vmatmul.mubr.bf16.gmra.mrb[0].mxu0 %v554
        %v630 = vpop.f32.mrb[0].mxu0
        %v631 = vadd.f32 %v450, %v630
        %v632 = vpop.f32.mrb[0].mxu0
        %v633 = vadd.f32 %v454, %v632
        %v634 = vpop.f32.mrb[0].mxu0
        %v635 = vadd.f32 %v450, %v634
        %v636 = vpop.f32.mrb[0].mxu0
        %v637 = vadd.f32 %v454, %v636
        %638 = vdwg.mxu0
        %639 = vmatprep.subr.bf16.mxu0 0
        %640 = vmatpush1.bf16.msra.mxu0 %v524
        %641 = vmatprep.subr.bf16.mxu0 0
        %642 = vmatpush1.bf16.msra.mxu0 %v527
        %643 = vmatprep.subr.bf16.mxu0 0
        %644 = vmatpush1.bf16.msra.mxu0 %v530
        %645 = vmatprep.subr.bf16.mxu0 0
        %646 = vmatpush1.bf16.msra.mxu0 %v564
        %647 = vmatprep.subr.bf16.mxu0 0
        %648 = vmatpush1.bf16.msra.mxu0 0
        %649 = vmatprep.subr.bf16.mxu0 0
        %650 = vmatpush1.bf16.msra.mxu0 0
        %651 = vmatprep.subr.bf16.mxu0 0
        %652 = vmatpush1.bf16.msra.mxu0 0
        %653 = vmatprep.subr.bf16.mxu0 0
        %654 = vmatpush1.bf16.msra.mxu0 0
        %655 = vmatprep.subr.bf16.mxu0 0
        %656 = vmatpush1.bf16.msra.mxu0 0
        %657 = vmatprep.subr.bf16.mxu0 0
        %658 = vmatpush1.bf16.msra.mxu0 0
        %659 = vmatprep.subr.bf16.mxu0 0
        %660 = vmatpush1.bf16.msra.mxu0 0
        %661 = vmatprep.subr.bf16.mxu0 0
        %662 = vmatpush1.bf16.msra.mxu0 0
        %663 = vmatprep.subr.bf16.mxu0 0
        %664 = vmatpush1.bf16.msra.mxu0 0
        %665 = vmatprep.subr.bf16.mxu0 0
        %666 = vmatpush1.bf16.msra.mxu0 0
        %667 = vmatprep.subr.bf16.mxu0 0
        %668 = vmatpush1.bf16.msra.mxu0 0
        %669 = vmatprep.subr.bf16.mxu0 0
        %670 = vmatpush1.bf16.msra.mxu0 0
        %671 = vmatprep.mubr.bf16.mxu0 0
        %672 = vmatmul.mubr.bf16.gmra.mrb[0].mxu0 %v545
        %v673 = vpop.f32.mrb[0].mxu0
        %v674 = vadd.f32 %v458, %v673
        %v675 = vpop.f32.mrb[0].mxu0
        %v676 = vpop.f32.mrb[0].mxu0
        %v677 = vadd.f32 %v458, %v676
        %v678 = vpop.f32.mrb[0].mxu0
        %679 = vmatprep.mubr.bf16.mxu0 0
        %680 = vmatmul.mubr.bf16.gmra.mrb[0].mxu0 %v548
        %v681 = vpop.f32.mrb[0].mxu0
        %v682 = vadd.f32 %v458, %v681
        %v683 = vpop.f32.mrb[0].mxu0
        %v684 = vpop.f32.mrb[0].mxu0
        %v685 = vadd.f32 %v458, %v684
        %v686 = vpop.f32.mrb[0].mxu0
        %687 = vmatprep.mubr.bf16.mxu0 0
        %688 = vmatmul.mubr.bf16.gmra.mrb[0].mxu0 %v551
        %v689 = vpop.f32.mrb[0].mxu0
        %v690 = vadd.f32 %v458, %v689
        %v691 = vpop.f32.mrb[0].mxu0
        %v692 = vpop.f32.mrb[0].mxu0
        %v693 = vadd.f32 %v458, %v692
        %v694 = vpop.f32.mrb[0].mxu0
        %695 = vmatprep.mubr.bf16.mxu0 0
        %696 = vmatmul.mubr.bf16.gmra.mrb[0].mxu0 %v554
        %v697 = vpop.f32.mrb[0].mxu0
        %v698 = vadd.f32 %v458, %v697
        %v699 = vpop.f32.mrb[0].mxu0
        %v700 = vpop.f32.mrb[0].mxu0
        %v701 = vadd.f32 %v458, %v700
        %v702 = vpop.f32.mrb[0].mxu0
        %703 = vdwg.mxu0
        %704 = vst [vmem:[#allocation2] sm:$0xff] %v601
        %705 = vst [vmem:[#allocation2 + $0x8] sm:$0xff] %v603
        %706 = vst [vmem:[#allocation2 + $0x10] sm:$0xff] %v674
        %707 = vst [vmem:[#allocation2 + $0x18] sm:$0xff] %v605
        %708 = vst [vmem:[#allocation2 + $0x20] sm:$0xff] %v607
        %709 = vst [vmem:[#allocation2 + $0x28] sm:$0xff] %v677
        %710 = vst [vmem:[#allocation2 + $0x30] sm:$0xff] %v611
        %711 = vst [vmem:[#allocation2 + $0x38] sm:$0xff] %v613
        %712 = vst [vmem:[#allocation2 + $0x40] sm:$0xff] %v682
        %713 = vst [vmem:[#allocation2 + $0x48] sm:$0xff] %v615
        %714 = vst [vmem:[#allocation2 + $0x50] sm:$0xff] %v617
        %715 = vst [vmem:[#allocation2 + $0x58] sm:$0xff] %v685
        %716 = vst [vmem:[#allocation2 + $0x60] sm:$0xff] %v621
        %717 = vst [vmem:[#allocation2 + $0x68] sm:$0xff] %v623
        %718 = vst [vmem:[#allocation2 + $0x70] sm:$0xff] %v690
        %719 = vst [vmem:[#allocation2 + $0x78] sm:$0xff] %v625
        %720 = vst [vmem:[#allocation2 + $0x80] sm:$0xff] %v627
        %721 = vst [vmem:[#allocation2 + $0x88] sm:$0xff] %v693
        %722 = vst [vmem:[#allocation2 + $0x90] sm:$0xff] %v631
        %723 = vst [vmem:[#allocation2 + $0x98] sm:$0xff] %v633
        %724 = vst [vmem:[#allocation2 + $0xa0] sm:$0xff] %v698
        %725 = vst [vmem:[#allocation2 + $0xa8] sm:$0xff] %v635
        %726 = vst [vmem:[#allocation2 + $0xb0] sm:$0xff] %v637
        %727 = vst [vmem:[#allocation2 + $0xb8] sm:$0xff] %v701
      $region60: #{debug_lstm_forward.1} parent=55 // pred_fallthru
        _
      %p728 = scmp.gt.s32.totalorder %s27, 0
      // Predicated region
      $region61: #{debug_lstm_forward.1} parent=55 // pred_check
        %p729 = pneg %p728
      $region62: #{debug_lstm_forward.1} parent=55 // pred_check_branch
        %731 = sbr.rel (%p729) target = $region64
      $region63: #{debug_lstm_forward.1} parent=55 // pred_region
        %v732 = vld [vmem:[#allocation3] sm:$0xff]
        %v733 = vld [vmem:[#allocation3 + $0x8] sm:$0xff]
        %v734 = vld [vmem:[#allocation3 + $0x10] sm:$0xff]
        %v735 = vld [vmem:[#allocation3 + $0x18] sm:$0xff]
        %v736 = vld [vmem:[#allocation3 + $0x20] sm:$0xff]
        %v737 = vld [vmem:[#allocation3 + $0x28] sm:$0xff]
        %v738 = vld [vmem:[#allocation3 + $0x30] sm:$0xff]
        %v739 = vld [vmem:[#allocation3 + $0x38] sm:$0xff]
        %v740 = vpack.c.bf16 %v733, %v732
        %v741 = vpack.c.bf16 %v735, %v734
        %v742 = vpack.c.bf16 %v737, %v736
        %v743 = vpack.c.bf16 %v739, %v738
        %v744 = vld [vmem:[%s399] sm:$0xff]
        %v745 = vld [vmem:[%s399 + $0x8] sm:$0xf]
        %v746 = vld [vmem:[%s399 + $0xc] sm:$0xff]
        %v747 = vld [vmem:[%s399 + $0x14] sm:$0xf]
        %v748 = vld [vmem:[%s399 + $0x18] sm:$0xff]
        %v749 = vld [vmem:[%s399 + $0x20] sm:$0xf]
        %v750 = vld [vmem:[%s399 + $0x24] sm:$0xff]
        %v751 = vld [vmem:[%s399 + $0x2c] sm:$0xf]
        %v752 = vld [vmem:[%s399 + $0x30] sm:$0xff]
        %v753 = vld [vmem:[%s399 + $0x38] sm:$0xf]
        %v754 = vld [vmem:[%s399 + $0x3c] sm:$0xff]
        %v755 = vld [vmem:[%s399 + $0x44] sm:$0xf]
        %v756 = vld [vmem:[%s399 + $0x48] sm:$0xff]
        %v757 = vld [vmem:[%s399 + $0x50] sm:$0xf]
        %v758 = vld [vmem:[%s399 + $0x54] sm:$0xff]
        %v759 = vld [vmem:[%s399 + $0x5c] sm:$0xf]
        %v760 = vld [vmem:[%s399 + $0x60] sm:$0xff]
        %v761 = vld [vmem:[%s399 + $0x68] sm:$0xf]
        %v762 = vld [vmem:[%s399 + $0x6c] sm:$0xff]
        %v763 = vld [vmem:[%s399 + $0x74] sm:$0xf]
        %v764 = vld [vmem:[%s399 + $0x78] sm:$0xff]
        %v765 = vld [vmem:[%s399 + $0x80] sm:$0xf]
        %v766 = vld [vmem:[%s399 + $0x84] sm:$0xff]
        %v767 = vld [vmem:[%s399 + $0x8c] sm:$0xf]
        %v768 = vld [vmem:[%s399 + $0x90] sm:$0xff]
        %v769 = vld [vmem:[%s399 + $0x98] sm:$0xf]
        %v770 = vld [vmem:[%s399 + $0x9c] sm:$0xff]
        %v771 = vld [vmem:[%s399 + $0xa4] sm:$0xf]
        %v772 = vld [vmem:[%s399 + $0xa8] sm:$0xff]
        %v773 = vld [vmem:[%s399 + $0xb0] sm:$0xf]
        %v774 = vld [vmem:[%s399 + $0xb4] sm:$0xff]
        %v775 = vld [vmem:[%s399 + $0xbc] sm:$0xf]
        %v776 = vld [vmem:[%s403] sm:$0x7]
        %v778 = vlaneseq
        %v779 = vshrl.u32 %v778, 7
        %v780 = vsub.s32 0, %v779
        %v781 = vrot.slane %v776, %v780
        %v782 = vlaneseq
        %v783 = vshrl.u32 %v782, 7
        %v784 = vsub.s32 1, %v783
        %v785 = vrot.slane %v776, %v784
        %v786 = vlaneseq
        %v787 = vshrl.u32 %v786, 7
        %v788 = vsub.s32 2, %v787
        %v789 = vrot.slane %v776, %v788
        %v825 = vunpack.c.l.b16 %v744
        %v826 = vunpack.c.h.b16 %v744
        %v827 = vunpack.c.l.b16 %v745
        %v828 = vunpack.c.l.b16 %v746
        %v829 = vunpack.c.h.b16 %v746
        %v830 = vunpack.c.l.b16 %v747
        %v831 = vunpack.c.l.b16 %v748
        %v832 = vunpack.c.h.b16 %v748
        %v833 = vunpack.c.l.b16 %v749
        %v834 = vunpack.c.l.b16 %v750
        %v835 = vunpack.c.h.b16 %v750
        %v836 = vunpack.c.l.b16 %v751
        %v837 = vunpack.c.l.b16 %v752
        %v838 = vunpack.c.h.b16 %v752
        %v839 = vunpack.c.l.b16 %v753
        %v840 = vunpack.c.l.b16 %v754
        %v841 = vunpack.c.h.b16 %v754
        %v842 = vunpack.c.l.b16 %v755
        %v843 = vunpack.c.l.b16 %v756
        %v844 = vunpack.c.h.b16 %v756
        %v845 = vunpack.c.l.b16 %v757
        %v846 = vunpack.c.l.b16 %v758
        %v847 = vunpack.c.h.b16 %v758
        %v848 = vunpack.c.l.b16 %v759
        %v849 = vunpack.c.l.b16 %v760
        %v850 = vunpack.c.h.b16 %v760
        %v851 = vunpack.c.l.b16 %v761
        %v852 = vunpack.c.l.b16 %v762
        %v853 = vunpack.c.h.b16 %v762
        %v854 = vunpack.c.l.b16 %v763
        %v855 = vunpack.c.l.b16 %v764
        %v856 = vunpack.c.h.b16 %v764
        %v857 = vunpack.c.l.b16 %v765
        %v858 = vunpack.c.l.b16 %v766
        %v859 = vunpack.c.h.b16 %v766
        %v860 = vunpack.c.l.b16 %v767
        %v861 = vunpack.c.l.b16 %v768
        %v862 = vunpack.c.h.b16 %v768
        %v863 = vunpack.c.l.b16 %v769
        %v864 = vunpack.c.l.b16 %v770
        %v865 = vunpack.c.h.b16 %v770
        %v866 = vunpack.c.l.b16 %v771
        %v867 = vunpack.c.l.b16 %v772
        %v868 = vunpack.c.h.b16 %v772
        %v869 = vunpack.c.l.b16 %v773
        %v870 = vunpack.c.l.b16 %v774
        %v871 = vunpack.c.h.b16 %v774
        %v872 = vunpack.c.l.b16 %v775
        %v873 = vpack.c.b16 %v828, %v825
        %v874 = vpack.c.b16 %v829, %v826
        %v875 = vpack.c.b16 %v830, %v827
        %v876 = vpack.c.b16 %v834, %v831
        %v877 = vpack.c.b16 %v835, %v832
        %v878 = vpack.c.b16 %v836, %v833
        %v879 = vpack.c.b16 %v840, %v837
        %v880 = vpack.c.b16 %v841, %v838
        %v881 = vpack.c.b16 %v842, %v839
        %v882 = vpack.c.b16 %v846, %v843
        %v883 = vpack.c.b16 %v847, %v844
        %v884 = vpack.c.b16 %v848, %v845
        %v885 = vpack.c.b16 %v852, %v849
        %v886 = vpack.c.b16 %v853, %v850
        %v887 = vpack.c.b16 %v854, %v851
        %v888 = vpack.c.b16 %v858, %v855
        %v889 = vpack.c.b16 %v859, %v856
        %v890 = vpack.c.b16 %v860, %v857
        %v891 = vpack.c.b16 %v864, %v861
        %v892 = vpack.c.b16 %v865, %v862
        %v893 = vpack.c.b16 %v866, %v863
        %v894 = vpack.c.b16 %v870, %v867
        %v895 = vpack.c.b16 %v871, %v868
        %v896 = vpack.c.b16 %v872, %v869
        %921 = vmatprep.subr.bf16.mxu0 %v874
        %922 = vmatpush1.bf16.msra.mxu0 %v873
        %923 = vmatprep.subr.bf16.mxu0 %v877
        %924 = vmatpush1.bf16.msra.mxu0 %v876
        %925 = vmatprep.subr.bf16.mxu0 %v880
        %926 = vmatpush1.bf16.msra.mxu0 %v879
        %927 = vmatprep.subr.bf16.mxu0 %v883
        %928 = vmatpush1.bf16.msra.mxu0 %v882
        %929 = vmatprep.subr.bf16.mxu0 %v886
        %930 = vmatpush1.bf16.msra.mxu0 %v885
        %931 = vmatprep.subr.bf16.mxu0 %v889
        %932 = vmatpush1.bf16.msra.mxu0 %v888
        %933 = vmatprep.subr.bf16.mxu0 %v892
        %934 = vmatpush1.bf16.msra.mxu0 %v891
        %935 = vmatprep.subr.bf16.mxu0 %v895
        %936 = vmatpush1.bf16.msra.mxu0 %v894
        %937 = vmatprep.subr.bf16.mxu0 0
        %938 = vmatpush1.bf16.msra.mxu0 0
        %939 = vmatprep.subr.bf16.mxu0 0
        %940 = vmatpush1.bf16.msra.mxu0 0
        %941 = vmatprep.subr.bf16.mxu0 0
        %942 = vmatpush1.bf16.msra.mxu0 0
        %943 = vmatprep.subr.bf16.mxu0 0
        %944 = vmatpush1.bf16.msra.mxu0 0
        %945 = vmatprep.subr.bf16.mxu0 0
        %946 = vmatpush1.bf16.msra.mxu0 0
        %947 = vmatprep.subr.bf16.mxu0 0
        %948 = vmatpush1.bf16.msra.mxu0 0
        %949 = vmatprep.subr.bf16.mxu0 0
        %950 = vmatpush1.bf16.msra.mxu0 0
        %951 = vmatprep.subr.bf16.mxu0 0
        %952 = vmatpush1.bf16.msra.mxu0 0
        %953 = vmatprep.mubr.bf16.mxu0 0
        %954 = vmatmul.mubr.bf16.gmra.mrb[0].mxu0 %v740
        %v955 = vpop.f32.mrb[0].mxu0
        %v956 = vadd.f32 %v781, %v955
        %v957 = vpop.f32.mrb[0].mxu0
        %v958 = vadd.f32 %v785, %v957
        %v959 = vpop.f32.mrb[0].mxu0
        %v960 = vadd.f32 %v781, %v959
        %v961 = vpop.f32.mrb[0].mxu0
        %v962 = vadd.f32 %v785, %v961
        %963 = vmatprep.mubr.bf16.mxu0 0
        %964 = vmatmul.mubr.bf16.gmra.mrb[0].mxu0 %v741
        %v965 = vpop.f32.mrb[0].mxu0
        %v966 = vadd.f32 %v781, %v965
        %v967 = vpop.f32.mrb[0].mxu0
        %v968 = vadd.f32 %v785, %v967
        %v969 = vpop.f32.mrb[0].mxu0
        %v970 = vadd.f32 %v781, %v969
        %v971 = vpop.f32.mrb[0].mxu0
        %v972 = vadd.f32 %v785, %v971
        %973 = vmatprep.mubr.bf16.mxu0 0
        %974 = vmatmul.mubr.bf16.gmra.mrb[0].mxu0 %v742
        %v975 = vpop.f32.mrb[0].mxu0
        %v976 = vadd.f32 %v781, %v975
        %v977 = vpop.f32.mrb[0].mxu0
        %v978 = vadd.f32 %v785, %v977
        %v979 = vpop.f32.mrb[0].mxu0
        %v980 = vadd.f32 %v781, %v979
        %v981 = vpop.f32.mrb[0].mxu0
        %v982 = vadd.f32 %v785, %v981
        %983 = vmatprep.mubr.bf16.mxu0 0
        %984 = vmatmul.mubr.bf16.gmra.mrb[0].mxu0 %v743
        %v985 = vpop.f32.mrb[0].mxu0
        %v986 = vadd.f32 %v781, %v985
        %v987 = vpop.f32.mrb[0].mxu0
        %v988 = vadd.f32 %v785, %v987
        %v989 = vpop.f32.mrb[0].mxu0
        %v990 = vadd.f32 %v781, %v989
        %v991 = vpop.f32.mrb[0].mxu0
        %v992 = vadd.f32 %v785, %v991
        %993 = vdwg.mxu0
        %994 = vmatprep.subr.bf16.mxu0 0
        %995 = vmatpush1.bf16.msra.mxu0 %v875
        %996 = vmatprep.subr.bf16.mxu0 0
        %997 = vmatpush1.bf16.msra.mxu0 %v878
        %998 = vmatprep.subr.bf16.mxu0 0
        %999 = vmatpush1.bf16.msra.mxu0 %v881
        %1000 = vmatprep.subr.bf16.mxu0 0
        %1001 = vmatpush1.bf16.msra.mxu0 %v884
        %1002 = vmatprep.subr.bf16.mxu0 0
        %1003 = vmatpush1.bf16.msra.mxu0 %v887
        %1004 = vmatprep.subr.bf16.mxu0 0
        %1005 = vmatpush1.bf16.msra.mxu0 %v890
        %1006 = vmatprep.subr.bf16.mxu0 0
        %1007 = vmatpush1.bf16.msra.mxu0 %v893
        %1008 = vmatprep.subr.bf16.mxu0 0
        %1009 = vmatpush1.bf16.msra.mxu0 %v896
        %1010 = vmatprep.subr.bf16.mxu0 0
        %1011 = vmatpush1.bf16.msra.mxu0 0
        %1012 = vmatprep.subr.bf16.mxu0 0
        %1013 = vmatpush1.bf16.msra.mxu0 0
        %1014 = vmatprep.subr.bf16.mxu0 0
        %1015 = vmatpush1.bf16.msra.mxu0 0
        %1016 = vmatprep.subr.bf16.mxu0 0
        %1017 = vmatpush1.bf16.msra.mxu0 0
        %1018 = vmatprep.subr.bf16.mxu0 0
        %1019 = vmatpush1.bf16.msra.mxu0 0
        %1020 = vmatprep.subr.bf16.mxu0 0
        %1021 = vmatpush1.bf16.msra.mxu0 0
        %1022 = vmatprep.subr.bf16.mxu0 0
        %1023 = vmatpush1.bf16.msra.mxu0 0
        %1024 = vmatprep.subr.bf16.mxu0 0
        %1025 = vmatpush1.bf16.msra.mxu0 0
        %1026 = vmatprep.mubr.bf16.mxu0 0
        %1027 = vmatmul.mubr.bf16.gmra.mrb[0].mxu0 %v740
        %v1028 = vpop.f32.mrb[0].mxu0
        %v1029 = vadd.f32 %v789, %v1028
        %v1030 = vpop.f32.mrb[0].mxu0
        %v1031 = vpop.f32.mrb[0].mxu0
        %v1032 = vadd.f32 %v789, %v1031
        %v1033 = vpop.f32.mrb[0].mxu0
        %1034 = vmatprep.mubr.bf16.mxu0 0
        %1035 = vmatmul.mubr.bf16.gmra.mrb[0].mxu0 %v741
        %v1036 = vpop.f32.mrb[0].mxu0
        %v1037 = vadd.f32 %v789, %v1036
        %v1038 = vpop.f32.mrb[0].mxu0
        %v1039 = vpop.f32.mrb[0].mxu0
        %v1040 = vadd.f32 %v789, %v1039
        %v1041 = vpop.f32.mrb[0].mxu0
        %1042 = vmatprep.mubr.bf16.mxu0 0
        %1043 = vmatmul.mubr.bf16.gmra.mrb[0].mxu0 %v742
        %v1044 = vpop.f32.mrb[0].mxu0
        %v1045 = vadd.f32 %v789, %v1044
        %v1046 = vpop.f32.mrb[0].mxu0
        %v1047 = vpop.f32.mrb[0].mxu0
        %v1048 = vadd.f32 %v789, %v1047
        %v1049 = vpop.f32.mrb[0].mxu0
        %1050 = vmatprep.mubr.bf16.mxu0 0
        %1051 = vmatmul.mubr.bf16.gmra.mrb[0].mxu0 %v743
        %v1052 = vpop.f32.mrb[0].mxu0
        %v1053 = vadd.f32 %v789, %v1052
        %v1054 = vpop.f32.mrb[0].mxu0
        %v1055 = vpop.f32.mrb[0].mxu0
        %v1056 = vadd.f32 %v789, %v1055
        %v1057 = vpop.f32.mrb[0].mxu0
        %1058 = vdwg.mxu0
        %1059 = vst [vmem:[#allocation2] sm:$0xff] %v956
        %1060 = vst [vmem:[#allocation2 + $0x8] sm:$0xff] %v958
        %1061 = vst [vmem:[#allocation2 + $0x10] sm:$0xff] %v1029
        %1062 = vst [vmem:[#allocation2 + $0x18] sm:$0xff] %v960
        %1063 = vst [vmem:[#allocation2 + $0x20] sm:$0xff] %v962
        %1064 = vst [vmem:[#allocation2 + $0x28] sm:$0xff] %v1032
        %1065 = vst [vmem:[#allocation2 + $0x30] sm:$0xff] %v966
        %1066 = vst [vmem:[#allocation2 + $0x38] sm:$0xff] %v968
        %1067 = vst [vmem:[#allocation2 + $0x40] sm:$0xff] %v1037
        %1068 = vst [vmem:[#allocation2 + $0x48] sm:$0xff] %v970
        %1069 = vst [vmem:[#allocation2 + $0x50] sm:$0xff] %v972
        %1070 = vst [vmem:[#allocation2 + $0x58] sm:$0xff] %v1040
        %1071 = vst [vmem:[#allocation2 + $0x60] sm:$0xff] %v976
        %1072 = vst [vmem:[#allocation2 + $0x68] sm:$0xff] %v978
        %1073 = vst [vmem:[#allocation2 + $0x70] sm:$0xff] %v1045
        %1074 = vst [vmem:[#allocation2 + $0x78] sm:$0xff] %v980
        %1075 = vst [vmem:[#allocation2 + $0x80] sm:$0xff] %v982
        %1076 = vst [vmem:[#allocation2 + $0x88] sm:$0xff] %v1048
        %1077 = vst [vmem:[#allocation2 + $0x90] sm:$0xff] %v986
        %1078 = vst [vmem:[#allocation2 + $0x98] sm:$0xff] %v988
        %1079 = vst [vmem:[#allocation2 + $0xa0] sm:$0xff] %v1053
        %1080 = vst [vmem:[#allocation2 + $0xa8] sm:$0xff] %v990
        %1081 = vst [vmem:[#allocation2 + $0xb0] sm:$0xff] %v992
        %1082 = vst [vmem:[#allocation2 + $0xb8] sm:$0xff] %v1056
      $region64: #{debug_lstm_forward.1} parent=55 // pred_fallthru
        _
      %v1083 = vld [vmem:[%s411] sm:$0x1]
      %v1085 = vlaneseq
      %v1086 = vshrl.u32 %v1085, 7
      %v1087 = vsub.s32 0, %v1086
      %v1088 = vrot.slane %v1083, %v1087
      %v1090 = vld [vmem:[%s408] sm:$0xff]
      %v1091 = vld [vmem:[%s408 + $0x8] sm:$0xf]
      %v1092 = vld [vmem:[%s408 + $0xc] sm:$0xff]
      %v1093 = vld [vmem:[%s408 + $0x14] sm:$0xf]
      %v1094 = vld [vmem:[%s408 + $0x18] sm:$0xff]
      %v1095 = vld [vmem:[%s408 + $0x20] sm:$0xf]
      %v1096 = vld [vmem:[%s408 + $0x24] sm:$0xff]
      %v1097 = vld [vmem:[%s408 + $0x2c] sm:$0xf]
      %v1098 = vld [vmem:[%s408 + $0x30] sm:$0xff]
      %v1099 = vld [vmem:[%s408 + $0x38] sm:$0xf]
      %v1100 = vld [vmem:[%s408 + $0x3c] sm:$0xff]
      %v1101 = vld [vmem:[%s408 + $0x44] sm:$0xf]
      %v1102 = vld [vmem:[%s408 + $0x48] sm:$0xff]
      %v1103 = vld [vmem:[%s408 + $0x50] sm:$0xf]
      %v1104 = vld [vmem:[%s408 + $0x54] sm:$0xff]
      %v1105 = vld [vmem:[%s408 + $0x5c] sm:$0xf]
      %v1106 = vld [vmem:[%s408 + $0x60] sm:$0xff]
      %v1107 = vld [vmem:[%s408 + $0x68] sm:$0xf]
      %v1108 = vld [vmem:[%s408 + $0x6c] sm:$0xff]
      %v1109 = vld [vmem:[%s408 + $0x74] sm:$0xf]
      %v1110 = vld [vmem:[%s408 + $0x78] sm:$0xff]
      %v1111 = vld [vmem:[%s408 + $0x80] sm:$0xf]
      %v1112 = vld [vmem:[%s408 + $0x84] sm:$0xff]
      %v1113 = vld [vmem:[%s408 + $0x8c] sm:$0xf]
      %v1114 = vld [vmem:[%s408 + $0x90] sm:$0xff]
      %v1115 = vld [vmem:[%s408 + $0x98] sm:$0xf]
      %v1116 = vld [vmem:[%s408 + $0x9c] sm:$0xff]
      %v1117 = vld [vmem:[%s408 + $0xa4] sm:$0xf]
      %v1118 = vld [vmem:[%s408 + $0xa8] sm:$0xff]
      %v1119 = vld [vmem:[%s408 + $0xb0] sm:$0xf]
      %v1120 = vld [vmem:[%s408 + $0xb4] sm:$0xff]
      %v1121 = vld [vmem:[%s408 + $0xbc] sm:$0xf]
      %v1154 = vunpack.c.l.b16 %v1090
      %v1155 = vunpack.c.h.b16 %v1090
      %v1156 = vunpack.c.l.b16 %v1091
      %v1157 = vunpack.c.l.b16 %v1092
      %v1158 = vunpack.c.h.b16 %v1092
      %v1159 = vunpack.c.l.b16 %v1093
      %v1160 = vunpack.c.l.b16 %v1094
      %v1161 = vunpack.c.h.b16 %v1094
      %v1162 = vunpack.c.l.b16 %v1095
      %v1163 = vunpack.c.l.b16 %v1096
      %v1164 = vunpack.c.h.b16 %v1096
      %v1165 = vunpack.c.l.b16 %v1097
      %v1166 = vunpack.c.l.b16 %v1098
      %v1167 = vunpack.c.h.b16 %v1098
      %v1168 = vunpack.c.l.b16 %v1099
      %v1169 = vunpack.c.l.b16 %v1100
      %v1170 = vunpack.c.h.b16 %v1100
      %v1171 = vunpack.c.l.b16 %v1101
      %v1172 = vunpack.c.l.b16 %v1102
      %v1173 = vunpack.c.h.b16 %v1102
      %v1174 = vunpack.c.l.b16 %v1103
      %v1175 = vunpack.c.l.b16 %v1104
      %v1176 = vunpack.c.h.b16 %v1104
      %v1177 = vunpack.c.l.b16 %v1105
      %v1178 = vunpack.c.l.b16 %v1106
      %v1179 = vunpack.c.h.b16 %v1106
      %v1180 = vunpack.c.l.b16 %v1107
      %v1181 = vunpack.c.l.b16 %v1108
      %v1182 = vunpack.c.h.b16 %v1108
      %v1183 = vunpack.c.l.b16 %v1109
      %v1184 = vunpack.c.l.b16 %v1110
      %v1185 = vunpack.c.h.b16 %v1110
      %v1186 = vunpack.c.l.b16 %v1111
      %v1187 = vunpack.c.l.b16 %v1112
      %v1188 = vunpack.c.h.b16 %v1112
      %v1189 = vunpack.c.l.b16 %v1113
      %v1190 = vunpack.c.l.b16 %v1114
      %v1191 = vunpack.c.h.b16 %v1114
      %v1192 = vunpack.c.l.b16 %v1115
      %v1193 = vunpack.c.l.b16 %v1116
      %v1194 = vunpack.c.h.b16 %v1116
      %v1195 = vunpack.c.l.b16 %v1117
      %v1196 = vunpack.c.l.b16 %v1118
      %v1197 = vunpack.c.h.b16 %v1118
      %v1198 = vunpack.c.l.b16 %v1119
      %v1199 = vunpack.c.l.b16 %v1120
      %v1200 = vunpack.c.h.b16 %v1120
      %v1201 = vunpack.c.l.b16 %v1121
      %v1202 = vpack.c.b16 %v1157, %v1154
      %v1203 = vpack.c.b16 %v1158, %v1155
      %v1204 = vpack.c.b16 %v1159, %v1156
      %v1205 = vpack.c.b16 %v1163, %v1160
      %v1206 = vpack.c.b16 %v1164, %v1161
      %v1207 = vpack.c.b16 %v1165, %v1162
      %v1208 = vpack.c.b16 %v1169, %v1166
      %v1209 = vpack.c.b16 %v1170, %v1167
      %v1210 = vpack.c.b16 %v1171, %v1168
      %v1211 = vpack.c.b16 %v1175, %v1172
      %v1212 = vpack.c.b16 %v1176, %v1173
      %v1213 = vpack.c.b16 %v1177, %v1174
      %v1214 = vpack.c.b16 %v1181, %v1178
      %v1215 = vpack.c.b16 %v1182, %v1179
      %v1216 = vpack.c.b16 %v1183, %v1180
      %v1217 = vpack.c.b16 %v1187, %v1184
      %v1218 = vpack.c.b16 %v1188, %v1185
      %v1219 = vpack.c.b16 %v1189, %v1186
      %v1220 = vpack.c.b16 %v1193, %v1190
      %v1221 = vpack.c.b16 %v1194, %v1191
      %v1222 = vpack.c.b16 %v1195, %v1192
      %v1223 = vpack.c.b16 %v1199, %v1196
      %v1224 = vpack.c.b16 %v1200, %v1197
      %v1225 = vpack.c.b16 %v1201, %v1198
      %1250 = vmatprep.subr.bf16.mxu0 %v1203
      %1251 = vmatpush1.bf16.msra.mxu0 %v1202
      %1252 = vmatprep.subr.bf16.mxu0 %v1206
      %1253 = vmatpush1.bf16.msra.mxu0 %v1205
      %1254 = vmatprep.subr.bf16.mxu0 %v1209
      %1255 = vmatpush1.bf16.msra.mxu0 %v1208
      %1256 = vmatprep.subr.bf16.mxu0 %v1212
      %1257 = vmatpush1.bf16.msra.mxu0 %v1211
      %1258 = vmatprep.subr.bf16.mxu0 %v1215
      %1259 = vmatpush1.bf16.msra.mxu0 %v1214
      %1260 = vmatprep.subr.bf16.mxu0 %v1218
      %1261 = vmatpush1.bf16.msra.mxu0 %v1217
      %1262 = vmatprep.subr.bf16.mxu0 %v1221
      %1263 = vmatpush1.bf16.msra.mxu0 %v1220
      %1264 = vmatprep.subr.bf16.mxu0 %v1224
      %1265 = vmatpush1.bf16.msra.mxu0 %v1223
      %1266 = vmatprep.subr.bf16.mxu0 0
      %1267 = vmatpush1.bf16.msra.mxu0 0
      %1268 = vmatprep.subr.bf16.mxu0 0
      %1269 = vmatpush1.bf16.msra.mxu0 0
      %1270 = vmatprep.subr.bf16.mxu0 0
      %1271 = vmatpush1.bf16.msra.mxu0 0
      %1272 = vmatprep.subr.bf16.mxu0 0
      %1273 = vmatpush1.bf16.msra.mxu0 0
      %1274 = vmatprep.subr.bf16.mxu0 0
      %1275 = vmatpush1.bf16.msra.mxu0 0
      %1276 = vmatprep.subr.bf16.mxu0 0
      %1277 = vmatpush1.bf16.msra.mxu0 0
      %1278 = vmatprep.subr.bf16.mxu0 0
      %1279 = vmatpush1.bf16.msra.mxu0 0
      %1280 = vmatprep.subr.bf16.mxu0 0
      %1281 = vmatpush1.bf16.msra.mxu0 0
      %1282 = vmatprep.mubr.bf16.mxu0 0
      %1283 = vmatmul.mubr.bf16.gmra.mrb[0].mxu0 0
      %v1284 = vpop.f32.mrb[0].mxu0
      %v1285 = vadd.f32 0.0, %v1284
      %v1286 = vpop.f32.mrb[0].mxu0
      %v1287 = vadd.f32 0.0, %v1286
      %v1288 = vpop.f32.mrb[0].mxu0
      %v1289 = vpop.f32.mrb[0].mxu0
      %1290 = vdwg.mxu0
      %1291 = vmatprep.subr.bf16.mxu0 0
      %1292 = vmatpush1.bf16.msra.mxu0 %v1204
      %1293 = vmatprep.subr.bf16.mxu0 0
      %1294 = vmatpush1.bf16.msra.mxu0 %v1207
      %1295 = vmatprep.subr.bf16.mxu0 0
      %1296 = vmatpush1.bf16.msra.mxu0 %v1210
      %1297 = vmatprep.subr.bf16.mxu0 0
      %1298 = vmatpush1.bf16.msra.mxu0 %v1213
      %1299 = vmatprep.subr.bf16.mxu0 0
      %1300 = vmatpush1.bf16.msra.mxu0 %v1216
      %1301 = vmatprep.subr.bf16.mxu0 0
      %1302 = vmatpush1.bf16.msra.mxu0 %v1219
      %1303 = vmatprep.subr.bf16.mxu0 0
      %1304 = vmatpush1.bf16.msra.mxu0 %v1222
      %1305 = vmatprep.subr.bf16.mxu0 0
      %1306 = vmatpush1.bf16.msra.mxu0 %v1225
      %1307 = vmatprep.subr.bf16.mxu0 0
      %1308 = vmatpush1.bf16.msra.mxu0 0
      %1309 = vmatprep.subr.bf16.mxu0 0
      %1310 = vmatpush1.bf16.msra.mxu0 0
      %1311 = vmatprep.subr.bf16.mxu0 0
      %1312 = vmatpush1.bf16.msra.mxu0 0
      %1313 = vmatprep.subr.bf16.mxu0 0
      %1314 = vmatpush1.bf16.msra.mxu0 0
      %1315 = vmatprep.subr.bf16.mxu0 0
      %1316 = vmatpush1.bf16.msra.mxu0 0
      %1317 = vmatprep.subr.bf16.mxu0 0
      %1318 = vmatpush1.bf16.msra.mxu0 0
      %1319 = vmatprep.subr.bf16.mxu0 0
      %1320 = vmatpush1.bf16.msra.mxu0 0
      %1321 = vmatprep.subr.bf16.mxu0 0
      %1322 = vmatpush1.bf16.msra.mxu0 0
      %1323 = vmatprep.mubr.bf16.mxu0 0
      %1324 = vmatmul.mubr.bf16.gmra.mrb[0].mxu0 0
      %v1325 = vpop.f32.mrb[0].mxu0
      %v1326 = vadd.f32 0.0, %v1325
      %v1327 = vpop.f32.mrb[0].mxu0
      %v1328 = vpop.f32.mrb[0].mxu0
      %v1329 = vpop.f32.mrb[0].mxu0
      %1330 = vdwg.mxu0
      %s1331 = smul.u32 0, 3
      %s1332 = smul.addr %s1331, 8
      %s1333 = scalar_lea.vmem [#allocation2], %s1332
      %v1334 = vld [vmem:[%s1333] sm:$0xff]
      %v1335 = vld [vmem:[%s1333 + $0x8] sm:$0xff]
      %v1336 = vld [vmem:[%s1333 + $0x10] sm:$0xff]
      %v1337 = vadd.f32 %v1334, %v1285
      %v1338 = vxor.u32 %v1337, 2147483648
      %v1339 = vmul.f32 %v1338, 1.442695
      %v1340 = vpow.pop %v1339
      %v1341 = vadd.f32 %v1340, 1.0
      %v1342 = vrcp.pop %v1341
      %v1343 = vmul.f32 1.0, %v1342
      %v1344 = vadd.f32 %v1335, %v1287
      %v1345 = vxor.u32 %v1344, 2147483648
      %v1346 = vmul.f32 %v1345, 1.442695
      %v1347 = vpow.pop %v1346
      %v1348 = vadd.f32 %v1347, 1.0
      %v1349 = vrcp.pop %v1348
      %v1350 = vmul.f32 1.0, %v1349
      %v1351 = vadd.f32 %v1326, %v1088
      %v1352 = vmul.f32 %v1343, %v1351
      %v1353 = vadd.f32 %v1336, %v1352
      %v1354 = vtanh.pop %v1353
      %v1355 = vsub.f32 0.0, %v1354
      %v1356 = vmul.f32 %v1350, %v1355
      %v1357 = vadd.f32 %v1354, %v1356
      %1358 = vst [vmem:[#allocation3] sm:$0xff] %v1357
      %v1359 = vpack.c.bf16 %v1357, %v1357
      %v1360 = vld [vmem:[%s408] sm:$0xff]
      %v1361 = vld [vmem:[%s408 + $0x8] sm:$0xf]
      %v1362 = vld [vmem:[%s408 + $0xc] sm:$0xff]
      %v1363 = vld [vmem:[%s408 + $0x14] sm:$0xf]
      %v1364 = vld [vmem:[%s408 + $0x18] sm:$0xff]
      %v1365 = vld [vmem:[%s408 + $0x20] sm:$0xf]
      %v1366 = vld [vmem:[%s408 + $0x24] sm:$0xff]
      %v1367 = vld [vmem:[%s408 + $0x2c] sm:$0xf]
      %v1368 = vld [vmem:[%s408 + $0x30] sm:$0xff]
      %v1369 = vld [vmem:[%s408 + $0x38] sm:$0xf]
      %v1370 = vld [vmem:[%s408 + $0x3c] sm:$0xff]
      %v1371 = vld [vmem:[%s408 + $0x44] sm:$0xf]
      %v1372 = vld [vmem:[%s408 + $0x48] sm:$0xff]
      %v1373 = vld [vmem:[%s408 + $0x50] sm:$0xf]
      %v1374 = vld [vmem:[%s408 + $0x54] sm:$0xff]
      %v1375 = vld [vmem:[%s408 + $0x5c] sm:$0xf]
      %v1376 = vld [vmem:[%s408 + $0x60] sm:$0xff]
      %v1377 = vld [vmem:[%s408 + $0x68] sm:$0xf]
      %v1378 = vld [vmem:[%s408 + $0x6c] sm:$0xff]
      %v1379 = vld [vmem:[%s408 + $0x74] sm:$0xf]
      %v1380 = vld [vmem:[%s408 + $0x78] sm:$0xff]
      %v1381 = vld [vmem:[%s408 + $0x80] sm:$0xf]
      %v1382 = vld [vmem:[%s408 + $0x84] sm:$0xff]
      %v1383 = vld [vmem:[%s408 + $0x8c] sm:$0xf]
      %v1384 = vld [vmem:[%s408 + $0x90] sm:$0xff]
      %v1385 = vld [vmem:[%s408 + $0x98] sm:$0xf]
      %v1386 = vld [vmem:[%s408 + $0x9c] sm:$0xff]
      %v1387 = vld [vmem:[%s408 + $0xa4] sm:$0xf]
      %v1388 = vld [vmem:[%s408 + $0xa8] sm:$0xff]
      %v1389 = vld [vmem:[%s408 + $0xb0] sm:$0xf]
      %v1390 = vld [vmem:[%s408 + $0xb4] sm:$0xff]
      %v1391 = vld [vmem:[%s408 + $0xbc] sm:$0xf]
      %v1424 = vunpack.c.l.b16 %v1360
      %v1425 = vunpack.c.h.b16 %v1360
      %v1426 = vunpack.c.l.b16 %v1361
      %v1427 = vunpack.c.l.b16 %v1362
      %v1428 = vunpack.c.h.b16 %v1362
      %v1429 = vunpack.c.l.b16 %v1363
      %v1430 = vunpack.c.l.b16 %v1364
      %v1431 = vunpack.c.h.b16 %v1364
      %v1432 = vunpack.c.l.b16 %v1365
      %v1433 = vunpack.c.l.b16 %v1366
      %v1434 = vunpack.c.h.b16 %v1366
      %v1435 = vunpack.c.l.b16 %v1367
      %v1436 = vunpack.c.l.b16 %v1368
      %v1437 = vunpack.c.h.b16 %v1368
      %v1438 = vunpack.c.l.b16 %v1369
      %v1439 = vunpack.c.l.b16 %v1370
      %v1440 = vunpack.c.h.b16 %v1370
      %v1441 = vunpack.c.l.b16 %v1371
      %v1442 = vunpack.c.l.b16 %v1372
      %v1443 = vunpack.c.h.b16 %v1372
      %v1444 = vunpack.c.l.b16 %v1373
      %v1445 = vunpack.c.l.b16 %v1374
      %v1446 = vunpack.c.h.b16 %v1374
      %v1447 = vunpack.c.l.b16 %v1375
      %v1448 = vunpack.c.l.b16 %v1376
      %v1449 = vunpack.c.h.b16 %v1376
      %v1450 = vunpack.c.l.b16 %v1377
      %v1451 = vunpack.c.l.b16 %v1378
      %v1452 = vunpack.c.h.b16 %v1378
      %v1453 = vunpack.c.l.b16 %v1379
      %v1454 = vunpack.c.l.b16 %v1380
      %v1455 = vunpack.c.h.b16 %v1380
      %v1456 = vunpack.c.l.b16 %v1381
      %v1457 = vunpack.c.l.b16 %v1382
      %v1458 = vunpack.c.h.b16 %v1382
      %v1459 = vunpack.c.l.b16 %v1383
      %v1460 = vunpack.c.l.b16 %v1384
      %v1461 = vunpack.c.h.b16 %v1384
      %v1462 = vunpack.c.l.b16 %v1385
      %v1463 = vunpack.c.l.b16 %v1386
      %v1464 = vunpack.c.h.b16 %v1386
      %v1465 = vunpack.c.l.b16 %v1387
      %v1466 = vunpack.c.l.b16 %v1388
      %v1467 = vunpack.c.h.b16 %v1388
      %v1468 = vunpack.c.l.b16 %v1389
      %v1469 = vunpack.c.l.b16 %v1390
      %v1470 = vunpack.c.h.b16 %v1390
      %v1471 = vunpack.c.l.b16 %v1391
      %v1472 = vpack.c.b16 %v1427, %v1424
      %v1473 = vpack.c.b16 %v1428, %v1425
      %v1474 = vpack.c.b16 %v1429, %v1426
      %v1475 = vpack.c.b16 %v1433, %v1430
      %v1476 = vpack.c.b16 %v1434, %v1431
      %v1477 = vpack.c.b16 %v1435, %v1432
      %v1478 = vpack.c.b16 %v1439, %v1436
      %v1479 = vpack.c.b16 %v1440, %v1437
      %v1480 = vpack.c.b16 %v1441, %v1438
      %v1481 = vpack.c.b16 %v1445, %v1442
      %v1482 = vpack.c.b16 %v1446, %v1443
      %v1483 = vpack.c.b16 %v1447, %v1444
      %v1484 = vpack.c.b16 %v1451, %v1448
      %v1485 = vpack.c.b16 %v1452, %v1449
      %v1486 = vpack.c.b16 %v1453, %v1450
      %v1487 = vpack.c.b16 %v1457, %v1454
      %v1488 = vpack.c.b16 %v1458, %v1455
      %v1489 = vpack.c.b16 %v1459, %v1456
      %v1490 = vpack.c.b16 %v1463, %v1460
      %v1491 = vpack.c.b16 %v1464, %v1461
      %v1492 = vpack.c.b16 %v1465, %v1462
      %v1493 = vpack.c.b16 %v1469, %v1466
      %v1494 = vpack.c.b16 %v1470, %v1467
      %v1495 = vpack.c.b16 %v1471, %v1468
      %1520 = vmatprep.subr.bf16.mxu0 %v1473
      %1521 = vmatpush1.bf16.msra.mxu0 %v1472
      %1522 = vmatprep.subr.bf16.mxu0 %v1476
      %1523 = vmatpush1.bf16.msra.mxu0 %v1475
      %1524 = vmatprep.subr.bf16.mxu0 %v1479
      %1525 = vmatpush1.bf16.msra.mxu0 %v1478
      %1526 = vmatprep.subr.bf16.mxu0 %v1482
      %1527 = vmatpush1.bf16.msra.mxu0 %v1481
      %1528 = vmatprep.subr.bf16.mxu0 %v1485
      %1529 = vmatpush1.bf16.msra.mxu0 %v1484
      %1530 = vmatprep.subr.bf16.mxu0 %v1488
      %1531 = vmatpush1.bf16.msra.mxu0 %v1487
      %1532 = vmatprep.subr.bf16.mxu0 %v1491
      %1533 = vmatpush1.bf16.msra.mxu0 %v1490
      %1534 = vmatprep.subr.bf16.mxu0 %v1494
      %1535 = vmatpush1.bf16.msra.mxu0 %v1493
      %1536 = vmatprep.subr.bf16.mxu0 0
      %1537 = vmatpush1.bf16.msra.mxu0 0
      %1538 = vmatprep.subr.bf16.mxu0 0
      %1539 = vmatpush1.bf16.msra.mxu0 0
      %1540 = vmatprep.subr.bf16.mxu0 0
      %1541 = vmatpush1.bf16.msra.mxu0 0
      %1542 = vmatprep.subr.bf16.mxu0 0
      %1543 = vmatpush1.bf16.msra.mxu0 0
      %1544 = vmatprep.subr.bf16.mxu0 0
      %1545 = vmatpush1.bf16.msra.mxu0 0
      %1546 = vmatprep.subr.bf16.mxu0 0
      %1547 = vmatpush1.bf16.msra.mxu0 0
      %1548 = vmatprep.subr.bf16.mxu0 0
      %1549 = vmatpush1.bf16.msra.mxu0 0
      %1550 = vmatprep.subr.bf16.mxu0 0
      %1551 = vmatpush1.bf16.msra.mxu0 0
      %1552 = vmatprep.mubr.bf16.mxu0 0
      %1553 = vmatmul.mubr.bf16.gmra.mrb[0].mxu0 %v1359
      %v1554 = vpop.f32.mrb[0].mxu0
      %v1555 = vadd.f32 0.0, %v1554
      %v1556 = vpop.f32.mrb[0].mxu0
      %v1557 = vadd.f32 0.0, %v1556
      %v1558 = vpop.f32.mrb[0].mxu0
      %v1559 = vpop.f32.mrb[0].mxu0
      %1560 = vdwg.mxu0
      %1561 = vmatprep.subr.bf16.mxu0 0
      %1562 = vmatpush1.bf16.msra.mxu0 %v1474
      %1563 = vmatprep.subr.bf16.mxu0 0
      %1564 = vmatpush1.bf16.msra.mxu0 %v1477
      %1565 = vmatprep.subr.bf16.mxu0 0
      %1566 = vmatpush1.bf16.msra.mxu0 %v1480
      %1567 = vmatprep.subr.bf16.mxu0 0
      %1568 = vmatpush1.bf16.msra.mxu0 %v1483
      %1569 = vmatprep.subr.bf16.mxu0 0
      %1570 = vmatpush1.bf16.msra.mxu0 %v1486
      %1571 = vmatprep.subr.bf16.mxu0 0
      %1572 = vmatpush1.bf16.msra.mxu0 %v1489
      %1573 = vmatprep.subr.bf16.mxu0 0
      %1574 = vmatpush1.bf16.msra.mxu0 %v1492
      %1575 = vmatprep.subr.bf16.mxu0 0
      %1576 = vmatpush1.bf16.msra.mxu0 %v1495
      %1577 = vmatprep.subr.bf16.mxu0 0
      %1578 = vmatpush1.bf16.msra.mxu0 0
      %1579 = vmatprep.subr.bf16.mxu0 0
      %1580 = vmatpush1.bf16.msra.mxu0 0
      %1581 = vmatprep.subr.bf16.mxu0 0
      %1582 = vmatpush1.bf16.msra.mxu0 0
      %1583 = vmatprep.subr.bf16.mxu0 0
      %1584 = vmatpush1.bf16.msra.mxu0 0
      %1585 = vmatprep.subr.bf16.mxu0 0
      %1586 = vmatpush1.bf16.msra.mxu0 0
      %1587 = vmatprep.subr.bf16.mxu0 0
      %1588 = vmatpush1.bf16.msra.mxu0 0
      %1589 = vmatprep.subr.bf16.mxu0 0
      %1590 = vmatpush1.bf16.msra.mxu0 0
      %1591 = vmatprep.subr.bf16.mxu0 0
      %1592 = vmatpush1.bf16.msra.mxu0 0
      %1593 = vmatprep.mubr.bf16.mxu0 0
      %1594 = vmatmul.mubr.bf16.gmra.mrb[0].mxu0 %v1359
      %v1595 = vpop.f32.mrb[0].mxu0
      %v1596 = vadd.f32 0.0, %v1595
      %v1597 = vpop.f32.mrb[0].mxu0
      %v1598 = vpop.f32.mrb[0].mxu0
      %v1599 = vpop.f32.mrb[0].mxu0
      %1600 = vdwg.mxu0
      %s1601 = smul.u32 1, 3
      %s1602 = smul.addr %s1601, 8
      %s1603 = scalar_lea.vmem [#allocation2], %s1602
      %v1604 = vld [vmem:[%s1603] sm:$0xff]
      %v1605 = vld [vmem:[%s1603 + $0x8] sm:$0xff]
      %v1606 = vld [vmem:[%s1603 + $0x10] sm:$0xff]
      %v1607 = vadd.f32 %v1604, %v1555
      %v1608 = vxor.u32 %v1607, 2147483648
      %v1609 = vmul.f32 %v1608, 1.442695
      %v1610 = vpow.pop %v1609
      %v1611 = vadd.f32 %v1610, 1.0
      %v1612 = vrcp.pop %v1611
      %v1613 = vmul.f32 1.0, %v1612
      %v1614 = vadd.f32 %v1605, %v1557
      %v1615 = vxor.u32 %v1614, 2147483648
      %v1616 = vmul.f32 %v1615, 1.442695
      %v1617 = vpow.pop %v1616
      %v1618 = vadd.f32 %v1617, 1.0
      %v1619 = vrcp.pop %v1618
      %v1620 = vmul.f32 1.0, %v1619
      %v1621 = vadd.f32 %v1596, %v1088
      %v1622 = vmul.f32 %v1613, %v1621
      %v1623 = vadd.f32 %v1606, %v1622
      %v1624 = vtanh.pop %v1623
      %v1625 = vsub.f32 %v1357, %v1624
      %v1626 = vmul.f32 %v1620, %v1625
      %v1627 = vadd.f32 %v1624, %v1626
      %s1628 = scalar_lea.vmem [#allocation3], 8
      %1629 = vst [vmem:[%s1628] sm:$0xff] %v1627
      %v1630 = vpack.c.bf16 %v1627, %v1627
      %v1631 = vld [vmem:[%s408] sm:$0xff]
      %v1632 = vld [vmem:[%s408 + $0x8] sm:$0xf]
      %v1633 = vld [vmem:[%s408 + $0xc] sm:$0xff]
      %v1634 = vld [vmem:[%s408 + $0x14] sm:$0xf]
      %v1635 = vld [vmem:[%s408 + $0x18] sm:$0xff]
      %v1636 = vld [vmem:[%s408 + $0x20] sm:$0xf]
      %v1637 = vld [vmem:[%s408 + $0x24] sm:$0xff]
      %v1638 = vld [vmem:[%s408 + $0x2c] sm:$0xf]
      %v1639 = vld [vmem:[%s408 + $0x30] sm:$0xff]
      %v1640 = vld [vmem:[%s408 + $0x38] sm:$0xf]
      %v1641 = vld [vmem:[%s408 + $0x3c] sm:$0xff]
      %v1642 = vld [vmem:[%s408 + $0x44] sm:$0xf]
      %v1643 = vld [vmem:[%s408 + $0x48] sm:$0xff]
      %v1644 = vld [vmem:[%s408 + $0x50] sm:$0xf]
      %v1645 = vld [vmem:[%s408 + $0x54] sm:$0xff]
      %v1646 = vld [vmem:[%s408 + $0x5c] sm:$0xf]
      %v1647 = vld [vmem:[%s408 + $0x60] sm:$0xff]
      %v1648 = vld [vmem:[%s408 + $0x68] sm:$0xf]
      %v1649 = vld [vmem:[%s408 + $0x6c] sm:$0xff]
      %v1650 = vld [vmem:[%s408 + $0x74] sm:$0xf]
      %v1651 = vld [vmem:[%s408 + $0x78] sm:$0xff]
      %v1652 = vld [vmem:[%s408 + $0x80] sm:$0xf]
      %v1653 = vld [vmem:[%s408 + $0x84] sm:$0xff]
      %v1654 = vld [vmem:[%s408 + $0x8c] sm:$0xf]
      %v1655 = vld [vmem:[%s408 + $0x90] sm:$0xff]
      %v1656 = vld [vmem:[%s408 + $0x98] sm:$0xf]
      %v1657 = vld [vmem:[%s408 + $0x9c] sm:$0xff]
      %v1658 = vld [vmem:[%s408 + $0xa4] sm:$0xf]
      %v1659 = vld [vmem:[%s408 + $0xa8] sm:$0xff]
      %v1660 = vld [vmem:[%s408 + $0xb0] sm:$0xf]
      %v1661 = vld [vmem:[%s408 + $0xb4] sm:$0xff]
      %v1662 = vld [vmem:[%s408 + $0xbc] sm:$0xf]
      %v1695 = vunpack.c.l.b16 %v1631
      %v1696 = vunpack.c.h.b16 %v1631
      %v1697 = vunpack.c.l.b16 %v1632
      %v1698 = vunpack.c.l.b16 %v1633
      %v1699 = vunpack.c.h.b16 %v1633
      %v1700 = vunpack.c.l.b16 %v1634
      %v1701 = vunpack.c.l.b16 %v1635
      %v1702 = vunpack.c.h.b16 %v1635
      %v1703 = vunpack.c.l.b16 %v1636
      %v1704 = vunpack.c.l.b16 %v1637
      %v1705 = vunpack.c.h.b16 %v1637
      %v1706 = vunpack.c.l.b16 %v1638
      %v1707 = vunpack.c.l.b16 %v1639
      %v1708 = vunpack.c.h.b16 %v1639
      %v1709 = vunpack.c.l.b16 %v1640
      %v1710 = vunpack.c.l.b16 %v1641
      %v1711 = vunpack.c.h.b16 %v1641
      %v1712 = vunpack.c.l.b16 %v1642
      %v1713 = vunpack.c.l.b16 %v1643
      %v1714 = vunpack.c.h.b16 %v1643
      %v1715 = vunpack.c.l.b16 %v1644
      %v1716 = vunpack.c.l.b16 %v1645
      %v1717 = vunpack.c.h.b16 %v1645
      %v1718 = vunpack.c.l.b16 %v1646
      %v1719 = vunpack.c.l.b16 %v1647
      %v1720 = vunpack.c.h.b16 %v1647
      %v1721 = vunpack.c.l.b16 %v1648
      %v1722 = vunpack.c.l.b16 %v1649
      %v1723 = vunpack.c.h.b16 %v1649
      %v1724 = vunpack.c.l.b16 %v1650
      %v1725 = vunpack.c.l.b16 %v1651
      %v1726 = vunpack.c.h.b16 %v1651
      %v1727 = vunpack.c.l.b16 %v1652
      %v1728 = vunpack.c.l.b16 %v1653
      %v1729 = vunpack.c.h.b16 %v1653
      %v1730 = vunpack.c.l.b16 %v1654
      %v1731 = vunpack.c.l.b16 %v1655
      %v1732 = vunpack.c.h.b16 %v1655
      %v1733 = vunpack.c.l.b16 %v1656
      %v1734 = vunpack.c.l.b16 %v1657
      %v1735 = vunpack.c.h.b16 %v1657
      %v1736 = vunpack.c.l.b16 %v1658
      %v1737 = vunpack.c.l.b16 %v1659
      %v1738 = vunpack.c.h.b16 %v1659
      %v1739 = vunpack.c.l.b16 %v1660
      %v1740 = vunpack.c.l.b16 %v1661
      %v1741 = vunpack.c.h.b16 %v1661
      %v1742 = vunpack.c.l.b16 %v1662
      %v1743 = vpack.c.b16 %v1698, %v1695
      %v1744 = vpack.c.b16 %v1699, %v1696
      %v1745 = vpack.c.b16 %v1700, %v1697
      %v1746 = vpack.c.b16 %v1704, %v1701
      %v1747 = vpack.c.b16 %v1705, %v1702
      %v1748 = vpack.c.b16 %v1706, %v1703
      %v1749 = vpack.c.b16 %v1710, %v1707
      %v1750 = vpack.c.b16 %v1711, %v1708
      %v1751 = vpack.c.b16 %v1712, %v1709
      %v1752 = vpack.c.b16 %v1716, %v1713
      %v1753 = vpack.c.b16 %v1717, %v1714
      %v1754 = vpack.c.b16 %v1718, %v1715
      %v1755 = vpack.c.b16 %v1722, %v1719
      %v1756 = vpack.c.b16 %v1723, %v1720
      %v1757 = vpack.c.b16 %v1724, %v1721
      %v1758 = vpack.c.b16 %v1728, %v1725
      %v1759 = vpack.c.b16 %v1729, %v1726
      %v1760 = vpack.c.b16 %v1730, %v1727
      %v1761 = vpack.c.b16 %v1734, %v1731
      %v1762 = vpack.c.b16 %v1735, %v1732
      %v1763 = vpack.c.b16 %v1736, %v1733
      %v1764 = vpack.c.b16 %v1740, %v1737
      %v1765 = vpack.c.b16 %v1741, %v1738
      %v1766 = vpack.c.b16 %v1742, %v1739
      %1791 = vmatprep.subr.bf16.mxu0 %v1744
      %1792 = vmatpush1.bf16.msra.mxu0 %v1743
      %1793 = vmatprep.subr.bf16.mxu0 %v1747
      %1794 = vmatpush1.bf16.msra.mxu0 %v1746
      %1795 = vmatprep.subr.bf16.mxu0 %v1750
      %1796 = vmatpush1.bf16.msra.mxu0 %v1749
      %1797 = vmatprep.subr.bf16.mxu0 %v1753
      %1798 = vmatpush1.bf16.msra.mxu0 %v1752
      %1799 = vmatprep.subr.bf16.mxu0 %v1756
      %1800 = vmatpush1.bf16.msra.mxu0 %v1755
      %1801 = vmatprep.subr.bf16.mxu0 %v1759
      %1802 = vmatpush1.bf16.msra.mxu0 %v1758
      %1803 = vmatprep.subr.bf16.mxu0 %v1762
      %1804 = vmatpush1.bf16.msra.mxu0 %v1761
      %1805 = vmatprep.subr.bf16.mxu0 %v1765
      %1806 = vmatpush1.bf16.msra.mxu0 %v1764
      %1807 = vmatprep.subr.bf16.mxu0 0
      %1808 = vmatpush1.bf16.msra.mxu0 0
      %1809 = vmatprep.subr.bf16.mxu0 0
      %1810 = vmatpush1.bf16.msra.mxu0 0
      %1811 = vmatprep.subr.bf16.mxu0 0
      %1812 = vmatpush1.bf16.msra.mxu0 0
      %1813 = vmatprep.subr.bf16.mxu0 0
      %1814 = vmatpush1.bf16.msra.mxu0 0
      %1815 = vmatprep.subr.bf16.mxu0 0
      %1816 = vmatpush1.bf16.msra.mxu0 0
      %1817 = vmatprep.subr.bf16.mxu0 0
      %1818 = vmatpush1.bf16.msra.mxu0 0
      %1819 = vmatprep.subr.bf16.mxu0 0
      %1820 = vmatpush1.bf16.msra.mxu0 0
      %1821 = vmatprep.subr.bf16.mxu0 0
      %1822 = vmatpush1.bf16.msra.mxu0 0
      %1823 = vmatprep.mubr.bf16.mxu0 0
      %1824 = vmatmul.mubr.bf16.gmra.mrb[0].mxu0 %v1630
      %v1825 = vpop.f32.mrb[0].mxu0
      %v1826 = vadd.f32 0.0, %v1825
      %v1827 = vpop.f32.mrb[0].mxu0
      %v1828 = vadd.f32 0.0, %v1827
      %v1829 = vpop.f32.mrb[0].mxu0
      %v1830 = vpop.f32.mrb[0].mxu0
      %1831 = vdwg.mxu0
      %1832 = vmatprep.subr.bf16.mxu0 0
      %1833 = vmatpush1.bf16.msra.mxu0 %v1745
      %1834 = vmatprep.subr.bf16.mxu0 0
      %1835 = vmatpush1.bf16.msra.mxu0 %v1748
      %1836 = vmatprep.subr.bf16.mxu0 0
      %1837 = vmatpush1.bf16.msra.mxu0 %v1751
      %1838 = vmatprep.subr.bf16.mxu0 0
      %1839 = vmatpush1.bf16.msra.mxu0 %v1754
      %1840 = vmatprep.subr.bf16.mxu0 0
      %1841 = vmatpush1.bf16.msra.mxu0 %v1757
      %1842 = vmatprep.subr.bf16.mxu0 0
      %1843 = vmatpush1.bf16.msra.mxu0 %v1760
      %1844 = vmatprep.subr.bf16.mxu0 0
      %1845 = vmatpush1.bf16.msra.mxu0 %v1763
      %1846 = vmatprep.subr.bf16.mxu0 0
      %1847 = vmatpush1.bf16.msra.mxu0 %v1766
      %1848 = vmatprep.subr.bf16.mxu0 0
      %1849 = vmatpush1.bf16.msra.mxu0 0
      %1850 = vmatprep.subr.bf16.mxu0 0
      %1851 = vmatpush1.bf16.msra.mxu0 0
      %1852 = vmatprep.subr.bf16.mxu0 0
      %1853 = vmatpush1.bf16.msra.mxu0 0
      %1854 = vmatprep.subr.bf16.mxu0 0
      %1855 = vmatpush1.bf16.msra.mxu0 0
      %1856 = vmatprep.subr.bf16.mxu0 0
      %1857 = vmatpush1.bf16.msra.mxu0 0
      %1858 = vmatprep.subr.bf16.mxu0 0
      %1859 = vmatpush1.bf16.msra.mxu0 0
      %1860 = vmatprep.subr.bf16.mxu0 0
      %1861 = vmatpush1.bf16.msra.mxu0 0
      %1862 = vmatprep.subr.bf16.mxu0 0
      %1863 = vmatpush1.bf16.msra.mxu0 0
      %1864 = vmatprep.mubr.bf16.mxu0 0
      %1865 = vmatmul.mubr.bf16.gmra.mrb[0].mxu0 %v1630
      %v1866 = vpop.f32.mrb[0].mxu0
      %v1867 = vadd.f32 0.0, %v1866
      %v1868 = vpop.f32.mrb[0].mxu0
      %v1869 = vpop.f32.mrb[0].mxu0
      %v1870 = vpop.f32.mrb[0].mxu0
      %1871 = vdwg.mxu0
      %s1872 = smul.u32 2, 3
      %s1873 = smul.addr %s1872, 8
      %s1874 = scalar_lea.vmem [#allocation2], %s1873
      %v1875 = vld [vmem:[%s1874] sm:$0xff]
      %v1876 = vld [vmem:[%s1874 + $0x8] sm:$0xff]
      %v1877 = vld [vmem:[%s1874 + $0x10] sm:$0xff]
      %v1878 = vadd.f32 %v1875, %v1826
      %v1879 = vxor.u32 %v1878, 2147483648
      %v1880 = vmul.f32 %v1879, 1.442695
      %v1881 = vpow.pop %v1880
      %v1882 = vadd.f32 %v1881, 1.0
      %v1883 = vrcp.pop %v1882
      %v1884 = vmul.f32 1.0, %v1883
      %v1885 = vadd.f32 %v1876, %v1828
      %v1886 = vxor.u32 %v1885, 2147483648
      %v1887 = vmul.f32 %v1886, 1.442695
      %v1888 = vpow.pop %v1887
      %v1889 = vadd.f32 %v1888, 1.0
      %v1890 = vrcp.pop %v1889
      %v1891 = vmul.f32 1.0, %v1890
      %v1892 = vadd.f32 %v1867, %v1088
      %v1893 = vmul.f32 %v1884, %v1892
      %v1894 = vadd.f32 %v1877, %v1893
      %v1895 = vtanh.pop %v1894
      %v1896 = vsub.f32 %v1627, %v1895
      %v1897 = vmul.f32 %v1891, %v1896
      %v1898 = vadd.f32 %v1895, %v1897
      %s1899 = scalar_lea.vmem [#allocation3], 16
      %1900 = vst [vmem:[%s1899] sm:$0xff] %v1898
      %v1901 = vpack.c.bf16 %v1898, %v1898
      %v1902 = vld [vmem:[%s408] sm:$0xff]
      %v1903 = vld [vmem:[%s408 + $0x8] sm:$0xf]
      %v1904 = vld [vmem:[%s408 + $0xc] sm:$0xff]
      %v1905 = vld [vmem:[%s408 + $0x14] sm:$0xf]
      %v1906 = vld [vmem:[%s408 + $0x18] sm:$0xff]
      %v1907 = vld [vmem:[%s408 + $0x20] sm:$0xf]
      %v1908 = vld [vmem:[%s408 + $0x24] sm:$0xff]
      %v1909 = vld [vmem:[%s408 + $0x2c] sm:$0xf]
      %v1910 = vld [vmem:[%s408 + $0x30] sm:$0xff]
      %v1911 = vld [vmem:[%s408 + $0x38] sm:$0xf]
      %v1912 = vld [vmem:[%s408 + $0x3c] sm:$0xff]
      %v1913 = vld [vmem:[%s408 + $0x44] sm:$0xf]
      %v1914 = vld [vmem:[%s408 + $0x48] sm:$0xff]
      %v1915 = vld [vmem:[%s408 + $0x50] sm:$0xf]
      %v1916 = vld [vmem:[%s408 + $0x54] sm:$0xff]
      %v1917 = vld [vmem:[%s408 + $0x5c] sm:$0xf]
      %v1918 = vld [vmem:[%s408 + $0x60] sm:$0xff]
      %v1919 = vld [vmem:[%s408 + $0x68] sm:$0xf]
      %v1920 = vld [vmem:[%s408 + $0x6c] sm:$0xff]
      %v1921 = vld [vmem:[%s408 + $0x74] sm:$0xf]
      %v1922 = vld [vmem:[%s408 + $0x78] sm:$0xff]
      %v1923 = vld [vmem:[%s408 + $0x80] sm:$0xf]
      %v1924 = vld [vmem:[%s408 + $0x84] sm:$0xff]
      %v1925 = vld [vmem:[%s408 + $0x8c] sm:$0xf]
      %v1926 = vld [vmem:[%s408 + $0x90] sm:$0xff]
      %v1927 = vld [vmem:[%s408 + $0x98] sm:$0xf]
      %v1928 = vld [vmem:[%s408 + $0x9c] sm:$0xff]
      %v1929 = vld [vmem:[%s408 + $0xa4] sm:$0xf]
      %v1930 = vld [vmem:[%s408 + $0xa8] sm:$0xff]
      %v1931 = vld [vmem:[%s408 + $0xb0] sm:$0xf]
      %v1932 = vld [vmem:[%s408 + $0xb4] sm:$0xff]
      %v1933 = vld [vmem:[%s408 + $0xbc] sm:$0xf]
      %v1966 = vunpack.c.l.b16 %v1902
      %v1967 = vunpack.c.h.b16 %v1902
      %v1968 = vunpack.c.l.b16 %v1903
      %v1969 = vunpack.c.l.b16 %v1904
      %v1970 = vunpack.c.h.b16 %v1904
      %v1971 = vunpack.c.l.b16 %v1905
      %v1972 = vunpack.c.l.b16 %v1906
      %v1973 = vunpack.c.h.b16 %v1906
      %v1974 = vunpack.c.l.b16 %v1907
      %v1975 = vunpack.c.l.b16 %v1908
      %v1976 = vunpack.c.h.b16 %v1908
      %v1977 = vunpack.c.l.b16 %v1909
      %v1978 = vunpack.c.l.b16 %v1910
      %v1979 = vunpack.c.h.b16 %v1910
      %v1980 = vunpack.c.l.b16 %v1911
      %v1981 = vunpack.c.l.b16 %v1912
      %v1982 = vunpack.c.h.b16 %v1912
      %v1983 = vunpack.c.l.b16 %v1913
      %v1984 = vunpack.c.l.b16 %v1914
      %v1985 = vunpack.c.h.b16 %v1914
      %v1986 = vunpack.c.l.b16 %v1915
      %v1987 = vunpack.c.l.b16 %v1916
      %v1988 = vunpack.c.h.b16 %v1916
      %v1989 = vunpack.c.l.b16 %v1917
      %v1990 = vunpack.c.l.b16 %v1918
      %v1991 = vunpack.c.h.b16 %v1918
      %v1992 = vunpack.c.l.b16 %v1919
      %v1993 = vunpack.c.l.b16 %v1920
      %v1994 = vunpack.c.h.b16 %v1920
      %v1995 = vunpack.c.l.b16 %v1921
      %v1996 = vunpack.c.l.b16 %v1922
      %v1997 = vunpack.c.h.b16 %v1922
      %v1998 = vunpack.c.l.b16 %v1923
      %v1999 = vunpack.c.l.b16 %v1924
      %v2000 = vunpack.c.h.b16 %v1924
      %v2001 = vunpack.c.l.b16 %v1925
      %v2002 = vunpack.c.l.b16 %v1926
      %v2003 = vunpack.c.h.b16 %v1926
      %v2004 = vunpack.c.l.b16 %v1927
      %v2005 = vunpack.c.l.b16 %v1928
      %v2006 = vunpack.c.h.b16 %v1928
      %v2007 = vunpack.c.l.b16 %v1929
      %v2008 = vunpack.c.l.b16 %v1930
      %v2009 = vunpack.c.h.b16 %v1930
      %v2010 = vunpack.c.l.b16 %v1931
      %v2011 = vunpack.c.l.b16 %v1932
      %v2012 = vunpack.c.h.b16 %v1932
      %v2013 = vunpack.c.l.b16 %v1933
      %v2014 = vpack.c.b16 %v1969, %v1966
      %v2015 = vpack.c.b16 %v1970, %v1967
      %v2016 = vpack.c.b16 %v1971, %v1968
      %v2017 = vpack.c.b16 %v1975, %v1972
      %v2018 = vpack.c.b16 %v1976, %v1973
      %v2019 = vpack.c.b16 %v1977, %v1974
      %v2020 = vpack.c.b16 %v1981, %v1978
      %v2021 = vpack.c.b16 %v1982, %v1979
      %v2022 = vpack.c.b16 %v1983, %v1980
      %v2023 = vpack.c.b16 %v1987, %v1984
      %v2024 = vpack.c.b16 %v1988, %v1985
      %v2025 = vpack.c.b16 %v1989, %v1986
      %v2026 = vpack.c.b16 %v1993, %v1990
      %v2027 = vpack.c.b16 %v1994, %v1991
      %v2028 = vpack.c.b16 %v1995, %v1992
      %v2029 = vpack.c.b16 %v1999, %v1996
      %v2030 = vpack.c.b16 %v2000, %v1997
      %v2031 = vpack.c.b16 %v2001, %v1998
      %v2032 = vpack.c.b16 %v2005, %v2002
      %v2033 = vpack.c.b16 %v2006, %v2003
      %v2034 = vpack.c.b16 %v2007, %v2004
      %v2035 = vpack.c.b16 %v2011, %v2008
      %v2036 = vpack.c.b16 %v2012, %v2009
      %v2037 = vpack.c.b16 %v2013, %v2010
      %2062 = vmatprep.subr.bf16.mxu0 %v2015
      %2063 = vmatpush1.bf16.msra.mxu0 %v2014
      %2064 = vmatprep.subr.bf16.mxu0 %v2018
      %2065 = vmatpush1.bf16.msra.mxu0 %v2017
      %2066 = vmatprep.subr.bf16.mxu0 %v2021
      %2067 = vmatpush1.bf16.msra.mxu0 %v2020
      %2068 = vmatprep.subr.bf16.mxu0 %v2024
      %2069 = vmatpush1.bf16.msra.mxu0 %v2023
      %2070 = vmatprep.subr.bf16.mxu0 %v2027
      %2071 = vmatpush1.bf16.msra.mxu0 %v2026
      %2072 = vmatprep.subr.bf16.mxu0 %v2030
      %2073 = vmatpush1.bf16.msra.mxu0 %v2029
      %2074 = vmatprep.subr.bf16.mxu0 %v2033
      %2075 = vmatpush1.bf16.msra.mxu0 %v2032
      %2076 = vmatprep.subr.bf16.mxu0 %v2036
      %2077 = vmatpush1.bf16.msra.mxu0 %v2035
      %2078 = vmatprep.subr.bf16.mxu0 0
      %2079 = vmatpush1.bf16.msra.mxu0 0
      %2080 = vmatprep.subr.bf16.mxu0 0
      %2081 = vmatpush1.bf16.msra.mxu0 0
      %2082 = vmatprep.subr.bf16.mxu0 0
      %2083 = vmatpush1.bf16.msra.mxu0 0
      %2084 = vmatprep.subr.bf16.mxu0 0
      %2085 = vmatpush1.bf16.msra.mxu0 0
      %2086 = vmatprep.subr.bf16.mxu0 0
      %2087 = vmatpush1.bf16.msra.mxu0 0
      %2088 = vmatprep.subr.bf16.mxu0 0
      %2089 = vmatpush1.bf16.msra.mxu0 0
      %2090 = vmatprep.subr.bf16.mxu0 0
      %2091 = vmatpush1.bf16.msra.mxu0 0
      %2092 = vmatprep.subr.bf16.mxu0 0
      %2093 = vmatpush1.bf16.msra.mxu0 0
      %2094 = vmatprep.mubr.bf16.mxu0 0
      %2095 = vmatmul.mubr.bf16.gmra.mrb[0].mxu0 %v1901
      %v2096 = vpop.f32.mrb[0].mxu0
      %v2097 = vadd.f32 0.0, %v2096
      %v2098 = vpop.f32.mrb[0].mxu0
      %v2099 = vadd.f32 0.0, %v2098
      %v2100 = vpop.f32.mrb[0].mxu0
      %v2101 = vpop.f32.mrb[0].mxu0
      %2102 = vdwg.mxu0
      %2103 = vmatprep.subr.bf16.mxu0 0
      %2104 = vmatpush1.bf16.msra.mxu0 %v2016
      %2105 = vmatprep.subr.bf16.mxu0 0
      %2106 = vmatpush1.bf16.msra.mxu0 %v2019
      %2107 = vmatprep.subr.bf16.mxu0 0
      %2108 = vmatpush1.bf16.msra.mxu0 %v2022
      %2109 = vmatprep.subr.bf16.mxu0 0
      %2110 = vmatpush1.bf16.msra.mxu0 %v2025
      %2111 = vmatprep.subr.bf16.mxu0 0
      %2112 = vmatpush1.bf16.msra.mxu0 %v2028
      %2113 = vmatprep.subr.bf16.mxu0 0
      %2114 = vmatpush1.bf16.msra.mxu0 %v2031
      %2115 = vmatprep.subr.bf16.mxu0 0
      %2116 = vmatpush1.bf16.msra.mxu0 %v2034
      %2117 = vmatprep.subr.bf16.mxu0 0
      %2118 = vmatpush1.bf16.msra.mxu0 %v2037
      %2119 = vmatprep.subr.bf16.mxu0 0
      %2120 = vmatpush1.bf16.msra.mxu0 0
      %2121 = vmatprep.subr.bf16.mxu0 0
      %2122 = vmatpush1.bf16.msra.mxu0 0
      %2123 = vmatprep.subr.bf16.mxu0 0
      %2124 = vmatpush1.bf16.msra.mxu0 0
      %2125 = vmatprep.subr.bf16.mxu0 0
      %2126 = vmatpush1.bf16.msra.mxu0 0
      %2127 = vmatprep.subr.bf16.mxu0 0
      %2128 = vmatpush1.bf16.msra.mxu0 0
      %2129 = vmatprep.subr.bf16.mxu0 0
      %2130 = vmatpush1.bf16.msra.mxu0 0
      %2131 = vmatprep.subr.bf16.mxu0 0
      %2132 = vmatpush1.bf16.msra.mxu0 0
      %2133 = vmatprep.subr.bf16.mxu0 0
      %2134 = vmatpush1.bf16.msra.mxu0 0
      %2135 = vmatprep.mubr.bf16.mxu0 0
      %2136 = vmatmul.mubr.bf16.gmra.mrb[0].mxu0 %v1901
      %v2137 = vpop.f32.mrb[0].mxu0
      %v2138 = vadd.f32 0.0, %v2137
      %v2139 = vpop.f32.mrb[0].mxu0
      %v2140 = vpop.f32.mrb[0].mxu0
      %v2141 = vpop.f32.mrb[0].mxu0
      %2142 = vdwg.mxu0
      %s2143 = smul.u32 3, 3
      %s2144 = smul.addr %s2143, 8
      %s2145 = scalar_lea.vmem [#allocation2], %s2144
      %v2146 = vld [vmem:[%s2145] sm:$0xff]
      %v2147 = vld [vmem:[%s2145 + $0x8] sm:$0xff]
      %v2148 = vld [vmem:[%s2145 + $0x10] sm:$0xff]
      %v2149 = vadd.f32 %v2146, %v2097
      %v2150 = vxor.u32 %v2149, 2147483648
      %v2151 = vmul.f32 %v2150, 1.442695
      %v2152 = vpow.pop %v2151
      %v2153 = vadd.f32 %v2152, 1.0
      %v2154 = vrcp.pop %v2153
      %v2155 = vmul.f32 1.0, %v2154
      %v2156 = vadd.f32 %v2147, %v2099
      %v2157 = vxor.u32 %v2156, 2147483648
      %v2158 = vmul.f32 %v2157, 1.442695
      %v2159 = vpow.pop %v2158
      %v2160 = vadd.f32 %v2159, 1.0
      %v2161 = vrcp.pop %v2160
      %v2162 = vmul.f32 1.0, %v2161
      %v2163 = vadd.f32 %v2138, %v1088
      %v2164 = vmul.f32 %v2155, %v2163
      %v2165 = vadd.f32 %v2148, %v2164
      %v2166 = vtanh.pop %v2165
      %v2167 = vsub.f32 %v1898, %v2166
      %v2168 = vmul.f32 %v2162, %v2167
      %v2169 = vadd.f32 %v2166, %v2168
      %s2170 = scalar_lea.vmem [#allocation3], 24
      %2171 = vst [vmem:[%s2170] sm:$0xff] %v2169
      %v2172 = vpack.c.bf16 %v2169, %v2169
      %v2173 = vld [vmem:[%s408] sm:$0xff]
      %v2174 = vld [vmem:[%s408 + $0x8] sm:$0xf]
      %v2175 = vld [vmem:[%s408 + $0xc] sm:$0xff]
      %v2176 = vld [vmem:[%s408 + $0x14] sm:$0xf]
      %v2177 = vld [vmem:[%s408 + $0x18] sm:$0xff]
      %v2178 = vld [vmem:[%s408 + $0x20] sm:$0xf]
      %v2179 = vld [vmem:[%s408 + $0x24] sm:$0xff]
      %v2180 = vld [vmem:[%s408 + $0x2c] sm:$0xf]
      %v2181 = vld [vmem:[%s408 + $0x30] sm:$0xff]
      %v2182 = vld [vmem:[%s408 + $0x38] sm:$0xf]
      %v2183 = vld [vmem:[%s408 + $0x3c] sm:$0xff]
      %v2184 = vld [vmem:[%s408 + $0x44] sm:$0xf]
      %v2185 = vld [vmem:[%s408 + $0x48] sm:$0xff]
      %v2186 = vld [vmem:[%s408 + $0x50] sm:$0xf]
      %v2187 = vld [vmem:[%s408 + $0x54] sm:$0xff]
      %v2188 = vld [vmem:[%s408 + $0x5c] sm:$0xf]
      %v2189 = vld [vmem:[%s408 + $0x60] sm:$0xff]
      %v2190 = vld [vmem:[%s408 + $0x68] sm:$0xf]
      %v2191 = vld [vmem:[%s408 + $0x6c] sm:$0xff]
      %v2192 = vld [vmem:[%s408 + $0x74] sm:$0xf]
      %v2193 = vld [vmem:[%s408 + $0x78] sm:$0xff]
      %v2194 = vld [vmem:[%s408 + $0x80] sm:$0xf]
      %v2195 = vld [vmem:[%s408 + $0x84] sm:$0xff]
      %v2196 = vld [vmem:[%s408 + $0x8c] sm:$0xf]
      %v2197 = vld [vmem:[%s408 + $0x90] sm:$0xff]
      %v2198 = vld [vmem:[%s408 + $0x98] sm:$0xf]
      %v2199 = vld [vmem:[%s408 + $0x9c] sm:$0xff]
      %v2200 = vld [vmem:[%s408 + $0xa4] sm:$0xf]
      %v2201 = vld [vmem:[%s408 + $0xa8] sm:$0xff]
      %v2202 = vld [vmem:[%s408 + $0xb0] sm:$0xf]
      %v2203 = vld [vmem:[%s408 + $0xb4] sm:$0xff]
      %v2204 = vld [vmem:[%s408 + $0xbc] sm:$0xf]
      %v2237 = vunpack.c.l.b16 %v2173
      %v2238 = vunpack.c.h.b16 %v2173
      %v2239 = vunpack.c.l.b16 %v2174
      %v2240 = vunpack.c.l.b16 %v2175
      %v2241 = vunpack.c.h.b16 %v2175
      %v2242 = vunpack.c.l.b16 %v2176
      %v2243 = vunpack.c.l.b16 %v2177
      %v2244 = vunpack.c.h.b16 %v2177
      %v2245 = vunpack.c.l.b16 %v2178
      %v2246 = vunpack.c.l.b16 %v2179
      %v2247 = vunpack.c.h.b16 %v2179
      %v2248 = vunpack.c.l.b16 %v2180
      %v2249 = vunpack.c.l.b16 %v2181
      %v2250 = vunpack.c.h.b16 %v2181
      %v2251 = vunpack.c.l.b16 %v2182
      %v2252 = vunpack.c.l.b16 %v2183
      %v2253 = vunpack.c.h.b16 %v2183
      %v2254 = vunpack.c.l.b16 %v2184
      %v2255 = vunpack.c.l.b16 %v2185
      %v2256 = vunpack.c.h.b16 %v2185
      %v2257 = vunpack.c.l.b16 %v2186
      %v2258 = vunpack.c.l.b16 %v2187
      %v2259 = vunpack.c.h.b16 %v2187
      %v2260 = vunpack.c.l.b16 %v2188
      %v2261 = vunpack.c.l.b16 %v2189
      %v2262 = vunpack.c.h.b16 %v2189
      %v2263 = vunpack.c.l.b16 %v2190
      %v2264 = vunpack.c.l.b16 %v2191
      %v2265 = vunpack.c.h.b16 %v2191
      %v2266 = vunpack.c.l.b16 %v2192
      %v2267 = vunpack.c.l.b16 %v2193
      %v2268 = vunpack.c.h.b16 %v2193
      %v2269 = vunpack.c.l.b16 %v2194
      %v2270 = vunpack.c.l.b16 %v2195
      %v2271 = vunpack.c.h.b16 %v2195
      %v2272 = vunpack.c.l.b16 %v2196
      %v2273 = vunpack.c.l.b16 %v2197
      %v2274 = vunpack.c.h.b16 %v2197
      %v2275 = vunpack.c.l.b16 %v2198
      %v2276 = vunpack.c.l.b16 %v2199
      %v2277 = vunpack.c.h.b16 %v2199
      %v2278 = vunpack.c.l.b16 %v2200
      %v2279 = vunpack.c.l.b16 %v2201
      %v2280 = vunpack.c.h.b16 %v2201
      %v2281 = vunpack.c.l.b16 %v2202
      %v2282 = vunpack.c.l.b16 %v2203
      %v2283 = vunpack.c.h.b16 %v2203
      %v2284 = vunpack.c.l.b16 %v2204
      %v2285 = vpack.c.b16 %v2240, %v2237
      %v2286 = vpack.c.b16 %v2241, %v2238
      %v2287 = vpack.c.b16 %v2242, %v2239
      %v2288 = vpack.c.b16 %v2246, %v2243
      %v2289 = vpack.c.b16 %v2247, %v2244
      %v2290 = vpack.c.b16 %v2248, %v2245
      %v2291 = vpack.c.b16 %v2252, %v2249
      %v2292 = vpack.c.b16 %v2253, %v2250
      %v2293 = vpack.c.b16 %v2254, %v2251
      %v2294 = vpack.c.b16 %v2258, %v2255
      %v2295 = vpack.c.b16 %v2259, %v2256
      %v2296 = vpack.c.b16 %v2260, %v2257
      %v2297 = vpack.c.b16 %v2264, %v2261
      %v2298 = vpack.c.b16 %v2265, %v2262
      %v2299 = vpack.c.b16 %v2266, %v2263
      %v2300 = vpack.c.b16 %v2270, %v2267
      %v2301 = vpack.c.b16 %v2271, %v2268
      %v2302 = vpack.c.b16 %v2272, %v2269
      %v2303 = vpack.c.b16 %v2276, %v2273
      %v2304 = vpack.c.b16 %v2277, %v2274
      %v2305 = vpack.c.b16 %v2278, %v2275
      %v2306 = vpack.c.b16 %v2282, %v2279
      %v2307 = vpack.c.b16 %v2283, %v2280
      %v2308 = vpack.c.b16 %v2284, %v2281
      %2333 = vmatprep.subr.bf16.mxu0 %v2286
      %2334 = vmatpush1.bf16.msra.mxu0 %v2285
      %2335 = vmatprep.subr.bf16.mxu0 %v2289
      %2336 = vmatpush1.bf16.msra.mxu0 %v2288
      %2337 = vmatprep.subr.bf16.mxu0 %v2292
      %2338 = vmatpush1.bf16.msra.mxu0 %v2291
      %2339 = vmatprep.subr.bf16.mxu0 %v2295
      %2340 = vmatpush1.bf16.msra.mxu0 %v2294
      %2341 = vmatprep.subr.bf16.mxu0 %v2298
      %2342 = vmatpush1.bf16.msra.mxu0 %v2297
      %2343 = vmatprep.subr.bf16.mxu0 %v2301
      %2344 = vmatpush1.bf16.msra.mxu0 %v2300
      %2345 = vmatprep.subr.bf16.mxu0 %v2304
      %2346 = vmatpush1.bf16.msra.mxu0 %v2303
      %2347 = vmatprep.subr.bf16.mxu0 %v2307
      %2348 = vmatpush1.bf16.msra.mxu0 %v2306
      %2349 = vmatprep.subr.bf16.mxu0 0
      %2350 = vmatpush1.bf16.msra.mxu0 0
      %2351 = vmatprep.subr.bf16.mxu0 0
      %2352 = vmatpush1.bf16.msra.mxu0 0
      %2353 = vmatprep.subr.bf16.mxu0 0
      %2354 = vmatpush1.bf16.msra.mxu0 0
      %2355 = vmatprep.subr.bf16.mxu0 0
      %2356 = vmatpush1.bf16.msra.mxu0 0
      %2357 = vmatprep.subr.bf16.mxu0 0
      %2358 = vmatpush1.bf16.msra.mxu0 0
      %2359 = vmatprep.subr.bf16.mxu0 0
      %2360 = vmatpush1.bf16.msra.mxu0 0
      %2361 = vmatprep.subr.bf16.mxu0 0
      %2362 = vmatpush1.bf16.msra.mxu0 0
      %2363 = vmatprep.subr.bf16.mxu0 0
      %2364 = vmatpush1.bf16.msra.mxu0 0
      %2365 = vmatprep.mubr.bf16.mxu0 0
      %2366 = vmatmul.mubr.bf16.gmra.mrb[0].mxu0 %v2172
      %v2367 = vpop.f32.mrb[0].mxu0
      %v2368 = vadd.f32 0.0, %v2367
      %v2369 = vpop.f32.mrb[0].mxu0
      %v2370 = vadd.f32 0.0, %v2369
      %v2371 = vpop.f32.mrb[0].mxu0
      %v2372 = vpop.f32.mrb[0].mxu0
      %2373 = vdwg.mxu0
      %2374 = vmatprep.subr.bf16.mxu0 0
      %2375 = vmatpush1.bf16.msra.mxu0 %v2287
      %2376 = vmatprep.subr.bf16.mxu0 0
      %2377 = vmatpush1.bf16.msra.mxu0 %v2290
      %2378 = vmatprep.subr.bf16.mxu0 0
      %2379 = vmatpush1.bf16.msra.mxu0 %v2293
      %2380 = vmatprep.subr.bf16.mxu0 0
      %2381 = vmatpush1.bf16.msra.mxu0 %v2296
      %2382 = vmatprep.subr.bf16.mxu0 0
      %2383 = vmatpush1.bf16.msra.mxu0 %v2299
      %2384 = vmatprep.subr.bf16.mxu0 0
      %2385 = vmatpush1.bf16.msra.mxu0 %v2302
      %2386 = vmatprep.subr.bf16.mxu0 0
      %2387 = vmatpush1.bf16.msra.mxu0 %v2305
      %2388 = vmatprep.subr.bf16.mxu0 0
      %2389 = vmatpush1.bf16.msra.mxu0 %v2308
      %2390 = vmatprep.subr.bf16.mxu0 0
      %2391 = vmatpush1.bf16.msra.mxu0 0
      %2392 = vmatprep.subr.bf16.mxu0 0
      %2393 = vmatpush1.bf16.msra.mxu0 0
      %2394 = vmatprep.subr.bf16.mxu0 0
      %2395 = vmatpush1.bf16.msra.mxu0 0
      %2396 = vmatprep.subr.bf16.mxu0 0
      %2397 = vmatpush1.bf16.msra.mxu0 0
      %2398 = vmatprep.subr.bf16.mxu0 0
      %2399 = vmatpush1.bf16.msra.mxu0 0
      %2400 = vmatprep.subr.bf16.mxu0 0
      %2401 = vmatpush1.bf16.msra.mxu0 0
      %2402 = vmatprep.subr.bf16.mxu0 0
      %2403 = vmatpush1.bf16.msra.mxu0 0
      %2404 = vmatprep.subr.bf16.mxu0 0
      %2405 = vmatpush1.bf16.msra.mxu0 0
      %2406 = vmatprep.mubr.bf16.mxu0 0
      %2407 = vmatmul.mubr.bf16.gmra.mrb[0].mxu0 %v2172
      %v2408 = vpop.f32.mrb[0].mxu0
      %v2409 = vadd.f32 0.0, %v2408
      %v2410 = vpop.f32.mrb[0].mxu0
      %v2411 = vpop.f32.mrb[0].mxu0
      %v2412 = vpop.f32.mrb[0].mxu0
      %2413 = vdwg.mxu0
      %s2414 = smul.u32 4, 3
      %s2415 = smul.addr %s2414, 8
      %s2416 = scalar_lea.vmem [#allocation2], %s2415
      %v2417 = vld [vmem:[%s2416] sm:$0xff]
      %v2418 = vld [vmem:[%s2416 + $0x8] sm:$0xff]
      %v2419 = vld [vmem:[%s2416 + $0x10] sm:$0xff]
      %v2420 = vadd.f32 %v2417, %v2368
      %v2421 = vxor.u32 %v2420, 2147483648
      %v2422 = vmul.f32 %v2421, 1.442695
      %v2423 = vpow.pop %v2422
      %v2424 = vadd.f32 %v2423, 1.0
      %v2425 = vrcp.pop %v2424
      %v2426 = vmul.f32 1.0, %v2425
      %v2427 = vadd.f32 %v2418, %v2370
      %v2428 = vxor.u32 %v2427, 2147483648
      %v2429 = vmul.f32 %v2428, 1.442695
      %v2430 = vpow.pop %v2429
      %v2431 = vadd.f32 %v2430, 1.0
      %v2432 = vrcp.pop %v2431
      %v2433 = vmul.f32 1.0, %v2432
      %v2434 = vadd.f32 %v2409, %v1088
      %v2435 = vmul.f32 %v2426, %v2434
      %v2436 = vadd.f32 %v2419, %v2435
      %v2437 = vtanh.pop %v2436
      %v2438 = vsub.f32 %v2169, %v2437
      %v2439 = vmul.f32 %v2433, %v2438
      %v2440 = vadd.f32 %v2437, %v2439
      %s2441 = scalar_lea.vmem [#allocation3], 32
      %2442 = vst [vmem:[%s2441] sm:$0xff] %v2440
      %v2443 = vpack.c.bf16 %v2440, %v2440
      %v2444 = vld [vmem:[%s408] sm:$0xff]
      %v2445 = vld [vmem:[%s408 + $0x8] sm:$0xf]
      %v2446 = vld [vmem:[%s408 + $0xc] sm:$0xff]
      %v2447 = vld [vmem:[%s408 + $0x14] sm:$0xf]
      %v2448 = vld [vmem:[%s408 + $0x18] sm:$0xff]
      %v2449 = vld [vmem:[%s408 + $0x20] sm:$0xf]
      %v2450 = vld [vmem:[%s408 + $0x24] sm:$0xff]
      %v2451 = vld [vmem:[%s408 + $0x2c] sm:$0xf]
      %v2452 = vld [vmem:[%s408 + $0x30] sm:$0xff]
      %v2453 = vld [vmem:[%s408 + $0x38] sm:$0xf]
      %v2454 = vld [vmem:[%s408 + $0x3c] sm:$0xff]
      %v2455 = vld [vmem:[%s408 + $0x44] sm:$0xf]
      %v2456 = vld [vmem:[%s408 + $0x48] sm:$0xff]
      %v2457 = vld [vmem:[%s408 + $0x50] sm:$0xf]
      %v2458 = vld [vmem:[%s408 + $0x54] sm:$0xff]
      %v2459 = vld [vmem:[%s408 + $0x5c] sm:$0xf]
      %v2460 = vld [vmem:[%s408 + $0x60] sm:$0xff]
      %v2461 = vld [vmem:[%s408 + $0x68] sm:$0xf]
      %v2462 = vld [vmem:[%s408 + $0x6c] sm:$0xff]
      %v2463 = vld [vmem:[%s408 + $0x74] sm:$0xf]
      %v2464 = vld [vmem:[%s408 + $0x78] sm:$0xff]
      %v2465 = vld [vmem:[%s408 + $0x80] sm:$0xf]
      %v2466 = vld [vmem:[%s408 + $0x84] sm:$0xff]
      %v2467 = vld [vmem:[%s408 + $0x8c] sm:$0xf]
      %v2468 = vld [vmem:[%s408 + $0x90] sm:$0xff]
      %v2469 = vld [vmem:[%s408 + $0x98] sm:$0xf]
      %v2470 = vld [vmem:[%s408 + $0x9c] sm:$0xff]
      %v2471 = vld [vmem:[%s408 + $0xa4] sm:$0xf]
      %v2472 = vld [vmem:[%s408 + $0xa8] sm:$0xff]
      %v2473 = vld [vmem:[%s408 + $0xb0] sm:$0xf]
      %v2474 = vld [vmem:[%s408 + $0xb4] sm:$0xff]
      %v2475 = vld [vmem:[%s408 + $0xbc] sm:$0xf]
      %v2508 = vunpack.c.l.b16 %v2444
      %v2509 = vunpack.c.h.b16 %v2444
      %v2510 = vunpack.c.l.b16 %v2445
      %v2511 = vunpack.c.l.b16 %v2446
      %v2512 = vunpack.c.h.b16 %v2446
      %v2513 = vunpack.c.l.b16 %v2447
      %v2514 = vunpack.c.l.b16 %v2448
      %v2515 = vunpack.c.h.b16 %v2448
      %v2516 = vunpack.c.l.b16 %v2449
      %v2517 = vunpack.c.l.b16 %v2450
      %v2518 = vunpack.c.h.b16 %v2450
      %v2519 = vunpack.c.l.b16 %v2451
      %v2520 = vunpack.c.l.b16 %v2452
      %v2521 = vunpack.c.h.b16 %v2452
      %v2522 = vunpack.c.l.b16 %v2453
      %v2523 = vunpack.c.l.b16 %v2454
      %v2524 = vunpack.c.h.b16 %v2454
      %v2525 = vunpack.c.l.b16 %v2455
      %v2526 = vunpack.c.l.b16 %v2456
      %v2527 = vunpack.c.h.b16 %v2456
      %v2528 = vunpack.c.l.b16 %v2457
      %v2529 = vunpack.c.l.b16 %v2458
      %v2530 = vunpack.c.h.b16 %v2458
      %v2531 = vunpack.c.l.b16 %v2459
      %v2532 = vunpack.c.l.b16 %v2460
      %v2533 = vunpack.c.h.b16 %v2460
      %v2534 = vunpack.c.l.b16 %v2461
      %v2535 = vunpack.c.l.b16 %v2462
      %v2536 = vunpack.c.h.b16 %v2462
      %v2537 = vunpack.c.l.b16 %v2463
      %v2538 = vunpack.c.l.b16 %v2464
      %v2539 = vunpack.c.h.b16 %v2464
      %v2540 = vunpack.c.l.b16 %v2465
      %v2541 = vunpack.c.l.b16 %v2466
      %v2542 = vunpack.c.h.b16 %v2466
      %v2543 = vunpack.c.l.b16 %v2467
      %v2544 = vunpack.c.l.b16 %v2468
      %v2545 = vunpack.c.h.b16 %v2468
      %v2546 = vunpack.c.l.b16 %v2469
      %v2547 = vunpack.c.l.b16 %v2470
      %v2548 = vunpack.c.h.b16 %v2470
      %v2549 = vunpack.c.l.b16 %v2471
      %v2550 = vunpack.c.l.b16 %v2472
      %v2551 = vunpack.c.h.b16 %v2472
      %v2552 = vunpack.c.l.b16 %v2473
      %v2553 = vunpack.c.l.b16 %v2474
      %v2554 = vunpack.c.h.b16 %v2474
      %v2555 = vunpack.c.l.b16 %v2475
      %v2556 = vpack.c.b16 %v2511, %v2508
      %v2557 = vpack.c.b16 %v2512, %v2509
      %v2558 = vpack.c.b16 %v2513, %v2510
      %v2559 = vpack.c.b16 %v2517, %v2514
      %v2560 = vpack.c.b16 %v2518, %v2515
      %v2561 = vpack.c.b16 %v2519, %v2516
      %v2562 = vpack.c.b16 %v2523, %v2520
      %v2563 = vpack.c.b16 %v2524, %v2521
      %v2564 = vpack.c.b16 %v2525, %v2522
      %v2565 = vpack.c.b16 %v2529, %v2526
      %v2566 = vpack.c.b16 %v2530, %v2527
      %v2567 = vpack.c.b16 %v2531, %v2528
      %v2568 = vpack.c.b16 %v2535, %v2532
      %v2569 = vpack.c.b16 %v2536, %v2533
      %v2570 = vpack.c.b16 %v2537, %v2534
      %v2571 = vpack.c.b16 %v2541, %v2538
      %v2572 = vpack.c.b16 %v2542, %v2539
      %v2573 = vpack.c.b16 %v2543, %v2540
      %v2574 = vpack.c.b16 %v2547, %v2544
      %v2575 = vpack.c.b16 %v2548, %v2545
      %v2576 = vpack.c.b16 %v2549, %v2546
      %v2577 = vpack.c.b16 %v2553, %v2550
      %v2578 = vpack.c.b16 %v2554, %v2551
      %v2579 = vpack.c.b16 %v2555, %v2552
      %2604 = vmatprep.subr.bf16.mxu0 %v2557
      %2605 = vmatpush1.bf16.msra.mxu0 %v2556
      %2606 = vmatprep.subr.bf16.mxu0 %v2560
      %2607 = vmatpush1.bf16.msra.mxu0 %v2559
      %2608 = vmatprep.subr.bf16.mxu0 %v2563
      %2609 = vmatpush1.bf16.msra.mxu0 %v2562
      %2610 = vmatprep.subr.bf16.mxu0 %v2566
      %2611 = vmatpush1.bf16.msra.mxu0 %v2565
      %2612 = vmatprep.subr.bf16.mxu0 %v2569
      %2613 = vmatpush1.bf16.msra.mxu0 %v2568
      %2614 = vmatprep.subr.bf16.mxu0 %v2572
      %2615 = vmatpush1.bf16.msra.mxu0 %v2571
      %2616 = vmatprep.subr.bf16.mxu0 %v2575
      %2617 = vmatpush1.bf16.msra.mxu0 %v2574
      %2618 = vmatprep.subr.bf16.mxu0 %v2578
      %2619 = vmatpush1.bf16.msra.mxu0 %v2577
      %2620 = vmatprep.subr.bf16.mxu0 0
      %2621 = vmatpush1.bf16.msra.mxu0 0
      %2622 = vmatprep.subr.bf16.mxu0 0
      %2623 = vmatpush1.bf16.msra.mxu0 0
      %2624 = vmatprep.subr.bf16.mxu0 0
      %2625 = vmatpush1.bf16.msra.mxu0 0
      %2626 = vmatprep.subr.bf16.mxu0 0
      %2627 = vmatpush1.bf16.msra.mxu0 0
      %2628 = vmatprep.subr.bf16.mxu0 0
      %2629 = vmatpush1.bf16.msra.mxu0 0
      %2630 = vmatprep.subr.bf16.mxu0 0
      %2631 = vmatpush1.bf16.msra.mxu0 0
      %2632 = vmatprep.subr.bf16.mxu0 0
      %2633 = vmatpush1.bf16.msra.mxu0 0
      %2634 = vmatprep.subr.bf16.mxu0 0
      %2635 = vmatpush1.bf16.msra.mxu0 0
      %2636 = vmatprep.mubr.bf16.mxu0 0
      %2637 = vmatmul.mubr.bf16.gmra.mrb[0].mxu0 %v2443
      %v2638 = vpop.f32.mrb[0].mxu0
      %v2639 = vadd.f32 0.0, %v2638
      %v2640 = vpop.f32.mrb[0].mxu0
      %v2641 = vadd.f32 0.0, %v2640
      %v2642 = vpop.f32.mrb[0].mxu0
      %v2643 = vpop.f32.mrb[0].mxu0
      %2644 = vdwg.mxu0
      %2645 = vmatprep.subr.bf16.mxu0 0
      %2646 = vmatpush1.bf16.msra.mxu0 %v2558
      %2647 = vmatprep.subr.bf16.mxu0 0
      %2648 = vmatpush1.bf16.msra.mxu0 %v2561
      %2649 = vmatprep.subr.bf16.mxu0 0
      %2650 = vmatpush1.bf16.msra.mxu0 %v2564
      %2651 = vmatprep.subr.bf16.mxu0 0
      %2652 = vmatpush1.bf16.msra.mxu0 %v2567
      %2653 = vmatprep.subr.bf16.mxu0 0
      %2654 = vmatpush1.bf16.msra.mxu0 %v2570
      %2655 = vmatprep.subr.bf16.mxu0 0
      %2656 = vmatpush1.bf16.msra.mxu0 %v2573
      %2657 = vmatprep.subr.bf16.mxu0 0
      %2658 = vmatpush1.bf16.msra.mxu0 %v2576
      %2659 = vmatprep.subr.bf16.mxu0 0
      %2660 = vmatpush1.bf16.msra.mxu0 %v2579
      %2661 = vmatprep.subr.bf16.mxu0 0
      %2662 = vmatpush1.bf16.msra.mxu0 0
      %2663 = vmatprep.subr.bf16.mxu0 0
      %2664 = vmatpush1.bf16.msra.mxu0 0
      %2665 = vmatprep.subr.bf16.mxu0 0
      %2666 = vmatpush1.bf16.msra.mxu0 0
      %2667 = vmatprep.subr.bf16.mxu0 0
      %2668 = vmatpush1.bf16.msra.mxu0 0
      %2669 = vmatprep.subr.bf16.mxu0 0
      %2670 = vmatpush1.bf16.msra.mxu0 0
      %2671 = vmatprep.subr.bf16.mxu0 0
      %2672 = vmatpush1.bf16.msra.mxu0 0
      %2673 = vmatprep.subr.bf16.mxu0 0
      %2674 = vmatpush1.bf16.msra.mxu0 0
      %2675 = vmatprep.subr.bf16.mxu0 0
      %2676 = vmatpush1.bf16.msra.mxu0 0
      %2677 = vmatprep.mubr.bf16.mxu0 0
      %2678 = vmatmul.mubr.bf16.gmra.mrb[0].mxu0 %v2443
      %v2679 = vpop.f32.mrb[0].mxu0
      %v2680 = vadd.f32 0.0, %v2679
      %v2681 = vpop.f32.mrb[0].mxu0
      %v2682 = vpop.f32.mrb[0].mxu0
      %v2683 = vpop.f32.mrb[0].mxu0
      %2684 = vdwg.mxu0
      %s2685 = smul.u32 5, 3
      %s2686 = smul.addr %s2685, 8
      %s2687 = scalar_lea.vmem [#allocation2], %s2686
      %v2688 = vld [vmem:[%s2687] sm:$0xff]
      %v2689 = vld [vmem:[%s2687 + $0x8] sm:$0xff]
      %v2690 = vld [vmem:[%s2687 + $0x10] sm:$0xff]
      %v2691 = vadd.f32 %v2688, %v2639
      %v2692 = vxor.u32 %v2691, 2147483648
      %v2693 = vmul.f32 %v2692, 1.442695
      %v2694 = vpow.pop %v2693
      %v2695 = vadd.f32 %v2694, 1.0
      %v2696 = vrcp.pop %v2695
      %v2697 = vmul.f32 1.0, %v2696
      %v2698 = vadd.f32 %v2689, %v2641
      %v2699 = vxor.u32 %v2698, 2147483648
      %v2700 = vmul.f32 %v2699, 1.442695
      %v2701 = vpow.pop %v2700
      %v2702 = vadd.f32 %v2701, 1.0
      %v2703 = vrcp.pop %v2702
      %v2704 = vmul.f32 1.0, %v2703
      %v2705 = vadd.f32 %v2680, %v1088
      %v2706 = vmul.f32 %v2697, %v2705
      %v2707 = vadd.f32 %v2690, %v2706
      %v2708 = vtanh.pop %v2707
      %v2709 = vsub.f32 %v2440, %v2708
      %v2710 = vmul.f32 %v2704, %v2709
      %v2711 = vadd.f32 %v2708, %v2710
      %s2712 = scalar_lea.vmem [#allocation3], 40
      %2713 = vst [vmem:[%s2712] sm:$0xff] %v2711
      %v2714 = vpack.c.bf16 %v2711, %v2711
      %v2715 = vld [vmem:[%s408] sm:$0xff]
      %v2716 = vld [vmem:[%s408 + $0x8] sm:$0xf]
      %v2717 = vld [vmem:[%s408 + $0xc] sm:$0xff]
      %v2718 = vld [vmem:[%s408 + $0x14] sm:$0xf]
      %v2719 = vld [vmem:[%s408 + $0x18] sm:$0xff]
      %v2720 = vld [vmem:[%s408 + $0x20] sm:$0xf]
      %v2721 = vld [vmem:[%s408 + $0x24] sm:$0xff]
      %v2722 = vld [vmem:[%s408 + $0x2c] sm:$0xf]
      %v2723 = vld [vmem:[%s408 + $0x30] sm:$0xff]
      %v2724 = vld [vmem:[%s408 + $0x38] sm:$0xf]
      %v2725 = vld [vmem:[%s408 + $0x3c] sm:$0xff]
      %v2726 = vld [vmem:[%s408 + $0x44] sm:$0xf]
      %v2727 = vld [vmem:[%s408 + $0x48] sm:$0xff]
      %v2728 = vld [vmem:[%s408 + $0x50] sm:$0xf]
      %v2729 = vld [vmem:[%s408 + $0x54] sm:$0xff]
      %v2730 = vld [vmem:[%s408 + $0x5c] sm:$0xf]
      %v2731 = vld [vmem:[%s408 + $0x60] sm:$0xff]
      %v2732 = vld [vmem:[%s408 + $0x68] sm:$0xf]
      %v2733 = vld [vmem:[%s408 + $0x6c] sm:$0xff]
      %v2734 = vld [vmem:[%s408 + $0x74] sm:$0xf]
      %v2735 = vld [vmem:[%s408 + $0x78] sm:$0xff]
      %v2736 = vld [vmem:[%s408 + $0x80] sm:$0xf]
      %v2737 = vld [vmem:[%s408 + $0x84] sm:$0xff]
      %v2738 = vld [vmem:[%s408 + $0x8c] sm:$0xf]
      %v2739 = vld [vmem:[%s408 + $0x90] sm:$0xff]
      %v2740 = vld [vmem:[%s408 + $0x98] sm:$0xf]
      %v2741 = vld [vmem:[%s408 + $0x9c] sm:$0xff]
      %v2742 = vld [vmem:[%s408 + $0xa4] sm:$0xf]
      %v2743 = vld [vmem:[%s408 + $0xa8] sm:$0xff]
      %v2744 = vld [vmem:[%s408 + $0xb0] sm:$0xf]
      %v2745 = vld [vmem:[%s408 + $0xb4] sm:$0xff]
      %v2746 = vld [vmem:[%s408 + $0xbc] sm:$0xf]
      %v2779 = vunpack.c.l.b16 %v2715
      %v2780 = vunpack.c.h.b16 %v2715
      %v2781 = vunpack.c.l.b16 %v2716
      %v2782 = vunpack.c.l.b16 %v2717
      %v2783 = vunpack.c.h.b16 %v2717
      %v2784 = vunpack.c.l.b16 %v2718
      %v2785 = vunpack.c.l.b16 %v2719
      %v2786 = vunpack.c.h.b16 %v2719
      %v2787 = vunpack.c.l.b16 %v2720
      %v2788 = vunpack.c.l.b16 %v2721
      %v2789 = vunpack.c.h.b16 %v2721
      %v2790 = vunpack.c.l.b16 %v2722
      %v2791 = vunpack.c.l.b16 %v2723
      %v2792 = vunpack.c.h.b16 %v2723
      %v2793 = vunpack.c.l.b16 %v2724
      %v2794 = vunpack.c.l.b16 %v2725
      %v2795 = vunpack.c.h.b16 %v2725
      %v2796 = vunpack.c.l.b16 %v2726
      %v2797 = vunpack.c.l.b16 %v2727
      %v2798 = vunpack.c.h.b16 %v2727
      %v2799 = vunpack.c.l.b16 %v2728
      %v2800 = vunpack.c.l.b16 %v2729
      %v2801 = vunpack.c.h.b16 %v2729
      %v2802 = vunpack.c.l.b16 %v2730
      %v2803 = vunpack.c.l.b16 %v2731
      %v2804 = vunpack.c.h.b16 %v2731
      %v2805 = vunpack.c.l.b16 %v2732
      %v2806 = vunpack.c.l.b16 %v2733
      %v2807 = vunpack.c.h.b16 %v2733
      %v2808 = vunpack.c.l.b16 %v2734
      %v2809 = vunpack.c.l.b16 %v2735
      %v2810 = vunpack.c.h.b16 %v2735
      %v2811 = vunpack.c.l.b16 %v2736
      %v2812 = vunpack.c.l.b16 %v2737
      %v2813 = vunpack.c.h.b16 %v2737
      %v2814 = vunpack.c.l.b16 %v2738
      %v2815 = vunpack.c.l.b16 %v2739
      %v2816 = vunpack.c.h.b16 %v2739
      %v2817 = vunpack.c.l.b16 %v2740
      %v2818 = vunpack.c.l.b16 %v2741
      %v2819 = vunpack.c.h.b16 %v2741
      %v2820 = vunpack.c.l.b16 %v2742
      %v2821 = vunpack.c.l.b16 %v2743
      %v2822 = vunpack.c.h.b16 %v2743
      %v2823 = vunpack.c.l.b16 %v2744
      %v2824 = vunpack.c.l.b16 %v2745
      %v2825 = vunpack.c.h.b16 %v2745
      %v2826 = vunpack.c.l.b16 %v2746
      %v2827 = vpack.c.b16 %v2782, %v2779
      %v2828 = vpack.c.b16 %v2783, %v2780
      %v2829 = vpack.c.b16 %v2784, %v2781
      %v2830 = vpack.c.b16 %v2788, %v2785
      %v2831 = vpack.c.b16 %v2789, %v2786
      %v2832 = vpack.c.b16 %v2790, %v2787
      %v2833 = vpack.c.b16 %v2794, %v2791
      %v2834 = vpack.c.b16 %v2795, %v2792
      %v2835 = vpack.c.b16 %v2796, %v2793
      %v2836 = vpack.c.b16 %v2800, %v2797
      %v2837 = vpack.c.b16 %v2801, %v2798
      %v2838 = vpack.c.b16 %v2802, %v2799
      %v2839 = vpack.c.b16 %v2806, %v2803
      %v2840 = vpack.c.b16 %v2807, %v2804
      %v2841 = vpack.c.b16 %v2808, %v2805
      %v2842 = vpack.c.b16 %v2812, %v2809
      %v2843 = vpack.c.b16 %v2813, %v2810
      %v2844 = vpack.c.b16 %v2814, %v2811
      %v2845 = vpack.c.b16 %v2818, %v2815
      %v2846 = vpack.c.b16 %v2819, %v2816
      %v2847 = vpack.c.b16 %v2820, %v2817
      %v2848 = vpack.c.b16 %v2824, %v2821
      %v2849 = vpack.c.b16 %v2825, %v2822
      %v2850 = vpack.c.b16 %v2826, %v2823
      %2875 = vmatprep.subr.bf16.mxu0 %v2828
      %2876 = vmatpush1.bf16.msra.mxu0 %v2827
      %2877 = vmatprep.subr.bf16.mxu0 %v2831
      %2878 = vmatpush1.bf16.msra.mxu0 %v2830
      %2879 = vmatprep.subr.bf16.mxu0 %v2834
      %2880 = vmatpush1.bf16.msra.mxu0 %v2833
      %2881 = vmatprep.subr.bf16.mxu0 %v2837
      %2882 = vmatpush1.bf16.msra.mxu0 %v2836
      %2883 = vmatprep.subr.bf16.mxu0 %v2840
      %2884 = vmatpush1.bf16.msra.mxu0 %v2839
      %2885 = vmatprep.subr.bf16.mxu0 %v2843
      %2886 = vmatpush1.bf16.msra.mxu0 %v2842
      %2887 = vmatprep.subr.bf16.mxu0 %v2846
      %2888 = vmatpush1.bf16.msra.mxu0 %v2845
      %2889 = vmatprep.subr.bf16.mxu0 %v2849
      %2890 = vmatpush1.bf16.msra.mxu0 %v2848
      %2891 = vmatprep.subr.bf16.mxu0 0
      %2892 = vmatpush1.bf16.msra.mxu0 0
      %2893 = vmatprep.subr.bf16.mxu0 0
      %2894 = vmatpush1.bf16.msra.mxu0 0
      %2895 = vmatprep.subr.bf16.mxu0 0
      %2896 = vmatpush1.bf16.msra.mxu0 0
      %2897 = vmatprep.subr.bf16.mxu0 0
      %2898 = vmatpush1.bf16.msra.mxu0 0
      %2899 = vmatprep.subr.bf16.mxu0 0
      %2900 = vmatpush1.bf16.msra.mxu0 0
      %2901 = vmatprep.subr.bf16.mxu0 0
      %2902 = vmatpush1.bf16.msra.mxu0 0
      %2903 = vmatprep.subr.bf16.mxu0 0
      %2904 = vmatpush1.bf16.msra.mxu0 0
      %2905 = vmatprep.subr.bf16.mxu0 0
      %2906 = vmatpush1.bf16.msra.mxu0 0
      %2907 = vmatprep.mubr.bf16.mxu0 0
      %2908 = vmatmul.mubr.bf16.gmra.mrb[0].mxu0 %v2714
      %v2909 = vpop.f32.mrb[0].mxu0
      %v2910 = vadd.f32 0.0, %v2909
      %v2911 = vpop.f32.mrb[0].mxu0
      %v2912 = vadd.f32 0.0, %v2911
      %v2913 = vpop.f32.mrb[0].mxu0
      %v2914 = vpop.f32.mrb[0].mxu0
      %2915 = vdwg.mxu0
      %2916 = vmatprep.subr.bf16.mxu0 0
      %2917 = vmatpush1.bf16.msra.mxu0 %v2829
      %2918 = vmatprep.subr.bf16.mxu0 0
      %2919 = vmatpush1.bf16.msra.mxu0 %v2832
      %2920 = vmatprep.subr.bf16.mxu0 0
      %2921 = vmatpush1.bf16.msra.mxu0 %v2835
      %2922 = vmatprep.subr.bf16.mxu0 0
      %2923 = vmatpush1.bf16.msra.mxu0 %v2838
      %2924 = vmatprep.subr.bf16.mxu0 0
      %2925 = vmatpush1.bf16.msra.mxu0 %v2841
      %2926 = vmatprep.subr.bf16.mxu0 0
      %2927 = vmatpush1.bf16.msra.mxu0 %v2844
      %2928 = vmatprep.subr.bf16.mxu0 0
      %2929 = vmatpush1.bf16.msra.mxu0 %v2847
      %2930 = vmatprep.subr.bf16.mxu0 0
      %2931 = vmatpush1.bf16.msra.mxu0 %v2850
      %2932 = vmatprep.subr.bf16.mxu0 0
      %2933 = vmatpush1.bf16.msra.mxu0 0
      %2934 = vmatprep.subr.bf16.mxu0 0
      %2935 = vmatpush1.bf16.msra.mxu0 0
      %2936 = vmatprep.subr.bf16.mxu0 0
      %2937 = vmatpush1.bf16.msra.mxu0 0
      %2938 = vmatprep.subr.bf16.mxu0 0
      %2939 = vmatpush1.bf16.msra.mxu0 0
      %2940 = vmatprep.subr.bf16.mxu0 0
      %2941 = vmatpush1.bf16.msra.mxu0 0
      %2942 = vmatprep.subr.bf16.mxu0 0
      %2943 = vmatpush1.bf16.msra.mxu0 0
      %2944 = vmatprep.subr.bf16.mxu0 0
      %2945 = vmatpush1.bf16.msra.mxu0 0
      %2946 = vmatprep.subr.bf16.mxu0 0
      %2947 = vmatpush1.bf16.msra.mxu0 0
      %2948 = vmatprep.mubr.bf16.mxu0 0
      %2949 = vmatmul.mubr.bf16.gmra.mrb[0].mxu0 %v2714
      %v2950 = vpop.f32.mrb[0].mxu0
      %v2951 = vadd.f32 0.0, %v2950
      %v2952 = vpop.f32.mrb[0].mxu0
      %v2953 = vpop.f32.mrb[0].mxu0
      %v2954 = vpop.f32.mrb[0].mxu0
      %2955 = vdwg.mxu0
      %s2956 = smul.u32 6, 3
      %s2957 = smul.addr %s2956, 8
      %s2958 = scalar_lea.vmem [#allocation2], %s2957
      %v2959 = vld [vmem:[%s2958] sm:$0xff]
      %v2960 = vld [vmem:[%s2958 + $0x8] sm:$0xff]
      %v2961 = vld [vmem:[%s2958 + $0x10] sm:$0xff]
      %v2962 = vadd.f32 %v2959, %v2910
      %v2963 = vxor.u32 %v2962, 2147483648
      %v2964 = vmul.f32 %v2963, 1.442695
      %v2965 = vpow.pop %v2964
      %v2966 = vadd.f32 %v2965, 1.0
      %v2967 = vrcp.pop %v2966
      %v2968 = vmul.f32 1.0, %v2967
      %v2969 = vadd.f32 %v2960, %v2912
      %v2970 = vxor.u32 %v2969, 2147483648
      %v2971 = vmul.f32 %v2970, 1.442695
      %v2972 = vpow.pop %v2971
      %v2973 = vadd.f32 %v2972, 1.0
      %v2974 = vrcp.pop %v2973
      %v2975 = vmul.f32 1.0, %v2974
      %v2976 = vadd.f32 %v2951, %v1088
      %v2977 = vmul.f32 %v2968, %v2976
      %v2978 = vadd.f32 %v2961, %v2977
      %v2979 = vtanh.pop %v2978
      %v2980 = vsub.f32 %v2711, %v2979
      %v2981 = vmul.f32 %v2975, %v2980
      %v2982 = vadd.f32 %v2979, %v2981
      %s2983 = scalar_lea.vmem [#allocation3], 48
      %2984 = vst [vmem:[%s2983] sm:$0xff] %v2982
      %v2985 = vpack.c.bf16 %v2982, %v2982
      %v2986 = vld [vmem:[%s408] sm:$0xff]
      %v2987 = vld [vmem:[%s408 + $0x8] sm:$0xf]
      %v2988 = vld [vmem:[%s408 + $0xc] sm:$0xff]
      %v2989 = vld [vmem:[%s408 + $0x14] sm:$0xf]
      %v2990 = vld [vmem:[%s408 + $0x18] sm:$0xff]
      %v2991 = vld [vmem:[%s408 + $0x20] sm:$0xf]
      %v2992 = vld [vmem:[%s408 + $0x24] sm:$0xff]
      %v2993 = vld [vmem:[%s408 + $0x2c] sm:$0xf]
      %v2994 = vld [vmem:[%s408 + $0x30] sm:$0xff]
      %v2995 = vld [vmem:[%s408 + $0x38] sm:$0xf]
      %v2996 = vld [vmem:[%s408 + $0x3c] sm:$0xff]
      %v2997 = vld [vmem:[%s408 + $0x44] sm:$0xf]
      %v2998 = vld [vmem:[%s408 + $0x48] sm:$0xff]
      %v2999 = vld [vmem:[%s408 + $0x50] sm:$0xf]
      %v3000 = vld [vmem:[%s408 + $0x54] sm:$0xff]
      %v3001 = vld [vmem:[%s408 + $0x5c] sm:$0xf]
      %v3002 = vld [vmem:[%s408 + $0x60] sm:$0xff]
      %v3003 = vld [vmem:[%s408 + $0x68] sm:$0xf]
      %v3004 = vld [vmem:[%s408 + $0x6c] sm:$0xff]
      %v3005 = vld [vmem:[%s408 + $0x74] sm:$0xf]
      %v3006 = vld [vmem:[%s408 + $0x78] sm:$0xff]
      %v3007 = vld [vmem:[%s408 + $0x80] sm:$0xf]
      %v3008 = vld [vmem:[%s408 + $0x84] sm:$0xff]
      %v3009 = vld [vmem:[%s408 + $0x8c] sm:$0xf]
      %v3010 = vld [vmem:[%s408 + $0x90] sm:$0xff]
      %v3011 = vld [vmem:[%s408 + $0x98] sm:$0xf]
      %v3012 = vld [vmem:[%s408 + $0x9c] sm:$0xff]
      %v3013 = vld [vmem:[%s408 + $0xa4] sm:$0xf]
      %v3014 = vld [vmem:[%s408 + $0xa8] sm:$0xff]
      %v3015 = vld [vmem:[%s408 + $0xb0] sm:$0xf]
      %v3016 = vld [vmem:[%s408 + $0xb4] sm:$0xff]
      %v3017 = vld [vmem:[%s408 + $0xbc] sm:$0xf]
      %v3050 = vunpack.c.l.b16 %v2986
      %v3051 = vunpack.c.h.b16 %v2986
      %v3052 = vunpack.c.l.b16 %v2987
      %v3053 = vunpack.c.l.b16 %v2988
      %v3054 = vunpack.c.h.b16 %v2988
      %v3055 = vunpack.c.l.b16 %v2989
      %v3056 = vunpack.c.l.b16 %v2990
      %v3057 = vunpack.c.h.b16 %v2990
      %v3058 = vunpack.c.l.b16 %v2991
      %v3059 = vunpack.c.l.b16 %v2992
      %v3060 = vunpack.c.h.b16 %v2992
      %v3061 = vunpack.c.l.b16 %v2993
      %v3062 = vunpack.c.l.b16 %v2994
      %v3063 = vunpack.c.h.b16 %v2994
      %v3064 = vunpack.c.l.b16 %v2995
      %v3065 = vunpack.c.l.b16 %v2996
      %v3066 = vunpack.c.h.b16 %v2996
      %v3067 = vunpack.c.l.b16 %v2997
      %v3068 = vunpack.c.l.b16 %v2998
      %v3069 = vunpack.c.h.b16 %v2998
      %v3070 = vunpack.c.l.b16 %v2999
      %v3071 = vunpack.c.l.b16 %v3000
      %v3072 = vunpack.c.h.b16 %v3000
      %v3073 = vunpack.c.l.b16 %v3001
      %v3074 = vunpack.c.l.b16 %v3002
      %v3075 = vunpack.c.h.b16 %v3002
      %v3076 = vunpack.c.l.b16 %v3003
      %v3077 = vunpack.c.l.b16 %v3004
      %v3078 = vunpack.c.h.b16 %v3004
      %v3079 = vunpack.c.l.b16 %v3005
      %v3080 = vunpack.c.l.b16 %v3006
      %v3081 = vunpack.c.h.b16 %v3006
      %v3082 = vunpack.c.l.b16 %v3007
      %v3083 = vunpack.c.l.b16 %v3008
      %v3084 = vunpack.c.h.b16 %v3008
      %v3085 = vunpack.c.l.b16 %v3009
      %v3086 = vunpack.c.l.b16 %v3010
      %v3087 = vunpack.c.h.b16 %v3010
      %v3088 = vunpack.c.l.b16 %v3011
      %v3089 = vunpack.c.l.b16 %v3012
      %v3090 = vunpack.c.h.b16 %v3012
      %v3091 = vunpack.c.l.b16 %v3013
      %v3092 = vunpack.c.l.b16 %v3014
      %v3093 = vunpack.c.h.b16 %v3014
      %v3094 = vunpack.c.l.b16 %v3015
      %v3095 = vunpack.c.l.b16 %v3016
      %v3096 = vunpack.c.h.b16 %v3016
      %v3097 = vunpack.c.l.b16 %v3017
      %v3098 = vpack.c.b16 %v3053, %v3050
      %v3099 = vpack.c.b16 %v3054, %v3051
      %v3100 = vpack.c.b16 %v3055, %v3052
      %v3101 = vpack.c.b16 %v3059, %v3056
      %v3102 = vpack.c.b16 %v3060, %v3057
      %v3103 = vpack.c.b16 %v3061, %v3058
      %v3104 = vpack.c.b16 %v3065, %v3062
      %v3105 = vpack.c.b16 %v3066, %v3063
      %v3106 = vpack.c.b16 %v3067, %v3064
      %v3107 = vpack.c.b16 %v3071, %v3068
      %v3108 = vpack.c.b16 %v3072, %v3069
      %v3109 = vpack.c.b16 %v3073, %v3070
      %v3110 = vpack.c.b16 %v3077, %v3074
      %v3111 = vpack.c.b16 %v3078, %v3075
      %v3112 = vpack.c.b16 %v3079, %v3076
      %v3113 = vpack.c.b16 %v3083, %v3080
      %v3114 = vpack.c.b16 %v3084, %v3081
      %v3115 = vpack.c.b16 %v3085, %v3082
      %v3116 = vpack.c.b16 %v3089, %v3086
      %v3117 = vpack.c.b16 %v3090, %v3087
      %v3118 = vpack.c.b16 %v3091, %v3088
      %v3119 = vpack.c.b16 %v3095, %v3092
      %v3120 = vpack.c.b16 %v3096, %v3093
      %v3121 = vpack.c.b16 %v3097, %v3094
      %3146 = vmatprep.subr.bf16.mxu0 %v3099
      %3147 = vmatpush1.bf16.msra.mxu0 %v3098
      %3148 = vmatprep.subr.bf16.mxu0 %v3102
      %3149 = vmatpush1.bf16.msra.mxu0 %v3101
      %3150 = vmatprep.subr.bf16.mxu0 %v3105
      %3151 = vmatpush1.bf16.msra.mxu0 %v3104
      %3152 = vmatprep.subr.bf16.mxu0 %v3108
      %3153 = vmatpush1.bf16.msra.mxu0 %v3107
      %3154 = vmatprep.subr.bf16.mxu0 %v3111
      %3155 = vmatpush1.bf16.msra.mxu0 %v3110
      %3156 = vmatprep.subr.bf16.mxu0 %v3114
      %3157 = vmatpush1.bf16.msra.mxu0 %v3113
      %3158 = vmatprep.subr.bf16.mxu0 %v3117
      %3159 = vmatpush1.bf16.msra.mxu0 %v3116
      %3160 = vmatprep.subr.bf16.mxu0 %v3120
      %3161 = vmatpush1.bf16.msra.mxu0 %v3119
      %3162 = vmatprep.subr.bf16.mxu0 0
      %3163 = vmatpush1.bf16.msra.mxu0 0
      %3164 = vmatprep.subr.bf16.mxu0 0
      %3165 = vmatpush1.bf16.msra.mxu0 0
      %3166 = vmatprep.subr.bf16.mxu0 0
      %3167 = vmatpush1.bf16.msra.mxu0 0
      %3168 = vmatprep.subr.bf16.mxu0 0
      %3169 = vmatpush1.bf16.msra.mxu0 0
      %3170 = vmatprep.subr.bf16.mxu0 0
      %3171 = vmatpush1.bf16.msra.mxu0 0
      %3172 = vmatprep.subr.bf16.mxu0 0
      %3173 = vmatpush1.bf16.msra.mxu0 0
      %3174 = vmatprep.subr.bf16.mxu0 0
      %3175 = vmatpush1.bf16.msra.mxu0 0
      %3176 = vmatprep.subr.bf16.mxu0 0
      %3177 = vmatpush1.bf16.msra.mxu0 0
      %3178 = vmatprep.mubr.bf16.mxu0 0
      %3179 = vmatmul.mubr.bf16.gmra.mrb[0].mxu0 %v2985
      %v3180 = vpop.f32.mrb[0].mxu0
      %v3181 = vadd.f32 0.0, %v3180
      %v3182 = vpop.f32.mrb[0].mxu0
      %v3183 = vadd.f32 0.0, %v3182
      %v3184 = vpop.f32.mrb[0].mxu0
      %v3185 = vpop.f32.mrb[0].mxu0
      %3186 = vdwg.mxu0
      %3187 = vmatprep.subr.bf16.mxu0 0
      %3188 = vmatpush1.bf16.msra.mxu0 %v3100
      %3189 = vmatprep.subr.bf16.mxu0 0
      %3190 = vmatpush1.bf16.msra.mxu0 %v3103
      %3191 = vmatprep.subr.bf16.mxu0 0
      %3192 = vmatpush1.bf16.msra.mxu0 %v3106
      %3193 = vmatprep.subr.bf16.mxu0 0
      %3194 = vmatpush1.bf16.msra.mxu0 %v3109
      %3195 = vmatprep.subr.bf16.mxu0 0
      %3196 = vmatpush1.bf16.msra.mxu0 %v3112
      %3197 = vmatprep.subr.bf16.mxu0 0
      %3198 = vmatpush1.bf16.msra.mxu0 %v3115
      %3199 = vmatprep.subr.bf16.mxu0 0
      %3200 = vmatpush1.bf16.msra.mxu0 %v3118
      %3201 = vmatprep.subr.bf16.mxu0 0
      %3202 = vmatpush1.bf16.msra.mxu0 %v3121
      %3203 = vmatprep.subr.bf16.mxu0 0
      %3204 = vmatpush1.bf16.msra.mxu0 0
      %3205 = vmatprep.subr.bf16.mxu0 0
      %3206 = vmatpush1.bf16.msra.mxu0 0
      %3207 = vmatprep.subr.bf16.mxu0 0
      %3208 = vmatpush1.bf16.msra.mxu0 0
      %3209 = vmatprep.subr.bf16.mxu0 0
      %3210 = vmatpush1.bf16.msra.mxu0 0
      %3211 = vmatprep.subr.bf16.mxu0 0
      %3212 = vmatpush1.bf16.msra.mxu0 0
      %3213 = vmatprep.subr.bf16.mxu0 0
      %3214 = vmatpush1.bf16.msra.mxu0 0
      %3215 = vmatprep.subr.bf16.mxu0 0
      %3216 = vmatpush1.bf16.msra.mxu0 0
      %3217 = vmatprep.subr.bf16.mxu0 0
      %3218 = vmatpush1.bf16.msra.mxu0 0
      %3219 = vmatprep.mubr.bf16.mxu0 0
      %3220 = vmatmul.mubr.bf16.gmra.mrb[0].mxu0 %v2985
      %v3221 = vpop.f32.mrb[0].mxu0
      %v3222 = vadd.f32 0.0, %v3221
      %v3223 = vpop.f32.mrb[0].mxu0
      %v3224 = vpop.f32.mrb[0].mxu0
      %v3225 = vpop.f32.mrb[0].mxu0
      %3226 = vdwg.mxu0
      %s3227 = smul.u32 7, 3
      %s3228 = smul.addr %s3227, 8
      %s3229 = scalar_lea.vmem [#allocation2], %s3228
      %v3230 = vld [vmem:[%s3229] sm:$0xff]
      %v3231 = vld [vmem:[%s3229 + $0x8] sm:$0xff]
      %v3232 = vld [vmem:[%s3229 + $0x10] sm:$0xff]
      %v3233 = vadd.f32 %v3230, %v3181
      %v3234 = vxor.u32 %v3233, 2147483648
      %v3235 = vmul.f32 %v3234, 1.442695
      %v3236 = vpow.pop %v3235
      %v3237 = vadd.f32 %v3236, 1.0
      %v3238 = vrcp.pop %v3237
      %v3239 = vmul.f32 1.0, %v3238
      %v3240 = vadd.f32 %v3231, %v3183
      %v3241 = vxor.u32 %v3240, 2147483648
      %v3242 = vmul.f32 %v3241, 1.442695
      %v3243 = vpow.pop %v3242
      %v3244 = vadd.f32 %v3243, 1.0
      %v3245 = vrcp.pop %v3244
      %v3246 = vmul.f32 1.0, %v3245
      %v3247 = vadd.f32 %v3222, %v1088
      %v3248 = vmul.f32 %v3239, %v3247
      %v3249 = vadd.f32 %v3232, %v3248
      %v3250 = vtanh.pop %v3249
      %v3251 = vsub.f32 %v2982, %v3250
      %v3252 = vmul.f32 %v3246, %v3251
      %v3253 = vadd.f32 %v3250, %v3252
      %s3254 = scalar_lea.vmem [#allocation3], 56
      %3255 = vst [vmem:[%s3254] sm:$0xff] %v3253
      %p3256 = scmp.eq.s32.totalorder %s27, 1
      // Predicated region
      $region65: #{debug_lstm_forward.1} parent=55 // pred_check
        %p3257 = pneg %p3256
      $region66: #{debug_lstm_forward.1} parent=55 // pred_check_branch
        %3259 = sbr.rel (%p3257) target = $region68
      $region67: #{debug_lstm_forward.1} parent=55 // pred_region
        %v3260 = vpack.c.bf16 %v3253, %v3253
        %v3261 = vld [vmem:[%s7] sm:$0xf]
        %v3262 = vld [vmem:[%s7 + $0x4] sm:$0xf]
        %v3263 = vld [vmem:[%s7 + $0x8] sm:$0xf]
        %v3264 = vld [vmem:[%s7 + $0xc] sm:$0xf]
        %v3265 = vld [vmem:[%s7 + $0x10] sm:$0xf]
        %v3266 = vld [vmem:[%s7 + $0x14] sm:$0xf]
        %v3267 = vld [vmem:[%s7 + $0x18] sm:$0xf]
        %v3268 = vld [vmem:[%s7 + $0x1c] sm:$0xf]
        %v3269 = vld [vmem:[%s7 + $0x20] sm:$0xf]
        %v3270 = vld [vmem:[%s7 + $0x24] sm:$0xf]
        %v3271 = vld [vmem:[%s7 + $0x28] sm:$0xf]
        %v3272 = vld [vmem:[%s7 + $0x2c] sm:$0xf]
        %v3273 = vld [vmem:[%s7 + $0x30] sm:$0xf]
        %v3274 = vld [vmem:[%s7 + $0x34] sm:$0xf]
        %v3275 = vld [vmem:[%s7 + $0x38] sm:$0xf]
        %v3276 = vld [vmem:[%s7 + $0x3c] sm:$0xf]
        %v3277 = vld [vmem:[#allocation4] sm:$0x1]
        %v3279 = vlaneseq
        %v3280 = vshrl.u32 %v3279, 7
        %v3281 = vsub.s32 0, %v3280
        %v3282 = vrot.slane %v3277, %v3281
        %v3300 = vunpack.c.l.b16 %v3261
        %v3301 = vunpack.c.l.b16 %v3262
        %v3302 = vunpack.c.l.b16 %v3263
        %v3303 = vunpack.c.l.b16 %v3264
        %v3304 = vunpack.c.l.b16 %v3265
        %v3305 = vunpack.c.l.b16 %v3266
        %v3306 = vunpack.c.l.b16 %v3267
        %v3307 = vunpack.c.l.b16 %v3268
        %v3308 = vunpack.c.l.b16 %v3269
        %v3309 = vunpack.c.l.b16 %v3270
        %v3310 = vunpack.c.l.b16 %v3271
        %v3311 = vunpack.c.l.b16 %v3272
        %v3312 = vunpack.c.l.b16 %v3273
        %v3313 = vunpack.c.l.b16 %v3274
        %v3314 = vunpack.c.l.b16 %v3275
        %v3315 = vunpack.c.l.b16 %v3276
        %v3316 = vpack.c.b16 %v3301, %v3300
        %v3317 = vpack.c.b16 %v3303, %v3302
        %v3318 = vpack.c.b16 %v3305, %v3304
        %v3319 = vpack.c.b16 %v3307, %v3306
        %v3320 = vpack.c.b16 %v3309, %v3308
        %v3321 = vpack.c.b16 %v3311, %v3310
        %v3322 = vpack.c.b16 %v3313, %v3312
        %v3323 = vpack.c.b16 %v3315, %v3314
        %3332 = vmatprep.subr.bf16.mxu0 0
        %3333 = vmatpush1.bf16.msra.mxu0 %v3316
        %3334 = vmatprep.subr.bf16.mxu0 0
        %3335 = vmatpush1.bf16.msra.mxu0 %v3317
        %3336 = vmatprep.subr.bf16.mxu0 0
        %3337 = vmatpush1.bf16.msra.mxu0 %v3318
        %3338 = vmatprep.subr.bf16.mxu0 0
        %3339 = vmatpush1.bf16.msra.mxu0 %v3319
        %3340 = vmatprep.subr.bf16.mxu0 0
        %3341 = vmatpush1.bf16.msra.mxu0 %v3320
        %3342 = vmatprep.subr.bf16.mxu0 0
        %3343 = vmatpush1.bf16.msra.mxu0 %v3321
        %3344 = vmatprep.subr.bf16.mxu0 0
        %3345 = vmatpush1.bf16.msra.mxu0 %v3322
        %3346 = vmatprep.subr.bf16.mxu0 0
        %3347 = vmatpush1.bf16.msra.mxu0 %v3323
        %3348 = vmatprep.subr.bf16.mxu0 0
        %3349 = vmatpush1.bf16.msra.mxu0 0
        %3350 = vmatprep.subr.bf16.mxu0 0
        %3351 = vmatpush1.bf16.msra.mxu0 0
        %3352 = vmatprep.subr.bf16.mxu0 0
        %3353 = vmatpush1.bf16.msra.mxu0 0
        %3354 = vmatprep.subr.bf16.mxu0 0
        %3355 = vmatpush1.bf16.msra.mxu0 0
        %3356 = vmatprep.subr.bf16.mxu0 0
        %3357 = vmatpush1.bf16.msra.mxu0 0
        %3358 = vmatprep.subr.bf16.mxu0 0
        %3359 = vmatpush1.bf16.msra.mxu0 0
        %3360 = vmatprep.subr.bf16.mxu0 0
        %3361 = vmatpush1.bf16.msra.mxu0 0
        %3362 = vmatprep.subr.bf16.mxu0 0
        %3363 = vmatpush1.bf16.msra.mxu0 0
        %3364 = vmatprep.mubr.bf16.mxu0 0
        %3365 = vmatmul.mubr.bf16.gmra.mrb[0].mxu0 %v3260
        %v3366 = vpop.f32.mrb[0].mxu0
        %v3367 = vadd.f32 %v3282, %v3366
        %v3368 = vpop.f32.mrb[0].mxu0
        %v3369 = vpop.f32.mrb[0].mxu0
        %v3370 = vpop.f32.mrb[0].mxu0
        %3371 = vdwg.mxu0
        %vm3372 = vcmask 7168
        %3373 = vst.msk [vmem:[%s415] sm:$0xff] %vm3372, %v3367
      $region68: #{debug_lstm_forward.1} parent=55 // pred_fallthru
        _
      %p3374 = scmp.lt.s32.totalorder %s26, 0
      %s3375 = scalar_select %p3374, %s26, 0
      %s3376 = smul.addr %s3375, 8
      %s3377 = scalar_lea.vmem %s9, %s3376
      // Predicated region
      $region69: #{debug_lstm_forward.1} parent=55 // pred_check
        %p3378 = pneg %p266
      $region70: #{debug_lstm_forward.1} parent=55 // pred_check_branch
        %3380 = sbr.rel (%p3378) target = $region72
      $region71: #{debug_lstm_forward.1} parent=55 // pred_region
        _
      $region72: #{debug_lstm_forward.1} parent=55 // pred_fallthru
        _
      // Predicated region
      $region73: #{debug_lstm_forward.1} parent=55 // pred_check
        %p3381 = pneg %p266
      $region74: #{debug_lstm_forward.1} parent=55 // pred_check_branch
        %3383 = sbr.rel (%p3381) target = $region76
      $region75: #{debug_lstm_forward.1} parent=55 // pred_region
        %p3384 = scmp.lt.s32.totalorder %s26, 0
        %s3385 = scalar_select %p3384, %s26, 0
        %s3386 = smul.addr %s3385, 8
        %s3387 = scalar_lea.vmem %s9, %s3386
      $region76: #{debug_lstm_forward.1} parent=55 // pred_fallthru
        _
    $region56: #{debug_lstm_forward.1} parent=5 // pred_fallthru
      _
    %p3388 = scmp.le.s32.totalorder 2, %s17
    // Predicated region
    $region77: #{debug_lstm_forward.1} parent=5 // pred_check
      %p3389 = pneg %p3388
    $region78: #{debug_lstm_forward.1} parent=5 // pred_check_branch
      %3391 = sbr.rel (%p3389) target = $region80
    $region79: #{debug_lstm_forward.1} parent=5 // pred_region
      %s3392 = ssub.s32 %s17, 2
    $region80: #{debug_lstm_forward.1} parent=5 // pred_fallthru
      _
  $region6: #{debug_lstm_forward.1} parent=0 // loop_footer
    %s21 = sadd.s32 1, %s17
  $region7: #{debug_lstm_forward.1} parent=0 // loop_footer_branch
    %16 = sbr.rel target = $region3
  $region8: #{debug_lstm_forward.1} parent=0 // loop_exit
    _

</llo_original>
